<compile_context>
chip_gen: v7x
topology: tpu7x:2x2x1
jax: 0.10.0
libtpu: 0.0.40
codegen_flags: <defaults>
</compile_context>

<pallas_src>
import functools

import jax
import jax.numpy as jnp
from jax.experimental import pallas as pl
from jax.experimental.pallas import tpu as pltpu

VMEM = pltpu.MemorySpace.VMEM
_F32 = jnp.float32

# Everything here is whole-array-in-VMEM (a few hundred KB at N=128); the explicit
# limit just keeps the same layout safe on v5e's 16 MiB scoped default at larger N.
_COMPILER_PARAMS = pltpu.CompilerParams(vmem_limit_bytes=32 * 1024 * 1024)


def _vmem_specs(n):
    return [pl.BlockSpec(memory_space=VMEM) for _ in range(n)]


# ------------------------- in-kernel building blocks -------------------------

def _gcn(h, g, wT, b):
    # GCN.forward (drop = Identity): act(proj(h @ g)); wT is pre-transposed (in, out).
    hg = jnp.dot(h, g, preferred_element_type=_F32)
    return jnp.maximum(jnp.dot(hg, wT, preferred_element_type=_F32) + b, 0.0)


def _pool_scores(y, wp, bp):
    # Pool.proj + sigmoid, emitted lane-dense as (1, N).
    return jax.nn.sigmoid(jnp.dot(wp, y.T, preferred_element_type=_F32) + bp)


def _pool_gather(g, h, p, vals):
    # top_k_graph body given the selection one-hot p (M, N) and top-k values (M, 1):
    #   un_g = g.bool().float(); un_g = (un_g @ un_g).bool().float()
    #   sub  = un_g[idx, :][:, idx]        ==  p @ un_g @ p^T
    #   g'   = norm_g(sub)                 (torch broadcast -> column-wise divide)
    #   h'   = h[idx, :] * values[:, None] ==  (p @ h) * vals
    un_g = (g != 0).astype(_F32)
    un_g2 = jnp.dot(un_g, un_g, preferred_element_type=_F32)
    un_g2 = (un_g2 != 0).astype(_F32)
    sub = jnp.dot(jnp.dot(p, un_g2, preferred_element_type=_F32), p.T,
                  preferred_element_type=_F32)
    deg = jnp.sum(sub, axis=1)                       # torch.sum(g, 1)
    # Row-vector reciprocal + broadcast multiply instead of an (M, M) divide.
    # (approx=False keeps bit-closeness to the reference; approx=True is fine once
    #  values get large, but buys nothing at this size.)
    new_g = sub * pl.reciprocal(deg[None, :], approx=False)
    new_h = jnp.dot(p, h, preferred_element_type=_F32) * vals
    return new_g, new_h


# ----------------------------- Pallas kernels ------------------------------

def _down_gcn_score_kernel(g_ref, h_ref, wT_ref, b_ref, wp_ref, bp_ref,
                           h_out_ref, s_out_ref):
    # First down layer: GCN + pool-score head fused (g passes through unchanged).
    y = _gcn(h_ref[...], g_ref[...], wT_ref[...], b_ref[...])
    h_out_ref[...] = y
    s_out_ref[...] = _pool_scores(y, wp_ref[...], bp_ref[...])


def _pool_gcn_score_kernel(g_ref, h_ref, p_ref, v_ref, wT_ref, b_ref,
                           wp_ref, bp_ref, g_out_ref, h_out_ref, s_out_ref):
    # Previous layer's pool (gather + renorm) fused with this layer's GCN + scores.
    new_g, new_h = _pool_gather(g_ref[...], h_ref[...], p_ref[...], v_ref[...])
    y = _gcn(new_h, new_g, wT_ref[...], b_ref[...])
    g_out_ref[...] = new_g
    h_out_ref[...] = y
    s_out_ref[...] = _pool_scores(y, wp_ref[...], bp_ref[...])


def _pool_gcn_kernel(g_ref, h_ref, p_ref, v_ref, wT_ref, b_ref, h_out_ref):
    # Last pool fused with the bottom GCN (pooled g is only needed internally).
    new_g, new_h = _pool_gather(g_ref[...], h_ref[...], p_ref[...], v_ref[...])
    h_out_ref[...] = _gcn(new_h, new_g, wT_ref[...], b_ref[...])


def _up_gcn_kernel(p_ref, hs_ref, g_ref, wT_ref, b_ref, res_ref, out_ref):
    # Unpool (scatter new_h[idx] = h  ==  P^T @ h) + up GCN + skip residual, fused.
    h0 = jnp.dot(p_ref[...].T, hs_ref[...], preferred_element_type=_F32)
    out_ref[...] = _gcn(h0, g_ref[...], wT_ref[...], b_ref[...]) + res_ref[...]


def _up_gcn_final_kernel(p_ref, hs_ref, g_ref, wT_ref, b_ref, res_ref, org_ref,
                         out_ref, out_org_ref):
    # Last up layer: also folds the final `h + org_h` residual; both hs entries emitted.
    h0 = jnp.dot(p_ref[...].T, hs_ref[...], preferred_element_type=_F32)
    y = _gcn(h0, g_ref[...], wT_ref[...], b_ref[...]) + res_ref[...]
    out_ref[...] = y
    out_org_ref[...] = y + org_ref[...]


# ------------------------------ call wrappers -------------------------------

def down_gcn_scores(g, h, wT, b, wp, bp):
    N = h.shape[0]
    return pl.pallas_call(
        _down_gcn_score_kernel,
        out_shape=(jax.ShapeDtypeStruct((N, wT.shape[1]), _F32),
                   jax.ShapeDtypeStruct((1, N), _F32)),
        in_specs=_vmem_specs(6),
        out_specs=tuple(_vmem_specs(2)),
        compiler_params=_COMPILER_PARAMS,
    )(g, h, wT, b.reshape(1, -1), wp, bp.reshape(1, -1))


def pool_gcn_scores(g, h, p, values, wT, b, wp, bp):
    M = p.shape[0]
    return pl.pallas_call(
        _pool_gcn_score_kernel,
        out_shape=(jax.ShapeDtypeStruct((M, M), _F32),
                   jax.ShapeDtypeStruct((M, wT.shape[1]), _F32),
                   jax.ShapeDtypeStruct((1, M), _F32)),
        in_specs=_vmem_specs(8),
        out_specs=tuple(_vmem_specs(3)),
        compiler_params=_COMPILER_PARAMS,
    )(g, h, p, values.reshape(-1, 1), wT, b.reshape(1, -1), wp, bp.reshape(1, -1))


def pool_gcn(g, h, p, values, wT, b):
    M = p.shape[0]
    return pl.pallas_call(
        _pool_gcn_kernel,
        out_shape=jax.ShapeDtypeStruct((M, wT.shape[1]), _F32),
        in_specs=_vmem_specs(6),
        out_specs=pl.BlockSpec(memory_space=VMEM),
        compiler_params=_COMPILER_PARAMS,
    )(g, h, p, values.reshape(-1, 1), wT, b.reshape(1, -1))


def up_gcn(p, h_small, g, wT, b, res):
    N = g.shape[0]
    return pl.pallas_call(
        _up_gcn_kernel,
        out_shape=jax.ShapeDtypeStruct((N, wT.shape[1]), _F32),
        in_specs=_vmem_specs(6),
        out_specs=pl.BlockSpec(memory_space=VMEM),
        compiler_params=_COMPILER_PARAMS,
    )(p, h_small, g, wT, b.reshape(1, -1), res)


def up_gcn_final(p, h_small, g, wT, b, res, org_h):
    N = g.shape[0]
    return pl.pallas_call(
        _up_gcn_final_kernel,
        out_shape=(jax.ShapeDtypeStruct((N, wT.shape[1]), _F32),
                   jax.ShapeDtypeStruct((N, wT.shape[1]), _F32)),
        in_specs=_vmem_specs(7),
        out_specs=tuple(_vmem_specs(2)),
        compiler_params=_COMPILER_PARAMS,
    )(p, h_small, g, wT, b.reshape(1, -1), res, org_h)


# --------------------------- GraphUnet forward ------------------------------

def graph_unet_forward(g, h, params, ks):
    l_n = len(ks)
    # Pre-transpose Linear weights once (kernels consume W^T, no in-kernel .T).
    down_wT = [w.T for w in params["down_w"]]
    up_wT = [w.T for w in params["up_w"]]
    bottom_wT = params["bottom_w"].T

    adj_ms, perms, down_outs, hs = [], [], [], []
    org_h = h
    pending = None  # (p, values) of the previous layer's top-k, applied lazily

    for i in range(l_n):
        if pending is None:
            h, s = down_gcn_scores(g, h, down_wT[i], params["down_b"][i],
                                   params["pool_w"][i], params["pool_b"][i])
        else:
            p_prev, v_prev = pending
            g, h, s = pool_gcn_scores(g, h, p_prev, v_prev, down_wT[i],
                                      params["down_b"][i], params["pool_w"][i],
                                      params["pool_b"][i])
        adj_ms.append(g)
        down_outs.append(h)
        # top-k node selection (sort stays in XLA; the selection matrix feeds the
        # next fused kernel).
        # TODO(synk): for large N pass `idx` via scalar prefetch and gather rows
        # in-kernel instead of the dense one-hot matmuls.
        scores = s[0]
        num_nodes = g.shape[0]
        m = max(2, int(ks[i] * num_nodes))
        values, idx = jax.lax.top_k(scores, m)                 # == torch.topk
        p = jax.nn.one_hot(idx, num_nodes, dtype=_F32)
        perms.append(p)
        pending = (p, values)

    # Last pool fused with the bottom GCN.
    p_last, v_last = pending
    h = pool_gcn(g, h, p_last, v_last, bottom_wT, params["bottom_b"])

    for i in range(l_n):
        up_idx = l_n - i - 1
        g_up, p_up = adj_ms[up_idx], perms[up_idx]
        if i == l_n - 1:
            h, h_final = up_gcn_final(p_up, h, g_up, up_wT[i], params["up_b"][i],
                                      down_outs[up_idx], org_h)
            hs.append(h)
            hs.append(h_final)
        else:
            h = up_gcn(p_up, h, g_up, up_wT[i], params["up_b"][i],
                       down_outs[up_idx])
            hs.append(h)
    return hs


# --------------------------- pure-JAX reference -----------------------------

def ref_forward(g, h, params, ks):
    def gcn_ref(g, h, w, b):
        return jax.nn.relu(jnp.matmul(h, g) @ w.T + b)

    def top_k_graph(scores, g, h, k):
        num_nodes = g.shape[0]
        m = max(2, int(k * num_nodes))
        values, idx = jax.lax.top_k(scores, m)
        new_h = h[idx, :] * values[:, None]
        un_g = (g != 0).astype(jnp.float32)
        un_g = (jnp.matmul(un_g, un_g) != 0).astype(jnp.float32)
        un_g = un_g[idx, :][:, idx]
        g = un_g / jnp.sum(un_g, 1)
        return g, new_h, idx

    l_n = len(ks)
    adj_ms, idx_list, down_outs, hs = [], [], [], []
    org_h = h
    for i in range(l_n):
        h = gcn_ref(g, h, params["down_w"][i], params["down_b"][i])
        adj_ms.append(g)
        down_outs.append(h)
        scores = jax.nn.sigmoid(
            h @ params["pool_w"][i].T + params["pool_b"][i]).squeeze()
        g, h, idx = top_k_graph(scores, g, h, ks[i])
        idx_list.append(idx)
    h = gcn_ref(g, h, params["bottom_w"], params["bottom_b"])
    for i in range(l_n):
        up_idx = l_n - i - 1
        g, idx = adj_ms[up_idx], idx_list[up_idx]
        new_h = jnp.zeros((g.shape[0], h.shape[1]), h.dtype).at[idx].set(h)
        h = gcn_ref(g, new_h, params["up_w"][i], params["up_b"][i]) + down_outs[up_idx]
        hs.append(h)
    hs.append(h + org_h)
    return hs


# --------------------------------- main -------------------------------------

if __name__ == "__main__":
    # N = D = 128: the module requires D == N (matmul(h, g)) and ks == 1.0; 128 makes
    # every matmul operand exactly one vreg lane-width / MXU-friendly.
    N = 128
    D = 128
    ks = (1.0, 1.0)
    # TODO(synk): drop_p > 0 (training-mode dropout) has no deterministic equivalent
    # here; drop_p = 0.0 -> nn.Identity is used.

    key = jax.random.PRNGKey(0)
    k_g, k_h, k_p = jax.random.split(key, 3)

    # symmetric 0/1 adjacency with self-loops (so degrees are nonzero)
    a = (jax.random.uniform(k_g, (N, N)) < 0.3).astype(_F32)
    g = jnp.clip(a + a.T + jnp.eye(N, dtype=_F32), 0.0, 1.0)
    h = jax.random.normal(k_h, (N, D), dtype=_F32)

    def linear_params(k, out_dim, in_dim):
        kw, kb = jax.random.split(k)
        bound = 1.0 / (in_dim ** 0.5)
        w = jax.random.uniform(kw, (out_dim, in_dim), minval=-bound, maxval=bound)
        b = jax.random.uniform(kb, (out_dim,), minval=-bound, maxval=bound)
        return w.astype(_F32), b.astype(_F32)

    l_n = len(ks)
    keys = jax.random.split(k_p, 3 * l_n + 1)
    params = {"down_w": [], "down_b": [], "up_w": [], "up_b": [],
              "pool_w": [], "pool_b": []}
    for i in range(l_n):
        w, b = linear_params(keys[3 * i], D, D)
        params["down_w"].append(w); params["down_b"].append(b)
        w, b = linear_params(keys[3 * i + 1], D, D)
        params["up_w"].append(w); params["up_b"].append(b)
        w, b = linear_params(keys[3 * i + 2], 1, D)
        params["pool_w"].append(w); params["pool_b"].append(b)
    params["bottom_w"], params["bottom_b"] = linear_params(keys[-1], D, D)

    fwd = jax.jit(functools.partial(graph_unet_forward, ks=ks))
    hs = fwd(g, h, params)
    hs = [jax.block_until_ready(x) for x in hs]

    hs_ref = ref_forward(g, h, params, ks)
    for out, ref in zip(hs, hs_ref):
        assert out.shape == ref.shape, (out.shape, ref.shape)
        assert jnp.allclose(out, ref, rtol=1e-2, atol=1e-2), \
            float(jnp.max(jnp.abs(out - ref)))

    print("KERNEL_OK")
</pallas_src>

<mosaic_0001>
module attributes {stable_mosaic.version = 11 : i64} {
  func.func @_down_gcn_score_kernel(%arg0: memref<128x128xf32, #tpu.memory_space<vmem>>, %arg1: memref<128x128xf32, #tpu.memory_space<vmem>>, %arg2: memref<128x128xf32, #tpu.memory_space<vmem>>, %arg3: memref<1x128xf32, #tpu.memory_space<vmem>>, %arg4: memref<1x128xf32, #tpu.memory_space<vmem>>, %arg5: memref<1x1xf32, #tpu.memory_space<vmem>>, %arg6: memref<128x128xf32, #tpu.memory_space<vmem>>, %arg7: memref<1x128xf32, #tpu.memory_space<vmem>>) attributes {dimension_semantics = [], scalar_prefetch = 0 : i64, scratch_operands = 0 : i64, tpu.core_type = #tpu.core_type<tc>} {
    %c0 = arith.constant 0 : index
    %c0_0 = arith.constant 0 : index
    %0 = vector.load %arg1[%c0, %c0_0] : memref<128x128xf32, #tpu.memory_space<vmem>>, vector<128x128xf32>
    %c0_1 = arith.constant 0 : index
    %c0_2 = arith.constant 0 : index
    %1 = vector.load %arg0[%c0_1, %c0_2] : memref<128x128xf32, #tpu.memory_space<vmem>>, vector<128x128xf32>
    %c0_3 = arith.constant 0 : index
    %c0_4 = arith.constant 0 : index
    %2 = vector.load %arg2[%c0_3, %c0_4] : memref<128x128xf32, #tpu.memory_space<vmem>>, vector<128x128xf32>
    %c0_5 = arith.constant 0 : index
    %c0_6 = arith.constant 0 : index
    %3 = vector.load %arg3[%c0_5, %c0_6] : memref<1x128xf32, #tpu.memory_space<vmem>>, vector<1x128xf32>
    %cst = arith.constant dense<0.000000e+00> : vector<128x128xf32>
    %4 = tpu.matmul %0, %1, %cst {dimension_numbers = #tpu.dot_dimension_numbers<[1], [0], [0], [1], [0, 0, 1, 1], [], []>} : vector<128x128xf32>, vector<128x128xf32>, vector<128x128xf32> -> vector<128x128xf32>
    %cst_7 = arith.constant dense<0.000000e+00> : vector<128x128xf32>
    %5 = tpu.matmul %4, %2, %cst_7 {dimension_numbers = #tpu.dot_dimension_numbers<[1], [0], [0], [1], [0, 0, 1, 1], [], []>} : vector<128x128xf32>, vector<128x128xf32>, vector<128x128xf32> -> vector<128x128xf32>
    %6 = vector.broadcast %3 : vector<1x128xf32> to vector<128x128xf32>
    %7 = arith.addf %5, %6 : vector<128x128xf32>
    %cst_8 = arith.constant 0.000000e+00 : f32
    %8 = vector.broadcast %cst_8 : f32 to vector<128x128xf32>
    %9 = arith.maximumf %7, %8 : vector<128x128xf32>
    %c0_9 = arith.constant 0 : index
    %c0_10 = arith.constant 0 : index
    %10 = vector.load %arg6[%c0_9, %c0_10] : memref<128x128xf32, #tpu.memory_space<vmem>>, vector<128x128xf32>
    tpu.vector_store %arg6[%c0_9, %c0_10], %9 {strides = array<i32>} : memref<128x128xf32, #tpu.memory_space<vmem>>, vector<128x128xf32>,
    %c0_11 = arith.constant 0 : index
    %c0_12 = arith.constant 0 : index
    %11 = vector.load %arg4[%c0_11, %c0_12] : memref<1x128xf32, #tpu.memory_space<vmem>>, vector<1x128xf32>
    %c0_13 = arith.constant 0 : index
    %c0_14 = arith.constant 0 : index
    %12 = vector.load %arg5[%c0_13, %c0_14] : memref<1x1xf32, #tpu.memory_space<vmem>>, vector<1x1xf32>
    %13 = tpu.transpose %9, [1, 0] : vector<128x128xf32> -> vector<128x128xf32>
    %cst_15 = arith.constant dense<0.000000e+00> : vector<1x128xf32>
    %14 = tpu.matmul %11, %13, %cst_15 {dimension_numbers = #tpu.dot_dimension_numbers<[1], [0], [0], [1], [0, 0, 1, 1], [], []>} : vector<1x128xf32>, vector<128x128xf32>, vector<1x128xf32> -> vector<1x128xf32>
    %15 = vector.broadcast %12 : vector<1x1xf32> to vector<1x128xf32>
    %16 = arith.addf %14, %15 : vector<1x128xf32>
    %17 = arith.negf %16 : vector<1x128xf32>
    %18 = math.exp %17 : vector<1x128xf32>
    %cst_16 = arith.constant 1.000000e+00 : f32
    %19 = vector.broadcast %cst_16 : f32 to vector<1x128xf32>
    %20 = arith.addf %19, %18 : vector<1x128xf32>
    %21 = arith.divf %19, %20 : vector<1x128xf32>
    %c0_17 = arith.constant 0 : index
    %c0_18 = arith.constant 0 : index
    %22 = vector.load %arg7[%c0_17, %c0_18] : memref<1x128xf32, #tpu.memory_space<vmem>>, vector<1x128xf32>
    tpu.vector_store %arg7[%c0_17, %c0_18], %21 {strides = array<i32>} : memref<1x128xf32, #tpu.memory_space<vmem>>, vector<1x128xf32>,
    return
  }
}

module attributes {stable_mosaic.version = 11 : i64} {
  func.func @_pool_gcn_score_kernel(%arg0: memref<128x128xf32, #tpu.memory_space<vmem>>, %arg1: memref<128x128xf32, #tpu.memory_space<vmem>>, %arg2: memref<128x128xf32, #tpu.memory_space<vmem>>, %arg3: memref<128x1xf32, #tpu.memory_space<vmem>>, %arg4: memref<128x128xf32, #tpu.memory_space<vmem>>, %arg5: memref<1x128xf32, #tpu.memory_space<vmem>>, %arg6: memref<1x128xf32, #tpu.memory_space<vmem>>, %arg7: memref<1x1xf32, #tpu.memory_space<vmem>>, %arg8: memref<128x128xf32, #tpu.memory_space<vmem>>, %arg9: memref<128x128xf32, #tpu.memory_space<vmem>>, %arg10: memref<1x128xf32, #tpu.memory_space<vmem>>) attributes {dimension_semantics = [], scalar_prefetch = 0 : i64, scratch_operands = 0 : i64, tpu.core_type = #tpu.core_type<tc>} {
    %c0 = arith.constant 0 : index
    %c0_0 = arith.constant 0 : index
    %0 = vector.load %arg0[%c0, %c0_0] : memref<128x128xf32, #tpu.memory_space<vmem>>, vector<128x128xf32>
    %c0_1 = arith.constant 0 : index
    %c0_2 = arith.constant 0 : index
    %1 = vector.load %arg1[%c0_1, %c0_2] : memref<128x128xf32, #tpu.memory_space<vmem>>, vector<128x128xf32>
    %c0_3 = arith.constant 0 : index
    %c0_4 = arith.constant 0 : index
    %2 = vector.load %arg2[%c0_3, %c0_4] : memref<128x128xf32, #tpu.memory_space<vmem>>, vector<128x128xf32>
    %c0_5 = arith.constant 0 : index
    %c0_6 = arith.constant 0 : index
    %3 = vector.load %arg3[%c0_5, %c0_6] : memref<128x1xf32, #tpu.memory_space<vmem>>, vector<128x1xf32>
    %cst = arith.constant 0.000000e+00 : f32
    %4 = vector.broadcast %cst : f32 to vector<128x128xf32>
    %5 = arith.cmpf one, %0, %4 : vector<128x128xf32>
    %6 = arith.extui %5 : vector<128x128xi1> to vector<128x128xi32>
    %7 = arith.sitofp %6 : vector<128x128xi32> to vector<128x128xf32>
    %cst_7 = arith.constant dense<0.000000e+00> : vector<128x128xf32>
    %8 = tpu.matmul %7, %7, %cst_7 {dimension_numbers = #tpu.dot_dimension_numbers<[1], [0], [0], [1], [0, 0, 1, 1], [], []>} : vector<128x128xf32>, vector<128x128xf32>, vector<128x128xf32> -> vector<128x128xf32>
    %cst_8 = arith.constant 0.000000e+00 : f32
    %9 = vector.broadcast %cst_8 : f32 to vector<128x128xf32>
    %10 = arith.cmpf one, %8, %9 : vector<128x128xf32>
    %11 = arith.extui %10 : vector<128x128xi1> to vector<128x128xi32>
    %12 = arith.sitofp %11 : vector<128x128xi32> to vector<128x128xf32>
    %cst_9 = arith.constant dense<0.000000e+00> : vector<128x128xf32>
    %13 = tpu.matmul %2, %12, %cst_9 {dimension_numbers = #tpu.dot_dimension_numbers<[1], [0], [0], [1], [0, 0, 1, 1], [], []>} : vector<128x128xf32>, vector<128x128xf32>, vector<128x128xf32> -> vector<128x128xf32>
    %14 = tpu.transpose %2, [1, 0] : vector<128x128xf32> -> vector<128x128xf32>
    %cst_10 = arith.constant dense<0.000000e+00> : vector<128x128xf32>
    %15 = tpu.matmul %13, %14, %cst_10 {dimension_numbers = #tpu.dot_dimension_numbers<[1], [0], [0], [1], [0, 0, 1, 1], [], []>} : vector<128x128xf32>, vector<128x128xf32>, vector<128x128xf32> -> vector<128x128xf32>
    %cst_11 = arith.constant dense<0.000000e+00> : vector<128xf32>
    %16 = vector.multi_reduction <add>, %15, %cst_11 [1] : vector<128x128xf32> to vector<128xf32>
    %17 = vector.shape_cast %16 : vector<128xf32> to vector<1x128xf32>
    %18 = tpu.reciprocal %17 : vector<1x128xf32> -> vector<1x128xf32>
    %19 = vector.broadcast %18 : vector<1x128xf32> to vector<128x128xf32>
    %20 = arith.mulf %15, %19 : vector<128x128xf32>
    %cst_12 = arith.constant dense<0.000000e+00> : vector<128x128xf32>
    %21 = tpu.matmul %2, %1, %cst_12 {dimension_numbers = #tpu.dot_dimension_numbers<[1], [0], [0], [1], [0, 0, 1, 1], [], []>} : vector<128x128xf32>, vector<128x128xf32>, vector<128x128xf32> -> vector<128x128xf32>
    %22 = vector.broadcast %3 : vector<128x1xf32> to vector<128x128xf32>
    %23 = arith.mulf %21, %22 : vector<128x128xf32>
    %c0_13 = arith.constant 0 : index
    %c0_14 = arith.constant 0 : index
    %24 = vector.load %arg4[%c0_13, %c0_14] : memref<128x128xf32, #tpu.memory_space<vmem>>, vector<128x128xf32>
    %c0_15 = arith.constant 0 : index
    %c0_16 = arith.constant 0 : index
    %25 = vector.load %arg5[%c0_15, %c0_16] : memref<1x128xf32, #tpu.memory_space<vmem>>, vector<1x128xf32>
    %cst_17 = arith.constant dense<0.000000e+00> : vector<128x128xf32>
    %26 = tpu.matmul %23, %20, %cst_17 {dimension_numbers = #tpu.dot_dimension_numbers<[1], [0], [0], [1], [0, 0, 1, 1], [], []>} : vector<128x128xf32>, vector<128x128xf32>, vector<128x128xf32> -> vector<128x128xf32>
    %cst_18 = arith.constant dense<0.000000e+00> : vector<128x128xf32>
    %27 = tpu.matmul %26, %24, %cst_18 {dimension_numbers = #tpu.dot_dimension_numbers<[1], [0], [0], [1], [0, 0, 1, 1], [], []>} : vector<128x128xf32>, vector<128x128xf32>, vector<128x128xf32> -> vector<128x128xf32>
    %28 = vector.broadcast %25 : vector<1x128xf32> to vector<128x128xf32>
    %29 = arith.addf %27, %28 : vector<128x128xf32>
    %cst_19 = arith.constant 0.000000e+00 : f32
    %30 = vector.broadcast %cst_19 : f32 to vector<128x128xf32>
    %31 = arith.maximumf %29, %30 : vector<128x128xf32>
    %c0_20 = arith.constant 0 : index
    %c0_21 = arith.constant 0 : index
    %32 = vector.load %arg8[%c0_20, %c0_21] : memref<128x128xf32, #tpu.memory_space<vmem>>, vector<128x128xf32>
    tpu.vector_store %arg8[%c0_20, %c0_21], %20 {strides = array<i32>} : memref<128x128xf32, #tpu.memory_space<vmem>>, vector<128x128xf32>,
    %c0_22 = arith.constant 0 : index
    %c0_23 = arith.constant 0 : index
    %33 = vector.load %arg9[%c0_22, %c0_23] : memref<128x128xf32, #tpu.memory_space<vmem>>, vector<128x128xf32>
    tpu.vector_store %arg9[%c0_22, %c0_23], %31 {strides = array<i32>} : memref<128x128xf32, #tpu.memory_space<vmem>>, vector<128x128xf32>,
    %c0_24 = arith.constant 0 : index
    %c0_25 = arith.constant 0 : index
    %34 = vector.load %arg6[%c0_24, %c0_25] : memref<1x128xf32, #tpu.memory_space<vmem>>, vector<1x128xf32>
    %c0_26 = arith.constant 0 : index
    %c0_27 = arith.constant 0 : index
    %35 = vector.load %arg7[%c0_26, %c0_27] : memref<1x1xf32, #tpu.memory_space<vmem>>, vector<1x1xf32>
    %36 = tpu.transpose %31, [1, 0] : vector<128x128xf32> -> vector<128x128xf32>
    %cst_28 = arith.constant dense<0.000000e+00> : vector<1x128xf32>
    %37 = tpu.matmul %34, %36, %cst_28 {dimension_numbers = #tpu.dot_dimension_numbers<[1], [0], [0], [1], [0, 0, 1, 1], [], []>} : vector<1x128xf32>, vector<128x128xf32>, vector<1x128xf32> -> vector<1x128xf32>
    %38 = vector.broadcast %35 : vector<1x1xf32> to vector<1x128xf32>
    %39 = arith.addf %37, %38 : vector<1x128xf32>
    %40 = arith.negf %39 : vector<1x128xf32>
    %41 = math.exp %40 : vector<1x128xf32>
    %cst_29 = arith.constant 1.000000e+00 : f32
    %42 = vector.broadcast %cst_29 : f32 to vector<1x128xf32>
    %43 = arith.addf %42, %41 : vector<1x128xf32>
    %44 = arith.divf %42, %43 : vector<1x128xf32>
    %c0_30 = arith.constant 0 : index
    %c0_31 = arith.constant 0 : index
    %45 = vector.load %arg10[%c0_30, %c0_31] : memref<1x128xf32, #tpu.memory_space<vmem>>, vector<1x128xf32>
    tpu.vector_store %arg10[%c0_30, %c0_31], %44 {strides = array<i32>} : memref<1x128xf32, #tpu.memory_space<vmem>>, vector<1x128xf32>,
    return
  }
}

module attributes {stable_mosaic.version = 11 : i64} {
  func.func @_pool_gcn_kernel(%arg0: memref<128x128xf32, #tpu.memory_space<vmem>>, %arg1: memref<128x128xf32, #tpu.memory_space<vmem>>, %arg2: memref<128x128xf32, #tpu.memory_space<vmem>>, %arg3: memref<128x1xf32, #tpu.memory_space<vmem>>, %arg4: memref<128x128xf32, #tpu.memory_space<vmem>>, %arg5: memref<1x128xf32, #tpu.memory_space<vmem>>, %arg6: memref<128x128xf32, #tpu.memory_space<vmem>>) attributes {dimension_semantics = [], scalar_prefetch = 0 : i64, scratch_operands = 0 : i64, tpu.core_type = #tpu.core_type<tc>} {
    %c0 = arith.constant 0 : index
    %c0_0 = arith.constant 0 : index
    %0 = vector.load %arg0[%c0, %c0_0] : memref<128x128xf32, #tpu.memory_space<vmem>>, vector<128x128xf32>
    %c0_1 = arith.constant 0 : index
    %c0_2 = arith.constant 0 : index
    %1 = vector.load %arg1[%c0_1, %c0_2] : memref<128x128xf32, #tpu.memory_space<vmem>>, vector<128x128xf32>
    %c0_3 = arith.constant 0 : index
    %c0_4 = arith.constant 0 : index
    %2 = vector.load %arg2[%c0_3, %c0_4] : memref<128x128xf32, #tpu.memory_space<vmem>>, vector<128x128xf32>
    %c0_5 = arith.constant 0 : index
    %c0_6 = arith.constant 0 : index
    %3 = vector.load %arg3[%c0_5, %c0_6] : memref<128x1xf32, #tpu.memory_space<vmem>>, vector<128x1xf32>
    %cst = arith.constant 0.000000e+00 : f32
    %4 = vector.broadcast %cst : f32 to vector<128x128xf32>
    %5 = arith.cmpf one, %0, %4 : vector<128x128xf32>
    %6 = arith.extui %5 : vector<128x128xi1> to vector<128x128xi32>
    %7 = arith.sitofp %6 : vector<128x128xi32> to vector<128x128xf32>
    %cst_7 = arith.constant dense<0.000000e+00> : vector<128x128xf32>
    %8 = tpu.matmul %7, %7, %cst_7 {dimension_numbers = #tpu.dot_dimension_numbers<[1], [0], [0], [1], [0, 0, 1, 1], [], []>} : vector<128x128xf32>, vector<128x128xf32>, vector<128x128xf32> -> vector<128x128xf32>
    %cst_8 = arith.constant 0.000000e+00 : f32
    %9 = vector.broadcast %cst_8 : f32 to vector<128x128xf32>
    %10 = arith.cmpf one, %8, %9 : vector<128x128xf32>
    %11 = arith.extui %10 : vector<128x128xi1> to vector<128x128xi32>
    %12 = arith.sitofp %11 : vector<128x128xi32> to vector<128x128xf32>
    %cst_9 = arith.constant dense<0.000000e+00> : vector<128x128xf32>
    %13 = tpu.matmul %2, %12, %cst_9 {dimension_numbers = #tpu.dot_dimension_numbers<[1], [0], [0], [1], [0, 0, 1, 1], [], []>} : vector<128x128xf32>, vector<128x128xf32>, vector<128x128xf32> -> vector<128x128xf32>
    %14 = tpu.transpose %2, [1, 0] : vector<128x128xf32> -> vector<128x128xf32>
    %cst_10 = arith.constant dense<0.000000e+00> : vector<128x128xf32>
    %15 = tpu.matmul %13, %14, %cst_10 {dimension_numbers = #tpu.dot_dimension_numbers<[1], [0], [0], [1], [0, 0, 1, 1], [], []>} : vector<128x128xf32>, vector<128x128xf32>, vector<128x128xf32> -> vector<128x128xf32>
    %cst_11 = arith.constant dense<0.000000e+00> : vector<128xf32>
    %16 = vector.multi_reduction <add>, %15, %cst_11 [1] : vector<128x128xf32> to vector<128xf32>
    %17 = vector.shape_cast %16 : vector<128xf32> to vector<1x128xf32>
    %18 = tpu.reciprocal %17 : vector<1x128xf32> -> vector<1x128xf32>
    %19 = vector.broadcast %18 : vector<1x128xf32> to vector<128x128xf32>
    %20 = arith.mulf %15, %19 : vector<128x128xf32>
    %cst_12 = arith.constant dense<0.000000e+00> : vector<128x128xf32>
    %21 = tpu.matmul %2, %1, %cst_12 {dimension_numbers = #tpu.dot_dimension_numbers<[1], [0], [0], [1], [0, 0, 1, 1], [], []>} : vector<128x128xf32>, vector<128x128xf32>, vector<128x128xf32> -> vector<128x128xf32>
    %22 = vector.broadcast %3 : vector<128x1xf32> to vector<128x128xf32>
    %23 = arith.mulf %21, %22 : vector<128x128xf32>
    %c0_13 = arith.constant 0 : index
    %c0_14 = arith.constant 0 : index
    %24 = vector.load %arg4[%c0_13, %c0_14] : memref<128x128xf32, #tpu.memory_space<vmem>>, vector<128x128xf32>
    %c0_15 = arith.constant 0 : index
    %c0_16 = arith.constant 0 : index
    %25 = vector.load %arg5[%c0_15, %c0_16] : memref<1x128xf32, #tpu.memory_space<vmem>>, vector<1x128xf32>
    %cst_17 = arith.constant dense<0.000000e+00> : vector<128x128xf32>
    %26 = tpu.matmul %23, %20, %cst_17 {dimension_numbers = #tpu.dot_dimension_numbers<[1], [0], [0], [1], [0, 0, 1, 1], [], []>} : vector<128x128xf32>, vector<128x128xf32>, vector<128x128xf32> -> vector<128x128xf32>
    %cst_18 = arith.constant dense<0.000000e+00> : vector<128x128xf32>
    %27 = tpu.matmul %26, %24, %cst_18 {dimension_numbers = #tpu.dot_dimension_numbers<[1], [0], [0], [1], [0, 0, 1, 1], [], []>} : vector<128x128xf32>, vector<128x128xf32>, vector<128x128xf32> -> vector<128x128xf32>
    %28 = vector.broadcast %25 : vector<1x128xf32> to vector<128x128xf32>
    %29 = arith.addf %27, %28 : vector<128x128xf32>
    %cst_19 = arith.constant 0.000000e+00 : f32
    %30 = vector.broadcast %cst_19 : f32 to vector<128x128xf32>
    %31 = arith.maximumf %29, %30 : vector<128x128xf32>
    %c0_20 = arith.constant 0 : index
    %c0_21 = arith.constant 0 : index
    %32 = vector.load %arg6[%c0_20, %c0_21] : memref<128x128xf32, #tpu.memory_space<vmem>>, vector<128x128xf32>
    tpu.vector_store %arg6[%c0_20, %c0_21], %31 {strides = array<i32>} : memref<128x128xf32, #tpu.memory_space<vmem>>, vector<128x128xf32>,
    return
  }
}

module attributes {stable_mosaic.version = 11 : i64} {
  func.func @_up_gcn_kernel(%arg0: memref<128x128xf32, #tpu.memory_space<vmem>>, %arg1: memref<128x128xf32, #tpu.memory_space<vmem>>, %arg2: memref<128x128xf32, #tpu.memory_space<vmem>>, %arg3: memref<128x128xf32, #tpu.memory_space<vmem>>, %arg4: memref<1x128xf32, #tpu.memory_space<vmem>>, %arg5: memref<128x128xf32, #tpu.memory_space<vmem>>, %arg6: memref<128x128xf32, #tpu.memory_space<vmem>>) attributes {dimension_semantics = [], scalar_prefetch = 0 : i64, scratch_operands = 0 : i64, tpu.core_type = #tpu.core_type<tc>} {
    %c0 = arith.constant 0 : index
    %c0_0 = arith.constant 0 : index
    %0 = vector.load %arg0[%c0, %c0_0] : memref<128x128xf32, #tpu.memory_space<vmem>>, vector<128x128xf32>
    %1 = tpu.transpose %0, [1, 0] : vector<128x128xf32> -> vector<128x128xf32>
    %c0_1 = arith.constant 0 : index
    %c0_2 = arith.constant 0 : index
    %2 = vector.load %arg1[%c0_1, %c0_2] : memref<128x128xf32, #tpu.memory_space<vmem>>, vector<128x128xf32>
    %cst = arith.constant dense<0.000000e+00> : vector<128x128xf32>
    %3 = tpu.matmul %1, %2, %cst {dimension_numbers = #tpu.dot_dimension_numbers<[1], [0], [0], [1], [0, 0, 1, 1], [], []>} : vector<128x128xf32>, vector<128x128xf32>, vector<128x128xf32> -> vector<128x128xf32>
    %c0_3 = arith.constant 0 : index
    %c0_4 = arith.constant 0 : index
    %4 = vector.load %arg2[%c0_3, %c0_4] : memref<128x128xf32, #tpu.memory_space<vmem>>, vector<128x128xf32>
    %c0_5 = arith.constant 0 : index
    %c0_6 = arith.constant 0 : index
    %5 = vector.load %arg3[%c0_5, %c0_6] : memref<128x128xf32, #tpu.memory_space<vmem>>, vector<128x128xf32>
    %c0_7 = arith.constant 0 : index
    %c0_8 = arith.constant 0 : index
    %6 = vector.load %arg4[%c0_7, %c0_8] : memref<1x128xf32, #tpu.memory_space<vmem>>, vector<1x128xf32>
    %cst_9 = arith.constant dense<0.000000e+00> : vector<128x128xf32>
    %7 = tpu.matmul %3, %4, %cst_9 {dimension_numbers = #tpu.dot_dimension_numbers<[1], [0], [0], [1], [0, 0, 1, 1], [], []>} : vector<128x128xf32>, vector<128x128xf32>, vector<128x128xf32> -> vector<128x128xf32>
    %cst_10 = arith.constant dense<0.000000e+00> : vector<128x128xf32>
    %8 = tpu.matmul %7, %5, %cst_10 {dimension_numbers = #tpu.dot_dimension_numbers<[1], [0], [0], [1], [0, 0, 1, 1], [], []>} : vector<128x128xf32>, vector<128x128xf32>, vector<128x128xf32> -> vector<128x128xf32>
    %9 = vector.broadcast %6 : vector<1x128xf32> to vector<128x128xf32>
    %10 = arith.addf %8, %9 : vector<128x128xf32>
    %cst_11 = arith.constant 0.000000e+00 : f32
    %11 = vector.broadcast %cst_11 : f32 to vector<128x128xf32>
    %12 = arith.maximumf %10, %11 : vector<128x128xf32>
    %c0_12 = arith.constant 0 : index
    %c0_13 = arith.constant 0 : index
    %13 = vector.load %arg5[%c0_12, %c0_13] : memref<128x128xf32, #tpu.memory_space<vmem>>, vector<128x128xf32>
    %14 = arith.addf %12, %13 : vector<128x128xf32>
    %c0_14 = arith.constant 0 : index
    %c0_15 = arith.constant 0 : index
    %15 = vector.load %arg6[%c0_14, %c0_15] : memref<128x128xf32, #tpu.memory_space<vmem>>, vector<128x128xf32>
    tpu.vector_store %arg6[%c0_14, %c0_15], %14 {strides = array<i32>} : memref<128x128xf32, #tpu.memory_space<vmem>>, vector<128x128xf32>,
    return
  }
}

module attributes {stable_mosaic.version = 11 : i64} {
  func.func @_up_gcn_final_kernel(%arg0: memref<128x128xf32, #tpu.memory_space<vmem>>, %arg1: memref<128x128xf32, #tpu.memory_space<vmem>>, %arg2: memref<128x128xf32, #tpu.memory_space<vmem>>, %arg3: memref<128x128xf32, #tpu.memory_space<vmem>>, %arg4: memref<1x128xf32, #tpu.memory_space<vmem>>, %arg5: memref<128x128xf32, #tpu.memory_space<vmem>>, %arg6: memref<128x128xf32, #tpu.memory_space<vmem>>, %arg7: memref<128x128xf32, #tpu.memory_space<vmem>>, %arg8: memref<128x128xf32, #tpu.memory_space<vmem>>) attributes {dimension_semantics = [], scalar_prefetch = 0 : i64, scratch_operands = 0 : i64, tpu.core_type = #tpu.core_type<tc>} {
    %c0 = arith.constant 0 : index
    %c0_0 = arith.constant 0 : index
    %0 = vector.load %arg0[%c0, %c0_0] : memref<128x128xf32, #tpu.memory_space<vmem>>, vector<128x128xf32>
    %1 = tpu.transpose %0, [1, 0] : vector<128x128xf32> -> vector<128x128xf32>
    %c0_1 = arith.constant 0 : index
    %c0_2 = arith.constant 0 : index
    %2 = vector.load %arg1[%c0_1, %c0_2] : memref<128x128xf32, #tpu.memory_space<vmem>>, vector<128x128xf32>
    %cst = arith.constant dense<0.000000e+00> : vector<128x128xf32>
    %3 = tpu.matmul %1, %2, %cst {dimension_numbers = #tpu.dot_dimension_numbers<[1], [0], [0], [1], [0, 0, 1, 1], [], []>} : vector<128x128xf32>, vector<128x128xf32>, vector<128x128xf32> -> vector<128x128xf32>
    %c0_3 = arith.constant 0 : index
    %c0_4 = arith.constant 0 : index
    %4 = vector.load %arg2[%c0_3, %c0_4] : memref<128x128xf32, #tpu.memory_space<vmem>>, vector<128x128xf32>
    %c0_5 = arith.constant 0 : index
    %c0_6 = arith.constant 0 : index
    %5 = vector.load %arg3[%c0_5, %c0_6] : memref<128x128xf32, #tpu.memory_space<vmem>>, vector<128x128xf32>
    %c0_7 = arith.constant 0 : index
    %c0_8 = arith.constant 0 : index
    %6 = vector.load %arg4[%c0_7, %c0_8] : memref<1x128xf32, #tpu.memory_space<vmem>>, vector<1x128xf32>
    %cst_9 = arith.constant dense<0.000000e+00> : vector<128x128xf32>
    %7 = tpu.matmul %3, %4, %cst_9 {dimension_numbers = #tpu.dot_dimension_numbers<[1], [0], [0], [1], [0, 0, 1, 1], [], []>} : vector<128x128xf32>, vector<128x128xf32>, vector<128x128xf32> -> vector<128x128xf32>
    %cst_10 = arith.constant dense<0.000000e+00> : vector<128x128xf32>
    %8 = tpu.matmul %7, %5, %cst_10 {dimension_numbers = #tpu.dot_dimension_numbers<[1], [0], [0], [1], [0, 0, 1, 1], [], []>} : vector<128x128xf32>, vector<128x128xf32>, vector<128x128xf32> -> vector<128x128xf32>
    %9 = vector.broadcast %6 : vector<1x128xf32> to vector<128x128xf32>
    %10 = arith.addf %8, %9 : vector<128x128xf32>
    %cst_11 = arith.constant 0.000000e+00 : f32
    %11 = vector.broadcast %cst_11 : f32 to vector<128x128xf32>
    %12 = arith.maximumf %10, %11 : vector<128x128xf32>
    %c0_12 = arith.constant 0 : index
    %c0_13 = arith.constant 0 : index
    %13 = vector.load %arg5[%c0_12, %c0_13] : memref<128x128xf32, #tpu.memory_space<vmem>>, vector<128x128xf32>
    %14 = arith.addf %12, %13 : vector<128x128xf32>
    %c0_14 = arith.constant 0 : index
    %c0_15 = arith.constant 0 : index
    %15 = vector.load %arg7[%c0_14, %c0_15] : memref<128x128xf32, #tpu.memory_space<vmem>>, vector<128x128xf32>
    tpu.vector_store %arg7[%c0_14, %c0_15], %14 {strides = array<i32>} : memref<128x128xf32, #tpu.memory_space<vmem>>, vector<128x128xf32>,
    %c0_16 = arith.constant 0 : index
    %c0_17 = arith.constant 0 : index
    %16 = vector.load %arg6[%c0_16, %c0_17] : memref<128x128xf32, #tpu.memory_space<vmem>>, vector<128x128xf32>
    %17 = arith.addf %14, %16 : vector<128x128xf32>
    %c0_18 = arith.constant 0 : index
    %c0_19 = arith.constant 0 : index
    %18 = vector.load %arg8[%c0_18, %c0_19] : memref<128x128xf32, #tpu.memory_space<vmem>>, vector<128x128xf32>
    tpu.vector_store %arg8[%c0_18, %c0_19], %17 {strides = array<i32>} : memref<128x128xf32, #tpu.memory_space<vmem>>, vector<128x128xf32>,
    return
  }
}

</mosaic_0001>

<llo_original>
// kernel: graph_unet_forward.5
$region0: #{graph_unet_forward.5}
  #allocation0 [shape = 'u32[]', space=smem, size = 0x4, offset = 0x4, fixed_abs, tag = 'smem constant byte address 0x4 - core index']
  #allocation1 [shape = 'u32[144,128]{1,0:T(1,128)}', space=vmem, size = 0x12000, scoped, tag = 'internal scratch']
  #allocation2 [shape = 'f32[1,1]{1,0:T(1,128)S(1)}', space=vmem, size = 0x200, scoped, tag = 'scoped memory for graph_unet_forward.5']
  %s0 = inlined_call_operand.vmem [shape: f32[128,128], index: 0, kind: input, shape index: {}]
  %s1 = inlined_call_operand.vmem [shape: f32[128,128], index: 1, kind: input, shape index: {}]
  %s2 = inlined_call_operand.vmem [shape: f32[128,128], index: 2, kind: input, shape index: {}]
  %s3 = inlined_call_operand.vmem [shape: f32[1,128], index: 3, kind: input, shape index: {}]
  %s4 = inlined_call_operand.vmem [shape: f32[1,128], index: 4, kind: input, shape index: {}]
  %s5 = inlined_call_operand.<no memory space> [shape: f32[1,1], index: 5, kind: input, shape index: {}]
  %s6 = inlined_call_operand.vmem [shape: f32[128,128], index: 6, kind: output, shape index: {0}]
  %s7 = inlined_call_operand.vmem [shape: f32[1,128], index: 7, kind: output, shape index: {1}]
  %8 = xla_tuple %s6, %s7
  %s9 = sld [smem:[#allocation0]]
  $region42: #{graph_unet_forward.5} parent=0
    _
  %s11 = ssub.s32 1, %s9
  %s12 = scalar_select 0, %s11, %s9
  %v13 = vstv %s5
  %14 = vst [vmem:[#allocation2] sm:$0x1] %v13
  // Predicated region
  $region2: #{graph_unet_forward.5} parent=0 // pred_check
    _
  $region3: #{graph_unet_forward.5} parent=0 // pred_check_branch
    %16 = sbr.rel (0) target = $region5
  $region4: #{graph_unet_forward.5} parent=0 // pred_region
    _
  $region5: #{graph_unet_forward.5} parent=0 // pred_fallthru
    _
  // Predicated region
  $region6: #{graph_unet_forward.5} parent=0 // pred_check
    _
  $region7: #{graph_unet_forward.5} parent=0 // pred_check_branch
    %18 = sbr.rel (0) target = $region9
  $region8: #{graph_unet_forward.5} parent=0 // pred_region
    _
  $region9: #{graph_unet_forward.5} parent=0 // pred_fallthru
    _
  // Predicated region
  $region10: #{graph_unet_forward.5} parent=0 // pred_check
    _
  $region11: #{graph_unet_forward.5} parent=0 // pred_check_branch
    %20 = sbr.rel (0) target = $region13
  $region12: #{graph_unet_forward.5} parent=0 // pred_region
    _
  $region13: #{graph_unet_forward.5} parent=0 // pred_fallthru
    _
  // Predicated region
  $region14: #{graph_unet_forward.5} parent=0 // pred_check
    _
  $region15: #{graph_unet_forward.5} parent=0 // pred_check_branch
    %22 = sbr.rel (0) target = $region17
  $region16: #{graph_unet_forward.5} parent=0 // pred_region
    _
  $region17: #{graph_unet_forward.5} parent=0 // pred_fallthru
    _
  // Predicated region
  $region18: #{graph_unet_forward.5} parent=0 // pred_check
    _
  $region19: #{graph_unet_forward.5} parent=0 // pred_check_branch
    %24 = sbr.rel (0) target = $region21
  $region20: #{graph_unet_forward.5} parent=0 // pred_region
    _
  $region21: #{graph_unet_forward.5} parent=0 // pred_fallthru
    _
  // Predicated region
  $region22: #{graph_unet_forward.5} parent=0 // pred_check
    _
  $region23: #{graph_unet_forward.5} parent=0 // pred_check_branch
    %26 = sbr.rel (0) target = $region25
  $region24: #{graph_unet_forward.5} parent=0 // pred_region
    _
  $region25: #{graph_unet_forward.5} parent=0 // pred_fallthru
    _
  %v27 = vld [vmem:[%s1] sm:$0xff]
  %v28 = vld [vmem:[%s1 + $0x8] sm:$0xff]
  %v29 = vld [vmem:[%s1 + $0x10] sm:$0xff]
  %v30 = vld [vmem:[%s1 + $0x18] sm:$0xff]
  %v31 = vld [vmem:[%s1 + $0x20] sm:$0xff]
  %v32 = vld [vmem:[%s1 + $0x28] sm:$0xff]
  %v33 = vld [vmem:[%s1 + $0x30] sm:$0xff]
  %v34 = vld [vmem:[%s1 + $0x38] sm:$0xff]
  %v35 = vld [vmem:[%s1 + $0x40] sm:$0xff]
  %v36 = vld [vmem:[%s1 + $0x48] sm:$0xff]
  %v37 = vld [vmem:[%s1 + $0x50] sm:$0xff]
  %v38 = vld [vmem:[%s1 + $0x58] sm:$0xff]
  %v39 = vld [vmem:[%s1 + $0x60] sm:$0xff]
  %v40 = vld [vmem:[%s1 + $0x68] sm:$0xff]
  %v41 = vld [vmem:[%s1 + $0x70] sm:$0xff]
  %v42 = vld [vmem:[%s1 + $0x78] sm:$0xff]
  %v43 = vld [vmem:[%s0] sm:$0xff]
  %v44 = vld [vmem:[%s0 + $0x8] sm:$0xff]
  %v45 = vld [vmem:[%s0 + $0x10] sm:$0xff]
  %v46 = vld [vmem:[%s0 + $0x18] sm:$0xff]
  %v47 = vld [vmem:[%s0 + $0x20] sm:$0xff]
  %v48 = vld [vmem:[%s0 + $0x28] sm:$0xff]
  %v49 = vld [vmem:[%s0 + $0x30] sm:$0xff]
  %v50 = vld [vmem:[%s0 + $0x38] sm:$0xff]
  %v51 = vld [vmem:[%s0 + $0x40] sm:$0xff]
  %v52 = vld [vmem:[%s0 + $0x48] sm:$0xff]
  %v53 = vld [vmem:[%s0 + $0x50] sm:$0xff]
  %v54 = vld [vmem:[%s0 + $0x58] sm:$0xff]
  %v55 = vld [vmem:[%s0 + $0x60] sm:$0xff]
  %v56 = vld [vmem:[%s0 + $0x68] sm:$0xff]
  %v57 = vld [vmem:[%s0 + $0x70] sm:$0xff]
  %v58 = vld [vmem:[%s0 + $0x78] sm:$0xff]
  %v59 = vld [vmem:[%s2] sm:$0xff]
  %v60 = vld [vmem:[%s2 + $0x8] sm:$0xff]
  %v61 = vld [vmem:[%s2 + $0x10] sm:$0xff]
  %v62 = vld [vmem:[%s2 + $0x18] sm:$0xff]
  %v63 = vld [vmem:[%s2 + $0x20] sm:$0xff]
  %v64 = vld [vmem:[%s2 + $0x28] sm:$0xff]
  %v65 = vld [vmem:[%s2 + $0x30] sm:$0xff]
  %v66 = vld [vmem:[%s2 + $0x38] sm:$0xff]
  %v67 = vld [vmem:[%s2 + $0x40] sm:$0xff]
  %v68 = vld [vmem:[%s2 + $0x48] sm:$0xff]
  %v69 = vld [vmem:[%s2 + $0x50] sm:$0xff]
  %v70 = vld [vmem:[%s2 + $0x58] sm:$0xff]
  %v71 = vld [vmem:[%s2 + $0x60] sm:$0xff]
  %v72 = vld [vmem:[%s2 + $0x68] sm:$0xff]
  %v73 = vld [vmem:[%s2 + $0x70] sm:$0xff]
  %v74 = vld [vmem:[%s2 + $0x78] sm:$0xff]
  %v75 = vld [vmem:[%s3] sm:$0x1]
  %76 = vmatprep.subr.mxu0 0.0
  %77 = vmatpush1.msra.mxu0 %v43
  %78 = vmatprep.subr.mxu0 0.0
  %79 = vmatpush1.msra.mxu0 %v44
  %80 = vmatprep.subr.mxu0 0.0
  %81 = vmatpush1.msra.mxu0 %v45
  %82 = vmatprep.subr.mxu0 0.0
  %83 = vmatpush1.msra.mxu0 %v46
  %84 = vmatprep.subr.mxu0 0.0
  %85 = vmatpush1.msra.mxu0 %v47
  %86 = vmatprep.subr.mxu0 0.0
  %87 = vmatpush1.msra.mxu0 %v48
  %88 = vmatprep.subr.mxu0 0.0
  %89 = vmatpush1.msra.mxu0 %v49
  %90 = vmatprep.subr.mxu0 0.0
  %91 = vmatpush1.msra.mxu0 %v50
  %92 = vmatprep.subr.mxu0 0.0
  %93 = vmatpush1.msra.mxu0 %v51
  %94 = vmatprep.subr.mxu0 0.0
  %95 = vmatpush1.msra.mxu0 %v52
  %96 = vmatprep.subr.mxu0 0.0
  %97 = vmatpush1.msra.mxu0 %v53
  %98 = vmatprep.subr.mxu0 0.0
  %99 = vmatpush1.msra.mxu0 %v54
  %100 = vmatprep.subr.mxu0 0.0
  %101 = vmatpush1.msra.mxu0 %v55
  %102 = vmatprep.subr.mxu0 0.0
  %103 = vmatpush1.msra.mxu0 %v56
  %104 = vmatprep.subr.mxu0 0.0
  %105 = vmatpush1.msra.mxu0 %v57
  %106 = vmatprep.subr.mxu0 0.0
  %107 = vmatpush1.msra.mxu0 %v58
  %108 = vmatprep.subr.mxu0 0.0
  %109 = vmatpush1.msra.mxu0 0.0
  %110 = vmatprep.subr.mxu0 0.0
  %111 = vmatpush1.msra.mxu0 0.0
  %112 = vmatprep.subr.mxu0 0.0
  %113 = vmatpush1.msra.mxu0 0.0
  %114 = vmatprep.subr.mxu0 0.0
  %115 = vmatpush1.msra.mxu0 0.0
  %116 = vmatprep.subr.mxu0 0.0
  %117 = vmatpush1.msra.mxu0 0.0
  %118 = vmatprep.subr.mxu0 0.0
  %119 = vmatpush1.msra.mxu0 0.0
  %120 = vmatprep.subr.mxu0 0.0
  %121 = vmatpush1.msra.mxu0 0.0
  %122 = vmatprep.subr.mxu0 0.0
  %123 = vmatpush1.msra.mxu0 0.0
  %124 = vmatprep.subr.mxu0 0.0
  %125 = vmatpush1.msra.mxu0 0.0
  %126 = vmatprep.subr.mxu0 0.0
  %127 = vmatpush1.msra.mxu0 0.0
  %128 = vmatprep.subr.mxu0 0.0
  %129 = vmatpush1.msra.mxu0 0.0
  %130 = vmatprep.subr.mxu0 0.0
  %131 = vmatpush1.msra.mxu0 0.0
  %132 = vmatprep.subr.mxu0 0.0
  %133 = vmatpush1.msra.mxu0 0.0
  %134 = vmatprep.subr.mxu0 0.0
  %135 = vmatpush1.msra.mxu0 0.0
  %136 = vmatprep.subr.mxu0 0.0
  %137 = vmatpush1.msra.mxu0 0.0
  %138 = vmatprep.subr.mxu0 0.0
  %139 = vmatpush1.msra.mxu0 0.0
  %140 = vmatprep.mubr.f32.mxu0 0.0
  %141 = vmatmul.mubr.f32.gmra.mrb[0].mxu0 %v27
  %v142 = vpop.f32.mrb[0].mxu0
  %v143 = vadd.f32 0.0, %v142
  %v144 = vpop.f32.mrb[0].mxu0
  %145 = vmatprep.mubr.f32.mxu0 0.0
  %146 = vmatmul.mubr.f32.gmra.mrb[0].mxu0 %v28
  %v147 = vpop.f32.mrb[0].mxu0
  %v148 = vadd.f32 0.0, %v147
  %v149 = vpop.f32.mrb[0].mxu0
  %150 = vmatprep.mubr.f32.mxu0 0.0
  %151 = vmatmul.mubr.f32.gmra.mrb[0].mxu0 %v29
  %v152 = vpop.f32.mrb[0].mxu0
  %v153 = vadd.f32 0.0, %v152
  %v154 = vpop.f32.mrb[0].mxu0
  %155 = vmatprep.mubr.f32.mxu0 0.0
  %156 = vmatmul.mubr.f32.gmra.mrb[0].mxu0 %v30
  %v157 = vpop.f32.mrb[0].mxu0
  %v158 = vadd.f32 0.0, %v157
  %v159 = vpop.f32.mrb[0].mxu0
  %160 = vmatprep.mubr.f32.mxu0 0.0
  %161 = vmatmul.mubr.f32.gmra.mrb[0].mxu0 %v31
  %v162 = vpop.f32.mrb[0].mxu0
  %v163 = vadd.f32 0.0, %v162
  %v164 = vpop.f32.mrb[0].mxu0
  %165 = vmatprep.mubr.f32.mxu0 0.0
  %166 = vmatmul.mubr.f32.gmra.mrb[0].mxu0 %v32
  %v167 = vpop.f32.mrb[0].mxu0
  %v168 = vadd.f32 0.0, %v167
  %v169 = vpop.f32.mrb[0].mxu0
  %170 = vmatprep.mubr.f32.mxu0 0.0
  %171 = vmatmul.mubr.f32.gmra.mrb[0].mxu0 %v33
  %v172 = vpop.f32.mrb[0].mxu0
  %v173 = vadd.f32 0.0, %v172
  %v174 = vpop.f32.mrb[0].mxu0
  %175 = vmatprep.mubr.f32.mxu0 0.0
  %176 = vmatmul.mubr.f32.gmra.mrb[0].mxu0 %v34
  %v177 = vpop.f32.mrb[0].mxu0
  %v178 = vadd.f32 0.0, %v177
  %v179 = vpop.f32.mrb[0].mxu0
  %180 = vmatprep.mubr.f32.mxu0 0.0
  %181 = vmatmul.mubr.f32.gmra.mrb[0].mxu0 %v35
  %v182 = vpop.f32.mrb[0].mxu0
  %v183 = vadd.f32 0.0, %v182
  %v184 = vpop.f32.mrb[0].mxu0
  %185 = vmatprep.mubr.f32.mxu0 0.0
  %186 = vmatmul.mubr.f32.gmra.mrb[0].mxu0 %v36
  %v187 = vpop.f32.mrb[0].mxu0
  %v188 = vadd.f32 0.0, %v187
  %v189 = vpop.f32.mrb[0].mxu0
  %190 = vmatprep.mubr.f32.mxu0 0.0
  %191 = vmatmul.mubr.f32.gmra.mrb[0].mxu0 %v37
  %v192 = vpop.f32.mrb[0].mxu0
  %v193 = vadd.f32 0.0, %v192
  %v194 = vpop.f32.mrb[0].mxu0
  %195 = vmatprep.mubr.f32.mxu0 0.0
  %196 = vmatmul.mubr.f32.gmra.mrb[0].mxu0 %v38
  %v197 = vpop.f32.mrb[0].mxu0
  %v198 = vadd.f32 0.0, %v197
  %v199 = vpop.f32.mrb[0].mxu0
  %200 = vmatprep.mubr.f32.mxu0 0.0
  %201 = vmatmul.mubr.f32.gmra.mrb[0].mxu0 %v39
  %v202 = vpop.f32.mrb[0].mxu0
  %v203 = vadd.f32 0.0, %v202
  %v204 = vpop.f32.mrb[0].mxu0
  %205 = vmatprep.mubr.f32.mxu0 0.0
  %206 = vmatmul.mubr.f32.gmra.mrb[0].mxu0 %v40
  %v207 = vpop.f32.mrb[0].mxu0
  %v208 = vadd.f32 0.0, %v207
  %v209 = vpop.f32.mrb[0].mxu0
  %210 = vmatprep.mubr.f32.mxu0 0.0
  %211 = vmatmul.mubr.f32.gmra.mrb[0].mxu0 %v41
  %v212 = vpop.f32.mrb[0].mxu0
  %v213 = vadd.f32 0.0, %v212
  %v214 = vpop.f32.mrb[0].mxu0
  %215 = vmatprep.mubr.f32.mxu0 0.0
  %216 = vmatmul.mubr.f32.gmra.mrb[0].mxu0 %v42
  %v217 = vpop.f32.mrb[0].mxu0
  %v218 = vadd.f32 0.0, %v217
  %v219 = vpop.f32.mrb[0].mxu0
  %220 = vdwg.mxu0
  %v222 = vlaneseq
  %v223 = vshrl.u32 %v222, 7
  %v224 = vsub.s32 0, %v223
  %v225 = vrot.slane %v75, %v224
  %227 = vmatprep.subr.mxu0 0.0
  %228 = vmatpush1.msra.mxu0 %v59
  %229 = vmatprep.subr.mxu0 0.0
  %230 = vmatpush1.msra.mxu0 %v60
  %231 = vmatprep.subr.mxu0 0.0
  %232 = vmatpush1.msra.mxu0 %v61
  %233 = vmatprep.subr.mxu0 0.0
  %234 = vmatpush1.msra.mxu0 %v62
  %235 = vmatprep.subr.mxu0 0.0
  %236 = vmatpush1.msra.mxu0 %v63
  %237 = vmatprep.subr.mxu0 0.0
  %238 = vmatpush1.msra.mxu0 %v64
  %239 = vmatprep.subr.mxu0 0.0
  %240 = vmatpush1.msra.mxu0 %v65
  %241 = vmatprep.subr.mxu0 0.0
  %242 = vmatpush1.msra.mxu0 %v66
  %243 = vmatprep.subr.mxu0 0.0
  %244 = vmatpush1.msra.mxu0 %v67
  %245 = vmatprep.subr.mxu0 0.0
  %246 = vmatpush1.msra.mxu0 %v68
  %247 = vmatprep.subr.mxu0 0.0
  %248 = vmatpush1.msra.mxu0 %v69
  %249 = vmatprep.subr.mxu0 0.0
  %250 = vmatpush1.msra.mxu0 %v70
  %251 = vmatprep.subr.mxu0 0.0
  %252 = vmatpush1.msra.mxu0 %v71
  %253 = vmatprep.subr.mxu0 0.0
  %254 = vmatpush1.msra.mxu0 %v72
  %255 = vmatprep.subr.mxu0 0.0
  %256 = vmatpush1.msra.mxu0 %v73
  %257 = vmatprep.subr.mxu0 0.0
  %258 = vmatpush1.msra.mxu0 %v74
  %259 = vmatprep.subr.mxu0 0.0
  %260 = vmatpush1.msra.mxu0 0.0
  %261 = vmatprep.subr.mxu0 0.0
  %262 = vmatpush1.msra.mxu0 0.0
  %263 = vmatprep.subr.mxu0 0.0
  %264 = vmatpush1.msra.mxu0 0.0
  %265 = vmatprep.subr.mxu0 0.0
  %266 = vmatpush1.msra.mxu0 0.0
  %267 = vmatprep.subr.mxu0 0.0
  %268 = vmatpush1.msra.mxu0 0.0
  %269 = vmatprep.subr.mxu0 0.0
  %270 = vmatpush1.msra.mxu0 0.0
  %271 = vmatprep.subr.mxu0 0.0
  %272 = vmatpush1.msra.mxu0 0.0
  %273 = vmatprep.subr.mxu0 0.0
  %274 = vmatpush1.msra.mxu0 0.0
  %275 = vmatprep.subr.mxu0 0.0
  %276 = vmatpush1.msra.mxu0 0.0
  %277 = vmatprep.subr.mxu0 0.0
  %278 = vmatpush1.msra.mxu0 0.0
  %279 = vmatprep.subr.mxu0 0.0
  %280 = vmatpush1.msra.mxu0 0.0
  %281 = vmatprep.subr.mxu0 0.0
  %282 = vmatpush1.msra.mxu0 0.0
  %283 = vmatprep.subr.mxu0 0.0
  %284 = vmatpush1.msra.mxu0 0.0
  %285 = vmatprep.subr.mxu0 0.0
  %286 = vmatpush1.msra.mxu0 0.0
  %287 = vmatprep.subr.mxu0 0.0
  %288 = vmatpush1.msra.mxu0 0.0
  %289 = vmatprep.subr.mxu0 0.0
  %290 = vmatpush1.msra.mxu0 0.0
  %291 = vmatprep.mubr.f32.mxu0 0.0
  %292 = vmatmul.mubr.f32.gmra.mrb[0].mxu0 %v143
  %v293 = vpop.f32.mrb[0].mxu0
  %v294 = vadd.f32 %v225, %v293
  %v295 = vpop.f32.mrb[0].mxu0
  %296 = vmatprep.mubr.f32.mxu0 0.0
  %297 = vmatmul.mubr.f32.gmra.mrb[0].mxu0 %v148
  %v298 = vpop.f32.mrb[0].mxu0
  %v299 = vadd.f32 %v225, %v298
  %v300 = vpop.f32.mrb[0].mxu0
  %301 = vmatprep.mubr.f32.mxu0 0.0
  %302 = vmatmul.mubr.f32.gmra.mrb[0].mxu0 %v153
  %v303 = vpop.f32.mrb[0].mxu0
  %v304 = vadd.f32 %v225, %v303
  %v305 = vpop.f32.mrb[0].mxu0
  %306 = vmatprep.mubr.f32.mxu0 0.0
  %307 = vmatmul.mubr.f32.gmra.mrb[0].mxu0 %v158
  %v308 = vpop.f32.mrb[0].mxu0
  %v309 = vadd.f32 %v225, %v308
  %v310 = vpop.f32.mrb[0].mxu0
  %311 = vmatprep.mubr.f32.mxu0 0.0
  %312 = vmatmul.mubr.f32.gmra.mrb[0].mxu0 %v163
  %v313 = vpop.f32.mrb[0].mxu0
  %v314 = vadd.f32 %v225, %v313
  %v315 = vpop.f32.mrb[0].mxu0
  %316 = vmatprep.mubr.f32.mxu0 0.0
  %317 = vmatmul.mubr.f32.gmra.mrb[0].mxu0 %v168
  %v318 = vpop.f32.mrb[0].mxu0
  %v319 = vadd.f32 %v225, %v318
  %v320 = vpop.f32.mrb[0].mxu0
  %321 = vmatprep.mubr.f32.mxu0 0.0
  %322 = vmatmul.mubr.f32.gmra.mrb[0].mxu0 %v173
  %v323 = vpop.f32.mrb[0].mxu0
  %v324 = vadd.f32 %v225, %v323
  %v325 = vpop.f32.mrb[0].mxu0
  %326 = vmatprep.mubr.f32.mxu0 0.0
  %327 = vmatmul.mubr.f32.gmra.mrb[0].mxu0 %v178
  %v328 = vpop.f32.mrb[0].mxu0
  %v329 = vadd.f32 %v225, %v328
  %v330 = vpop.f32.mrb[0].mxu0
  %331 = vmatprep.mubr.f32.mxu0 0.0
  %332 = vmatmul.mubr.f32.gmra.mrb[0].mxu0 %v183
  %v333 = vpop.f32.mrb[0].mxu0
  %v334 = vadd.f32 %v225, %v333
  %v335 = vpop.f32.mrb[0].mxu0
  %336 = vmatprep.mubr.f32.mxu0 0.0
  %337 = vmatmul.mubr.f32.gmra.mrb[0].mxu0 %v188
  %v338 = vpop.f32.mrb[0].mxu0
  %v339 = vadd.f32 %v225, %v338
  %v340 = vpop.f32.mrb[0].mxu0
  %341 = vmatprep.mubr.f32.mxu0 0.0
  %342 = vmatmul.mubr.f32.gmra.mrb[0].mxu0 %v193
  %v343 = vpop.f32.mrb[0].mxu0
  %v344 = vadd.f32 %v225, %v343
  %v345 = vpop.f32.mrb[0].mxu0
  %346 = vmatprep.mubr.f32.mxu0 0.0
  %347 = vmatmul.mubr.f32.gmra.mrb[0].mxu0 %v198
  %v348 = vpop.f32.mrb[0].mxu0
  %v349 = vadd.f32 %v225, %v348
  %v350 = vpop.f32.mrb[0].mxu0
  %351 = vmatprep.mubr.f32.mxu0 0.0
  %352 = vmatmul.mubr.f32.gmra.mrb[0].mxu0 %v203
  %v353 = vpop.f32.mrb[0].mxu0
  %v354 = vadd.f32 %v225, %v353
  %v355 = vpop.f32.mrb[0].mxu0
  %356 = vmatprep.mubr.f32.mxu0 0.0
  %357 = vmatmul.mubr.f32.gmra.mrb[0].mxu0 %v208
  %v358 = vpop.f32.mrb[0].mxu0
  %v359 = vadd.f32 %v225, %v358
  %v360 = vpop.f32.mrb[0].mxu0
  %361 = vmatprep.mubr.f32.mxu0 0.0
  %362 = vmatmul.mubr.f32.gmra.mrb[0].mxu0 %v213
  %v363 = vpop.f32.mrb[0].mxu0
  %v364 = vadd.f32 %v225, %v363
  %v365 = vpop.f32.mrb[0].mxu0
  %366 = vmatprep.mubr.f32.mxu0 0.0
  %367 = vmatmul.mubr.f32.gmra.mrb[0].mxu0 %v218
  %v368 = vpop.f32.mrb[0].mxu0
  %v369 = vadd.f32 %v225, %v368
  %v370 = vpop.f32.mrb[0].mxu0
  %371 = vdwg.mxu0
  %v372 = vmax.f32 %v294, 0.0
  %v373 = vmax.f32 %v299, 0.0
  %v374 = vmax.f32 %v304, 0.0
  %v375 = vmax.f32 %v309, 0.0
  %v376 = vmax.f32 %v314, 0.0
  %v377 = vmax.f32 %v319, 0.0
  %v378 = vmax.f32 %v324, 0.0
  %v379 = vmax.f32 %v329, 0.0
  %v380 = vmax.f32 %v334, 0.0
  %v381 = vmax.f32 %v339, 0.0
  %v382 = vmax.f32 %v344, 0.0
  %v383 = vmax.f32 %v349, 0.0
  %v384 = vmax.f32 %v354, 0.0
  %v385 = vmax.f32 %v359, 0.0
  %v386 = vmax.f32 %v364, 0.0
  %v387 = vmax.f32 %v369, 0.0
  %388 = vst [vmem:[%s6] sm:$0xff] %v372
  %389 = vst [vmem:[%s6 + $0x8] sm:$0xff] %v373
  %390 = vst [vmem:[%s6 + $0x10] sm:$0xff] %v374
  %391 = vst [vmem:[%s6 + $0x18] sm:$0xff] %v375
  %392 = vst [vmem:[%s6 + $0x20] sm:$0xff] %v376
  %393 = vst [vmem:[%s6 + $0x28] sm:$0xff] %v377
  %394 = vst [vmem:[%s6 + $0x30] sm:$0xff] %v378
  %395 = vst [vmem:[%s6 + $0x38] sm:$0xff] %v379
  %396 = vst [vmem:[%s6 + $0x40] sm:$0xff] %v380
  %397 = vst [vmem:[%s6 + $0x48] sm:$0xff] %v381
  %398 = vst [vmem:[%s6 + $0x50] sm:$0xff] %v382
  %399 = vst [vmem:[%s6 + $0x58] sm:$0xff] %v383
  %400 = vst [vmem:[%s6 + $0x60] sm:$0xff] %v384
  %401 = vst [vmem:[%s6 + $0x68] sm:$0xff] %v385
  %402 = vst [vmem:[%s6 + $0x70] sm:$0xff] %v386
  %403 = vst [vmem:[%s6 + $0x78] sm:$0xff] %v387
  %v404 = vld [vmem:[%s4] sm:$0x1]
  %v405 = vld [vmem:[#allocation2] sm:$0x1]
  %407 = vset.pattern.permute.xlu0 0
  %408 = vperm.xlu0 %407, %v405
  %v409 = vpop.permute.xlu0 %408
  %v411 = vlaneseq
  %v412 = vshrl.u32 %v411, 7
  %v413 = vsub.s32 0, %v412
  %v414 = vrot.slane %v409, %v413
  %415 = vmatprep.subr.mxu0 0.0
  %416 = vmatpush1.xpose.msra.mxu0 %v372
  %417 = vmatprep.subr.mxu0 0.0
  %418 = vmatpush1.xpose.msra.mxu0 %v373
  %419 = vmatprep.subr.mxu0 0.0
  %420 = vmatpush1.xpose.msra.mxu0 %v374
  %421 = vmatprep.subr.mxu0 0.0
  %422 = vmatpush1.xpose.msra.mxu0 %v375
  %423 = vmatprep.subr.mxu0 0.0
  %424 = vmatpush1.xpose.msra.mxu0 %v376
  %425 = vmatprep.subr.mxu0 0.0
  %426 = vmatpush1.xpose.msra.mxu0 %v377
  %427 = vmatprep.subr.mxu0 0.0
  %428 = vmatpush1.xpose.msra.mxu0 %v378
  %429 = vmatprep.subr.mxu0 0.0
  %430 = vmatpush1.xpose.msra.mxu0 %v379
  %431 = vmatprep.subr.mxu0 0.0
  %432 = vmatpush1.xpose.msra.mxu0 %v380
  %433 = vmatprep.subr.mxu0 0.0
  %434 = vmatpush1.xpose.msra.mxu0 %v381
  %435 = vmatprep.subr.mxu0 0.0
  %436 = vmatpush1.xpose.msra.mxu0 %v382
  %437 = vmatprep.subr.mxu0 0.0
  %438 = vmatpush1.xpose.msra.mxu0 %v383
  %439 = vmatprep.subr.mxu0 0.0
  %440 = vmatpush1.xpose.msra.mxu0 %v384
  %441 = vmatprep.subr.mxu0 0.0
  %442 = vmatpush1.xpose.msra.mxu0 %v385
  %443 = vmatprep.subr.mxu0 0.0
  %444 = vmatpush1.xpose.msra.mxu0 %v386
  %445 = vmatprep.subr.mxu0 0.0
  %446 = vmatpush1.xpose.msra.mxu0 %v387
  %447 = vmatprep.subr.mxu0 0.0
  %448 = vmatpush1.xpose.msra.mxu0 0.0
  %449 = vmatprep.subr.mxu0 0.0
  %450 = vmatpush1.xpose.msra.mxu0 0.0
  %451 = vmatprep.subr.mxu0 0.0
  %452 = vmatpush1.xpose.msra.mxu0 0.0
  %453 = vmatprep.subr.mxu0 0.0
  %454 = vmatpush1.xpose.msra.mxu0 0.0
  %455 = vmatprep.subr.mxu0 0.0
  %456 = vmatpush1.xpose.msra.mxu0 0.0
  %457 = vmatprep.subr.mxu0 0.0
  %458 = vmatpush1.xpose.msra.mxu0 0.0
  %459 = vmatprep.subr.mxu0 0.0
  %460 = vmatpush1.xpose.msra.mxu0 0.0
  %461 = vmatprep.subr.mxu0 0.0
  %462 = vmatpush1.xpose.msra.mxu0 0.0
  %463 = vmatprep.subr.mxu0 0.0
  %464 = vmatpush1.xpose.msra.mxu0 0.0
  %465 = vmatprep.subr.mxu0 0.0
  %466 = vmatpush1.xpose.msra.mxu0 0.0
  %467 = vmatprep.subr.mxu0 0.0
  %468 = vmatpush1.xpose.msra.mxu0 0.0
  %469 = vmatprep.subr.mxu0 0.0
  %470 = vmatpush1.xpose.msra.mxu0 0.0
  %471 = vmatprep.subr.mxu0 0.0
  %472 = vmatpush1.xpose.msra.mxu0 0.0
  %473 = vmatprep.subr.mxu0 0.0
  %474 = vmatpush1.xpose.msra.mxu0 0.0
  %475 = vmatprep.subr.mxu0 0.0
  %476 = vmatpush1.xpose.msra.mxu0 0.0
  %477 = vmatprep.subr.mxu0 0.0
  %478 = vmatpush1.xpose.msra.mxu0 0.0
  %479 = vmatprep.mubr.f32.mxu0 0.0
  %480 = vmatmul.mubr.f32.gmra.mrb[0].mxu0 %v404
  %v481 = vpop.f32.mrb[0].mxu0
  %v482 = vadd.f32 %v414, %v481
  %v483 = vpop.f32.mrb[0].mxu0
  %484 = vdwg.mxu0
  %v485 = vxor.u32 %v482, 2147483648
  %v486 = vmul.f32 %v485, 1.442695
  %v487 = vpow.pop %v486
  %v488 = vadd.f32 %v487, 1.0
  %v489 = vrcp.pop %v488
  %v490 = vmul.f32 1.0, %v489
  %491 = vst [vmem:[%s7] sm:$0x1] %v490
  // Predicated region
  $region26: #{graph_unet_forward.5} parent=0 // pred_check
    _
  $region27: #{graph_unet_forward.5} parent=0 // pred_check_branch
    %493 = sbr.rel (0) target = $region29
  $region28: #{graph_unet_forward.5} parent=0 // pred_region
    _
  $region29: #{graph_unet_forward.5} parent=0 // pred_fallthru
    _
  // Predicated region
  $region30: #{graph_unet_forward.5} parent=0 // pred_check
    _
  $region31: #{graph_unet_forward.5} parent=0 // pred_check_branch
    %495 = sbr.rel (0) target = $region33
  $region32: #{graph_unet_forward.5} parent=0 // pred_region
    _
  $region33: #{graph_unet_forward.5} parent=0 // pred_fallthru
    _
  // Predicated region
  $region34: #{graph_unet_forward.5} parent=0 // pred_check
    _
  $region35: #{graph_unet_forward.5} parent=0 // pred_check_branch
    %497 = sbr.rel (0) target = $region37
  $region36: #{graph_unet_forward.5} parent=0 // pred_region
    _
  $region37: #{graph_unet_forward.5} parent=0 // pred_fallthru
    _
  // Predicated region
  $region38: #{graph_unet_forward.5} parent=0 // pred_check
    _
  $region39: #{graph_unet_forward.5} parent=0 // pred_check_branch
    %499 = sbr.rel (0) target = $region41
  $region40: #{graph_unet_forward.5} parent=0 // pred_region
    _
  $region41: #{graph_unet_forward.5} parent=0 // pred_fallthru
    _

// kernel: graph_unet_forward.8
$region0: #{graph_unet_forward.8}
  #allocation0 [shape = 'u32[]', space=smem, size = 0x4, offset = 0x4, fixed_abs, tag = 'smem constant byte address 0x4 - core index']
  #allocation1 [shape = 'u32[144,128]{1,0:T(1,128)}', space=vmem, size = 0x12000, scoped, tag = 'internal scratch']
  %s0 = inlined_call_operand.vmem [shape: f32[128,128], index: 0, kind: input, shape index: {}]
  %s1 = inlined_call_operand.vmem [shape: f32[128,128], index: 1, kind: input, shape index: {}]
  %s2 = inlined_call_operand.vmem [shape: f32[128,128], index: 2, kind: input, shape index: {}]
  %s3 = inlined_call_operand.vmem [shape: f32[128,128], index: 3, kind: input, shape index: {}]
  %s4 = inlined_call_operand.vmem [shape: f32[1,128], index: 4, kind: input, shape index: {}]
  %s5 = inlined_call_operand.vmem [shape: f32[128,128], index: 5, kind: input, shape index: {}]
  %s6 = inlined_call_operand.vmem [shape: f32[128,128], index: 6, kind: output, shape index: {}]
  %s7 = sld [smem:[#allocation0]]
  $region34: #{graph_unet_forward.8} parent=0
    _
  %s9 = ssub.s32 1, %s7
  %s10 = scalar_select 0, %s9, %s7
  // Predicated region
  $region2: #{graph_unet_forward.8} parent=0 // pred_check
    _
  $region3: #{graph_unet_forward.8} parent=0 // pred_check_branch
    %12 = sbr.rel (0) target = $region5
  $region4: #{graph_unet_forward.8} parent=0 // pred_region
    _
  $region5: #{graph_unet_forward.8} parent=0 // pred_fallthru
    _
  // Predicated region
  $region6: #{graph_unet_forward.8} parent=0 // pred_check
    _
  $region7: #{graph_unet_forward.8} parent=0 // pred_check_branch
    %14 = sbr.rel (0) target = $region9
  $region8: #{graph_unet_forward.8} parent=0 // pred_region
    _
  $region9: #{graph_unet_forward.8} parent=0 // pred_fallthru
    _
  // Predicated region
  $region10: #{graph_unet_forward.8} parent=0 // pred_check
    _
  $region11: #{graph_unet_forward.8} parent=0 // pred_check_branch
    %16 = sbr.rel (0) target = $region13
  $region12: #{graph_unet_forward.8} parent=0 // pred_region
    _
  $region13: #{graph_unet_forward.8} parent=0 // pred_fallthru
    _
  // Predicated region
  $region14: #{graph_unet_forward.8} parent=0 // pred_check
    _
  $region15: #{graph_unet_forward.8} parent=0 // pred_check_branch
    %18 = sbr.rel (0) target = $region17
  $region16: #{graph_unet_forward.8} parent=0 // pred_region
    _
  $region17: #{graph_unet_forward.8} parent=0 // pred_fallthru
    _
  // Predicated region
  $region18: #{graph_unet_forward.8} parent=0 // pred_check
    _
  $region19: #{graph_unet_forward.8} parent=0 // pred_check_branch
    %20 = sbr.rel (0) target = $region21
  $region20: #{graph_unet_forward.8} parent=0 // pred_region
    _
  $region21: #{graph_unet_forward.8} parent=0 // pred_fallthru
    _
  // Predicated region
  $region22: #{graph_unet_forward.8} parent=0 // pred_check
    _
  $region23: #{graph_unet_forward.8} parent=0 // pred_check_branch
    %22 = sbr.rel (0) target = $region25
  $region24: #{graph_unet_forward.8} parent=0 // pred_region
    _
  $region25: #{graph_unet_forward.8} parent=0 // pred_fallthru
    _
  %v23 = vld [vmem:[%s0] sm:$0xff]
  %v24 = vld [vmem:[%s0 + $0x8] sm:$0xff]
  %v25 = vld [vmem:[%s0 + $0x10] sm:$0xff]
  %v26 = vld [vmem:[%s0 + $0x18] sm:$0xff]
  %v27 = vld [vmem:[%s0 + $0x20] sm:$0xff]
  %v28 = vld [vmem:[%s0 + $0x28] sm:$0xff]
  %v29 = vld [vmem:[%s0 + $0x30] sm:$0xff]
  %v30 = vld [vmem:[%s0 + $0x38] sm:$0xff]
  %v31 = vld [vmem:[%s0 + $0x40] sm:$0xff]
  %v32 = vld [vmem:[%s0 + $0x48] sm:$0xff]
  %v33 = vld [vmem:[%s0 + $0x50] sm:$0xff]
  %v34 = vld [vmem:[%s0 + $0x58] sm:$0xff]
  %v35 = vld [vmem:[%s0 + $0x60] sm:$0xff]
  %v36 = vld [vmem:[%s0 + $0x68] sm:$0xff]
  %v37 = vld [vmem:[%s0 + $0x70] sm:$0xff]
  %v38 = vld [vmem:[%s0 + $0x78] sm:$0xff]
  %39 = vxpose.xlu0.b32.start [1/16] %v23, 128
  %40 = vxpose.xlu0.b32.cont [2/16] %v24, 128
  %41 = vxpose.xlu0.b32.cont [3/16] %v25, 128
  %42 = vxpose.xlu0.b32.cont [4/16] %v26, 128
  %43 = vxpose.xlu0.b32.cont [5/16] %v27, 128
  %44 = vxpose.xlu0.b32.cont [6/16] %v28, 128
  %45 = vxpose.xlu0.b32.cont [7/16] %v29, 128
  %46 = vxpose.xlu0.b32.cont [8/16] %v30, 128
  %47 = vxpose.xlu0.b32.cont [9/16] %v31, 128
  %48 = vxpose.xlu0.b32.cont [10/16] %v32, 128
  %49 = vxpose.xlu0.b32.cont [11/16] %v33, 128
  %50 = vxpose.xlu0.b32.cont [12/16] %v34, 128
  %51 = vxpose.xlu0.b32.cont [13/16] %v35, 128
  %52 = vxpose.xlu0.b32.cont [14/16] %v36, 128
  %53 = vxpose.xlu0.b32.cont [15/16] %v37, 128
  %54 = vxpose.xlu0.b32.end [16/16] %v38, 128
  %v55 = vpop.trf.xlu0
  %v56 = vpop.trf.xlu0
  %v57 = vpop.trf.xlu0
  %v58 = vpop.trf.xlu0
  %v59 = vpop.trf.xlu0
  %v60 = vpop.trf.xlu0
  %v61 = vpop.trf.xlu0
  %v62 = vpop.trf.xlu0
  %v63 = vpop.trf.xlu0
  %v64 = vpop.trf.xlu0
  %v65 = vpop.trf.xlu0
  %v66 = vpop.trf.xlu0
  %v67 = vpop.trf.xlu0
  %v68 = vpop.trf.xlu0
  %v69 = vpop.trf.xlu0
  %v70 = vpop.trf.xlu0
  %v71 = vld [vmem:[%s1] sm:$0xff]
  %v72 = vld [vmem:[%s1 + $0x8] sm:$0xff]
  %v73 = vld [vmem:[%s1 + $0x10] sm:$0xff]
  %v74 = vld [vmem:[%s1 + $0x18] sm:$0xff]
  %v75 = vld [vmem:[%s1 + $0x20] sm:$0xff]
  %v76 = vld [vmem:[%s1 + $0x28] sm:$0xff]
  %v77 = vld [vmem:[%s1 + $0x30] sm:$0xff]
  %v78 = vld [vmem:[%s1 + $0x38] sm:$0xff]
  %v79 = vld [vmem:[%s1 + $0x40] sm:$0xff]
  %v80 = vld [vmem:[%s1 + $0x48] sm:$0xff]
  %v81 = vld [vmem:[%s1 + $0x50] sm:$0xff]
  %v82 = vld [vmem:[%s1 + $0x58] sm:$0xff]
  %v83 = vld [vmem:[%s1 + $0x60] sm:$0xff]
  %v84 = vld [vmem:[%s1 + $0x68] sm:$0xff]
  %v85 = vld [vmem:[%s1 + $0x70] sm:$0xff]
  %v86 = vld [vmem:[%s1 + $0x78] sm:$0xff]
  %87 = vmatprep.subr.mxu0 0.0
  %88 = vmatpush1.msra.mxu0 %v71
  %89 = vmatprep.subr.mxu0 0.0
  %90 = vmatpush1.msra.mxu0 %v72
  %91 = vmatprep.subr.mxu0 0.0
  %92 = vmatpush1.msra.mxu0 %v73
  %93 = vmatprep.subr.mxu0 0.0
  %94 = vmatpush1.msra.mxu0 %v74
  %95 = vmatprep.subr.mxu0 0.0
  %96 = vmatpush1.msra.mxu0 %v75
  %97 = vmatprep.subr.mxu0 0.0
  %98 = vmatpush1.msra.mxu0 %v76
  %99 = vmatprep.subr.mxu0 0.0
  %100 = vmatpush1.msra.mxu0 %v77
  %101 = vmatprep.subr.mxu0 0.0
  %102 = vmatpush1.msra.mxu0 %v78
  %103 = vmatprep.subr.mxu0 0.0
  %104 = vmatpush1.msra.mxu0 %v79
  %105 = vmatprep.subr.mxu0 0.0
  %106 = vmatpush1.msra.mxu0 %v80
  %107 = vmatprep.subr.mxu0 0.0
  %108 = vmatpush1.msra.mxu0 %v81
  %109 = vmatprep.subr.mxu0 0.0
  %110 = vmatpush1.msra.mxu0 %v82
  %111 = vmatprep.subr.mxu0 0.0
  %112 = vmatpush1.msra.mxu0 %v83
  %113 = vmatprep.subr.mxu0 0.0
  %114 = vmatpush1.msra.mxu0 %v84
  %115 = vmatprep.subr.mxu0 0.0
  %116 = vmatpush1.msra.mxu0 %v85
  %117 = vmatprep.subr.mxu0 0.0
  %118 = vmatpush1.msra.mxu0 %v86
  %119 = vmatprep.subr.mxu0 0.0
  %120 = vmatpush1.msra.mxu0 0.0
  %121 = vmatprep.subr.mxu0 0.0
  %122 = vmatpush1.msra.mxu0 0.0
  %123 = vmatprep.subr.mxu0 0.0
  %124 = vmatpush1.msra.mxu0 0.0
  %125 = vmatprep.subr.mxu0 0.0
  %126 = vmatpush1.msra.mxu0 0.0
  %127 = vmatprep.subr.mxu0 0.0
  %128 = vmatpush1.msra.mxu0 0.0
  %129 = vmatprep.subr.mxu0 0.0
  %130 = vmatpush1.msra.mxu0 0.0
  %131 = vmatprep.subr.mxu0 0.0
  %132 = vmatpush1.msra.mxu0 0.0
  %133 = vmatprep.subr.mxu0 0.0
  %134 = vmatpush1.msra.mxu0 0.0
  %135 = vmatprep.subr.mxu0 0.0
  %136 = vmatpush1.msra.mxu0 0.0
  %137 = vmatprep.subr.mxu0 0.0
  %138 = vmatpush1.msra.mxu0 0.0
  %139 = vmatprep.subr.mxu0 0.0
  %140 = vmatpush1.msra.mxu0 0.0
  %141 = vmatprep.subr.mxu0 0.0
  %142 = vmatpush1.msra.mxu0 0.0
  %143 = vmatprep.subr.mxu0 0.0
  %144 = vmatpush1.msra.mxu0 0.0
  %145 = vmatprep.subr.mxu0 0.0
  %146 = vmatpush1.msra.mxu0 0.0
  %147 = vmatprep.subr.mxu0 0.0
  %148 = vmatpush1.msra.mxu0 0.0
  %149 = vmatprep.subr.mxu0 0.0
  %150 = vmatpush1.msra.mxu0 0.0
  %151 = vmatprep.mubr.f32.mxu0 0.0
  %152 = vmatmul.mubr.f32.gmra.mrb[0].mxu0 %v55
  %v153 = vpop.f32.mrb[0].mxu0
  %v154 = vadd.f32 0.0, %v153
  %v155 = vpop.f32.mrb[0].mxu0
  %156 = vmatprep.mubr.f32.mxu0 0.0
  %157 = vmatmul.mubr.f32.gmra.mrb[0].mxu0 %v56
  %v158 = vpop.f32.mrb[0].mxu0
  %v159 = vadd.f32 0.0, %v158
  %v160 = vpop.f32.mrb[0].mxu0
  %161 = vmatprep.mubr.f32.mxu0 0.0
  %162 = vmatmul.mubr.f32.gmra.mrb[0].mxu0 %v57
  %v163 = vpop.f32.mrb[0].mxu0
  %v164 = vadd.f32 0.0, %v163
  %v165 = vpop.f32.mrb[0].mxu0
  %166 = vmatprep.mubr.f32.mxu0 0.0
  %167 = vmatmul.mubr.f32.gmra.mrb[0].mxu0 %v58
  %v168 = vpop.f32.mrb[0].mxu0
  %v169 = vadd.f32 0.0, %v168
  %v170 = vpop.f32.mrb[0].mxu0
  %171 = vmatprep.mubr.f32.mxu0 0.0
  %172 = vmatmul.mubr.f32.gmra.mrb[0].mxu0 %v59
  %v173 = vpop.f32.mrb[0].mxu0
  %v174 = vadd.f32 0.0, %v173
  %v175 = vpop.f32.mrb[0].mxu0
  %176 = vmatprep.mubr.f32.mxu0 0.0
  %177 = vmatmul.mubr.f32.gmra.mrb[0].mxu0 %v60
  %v178 = vpop.f32.mrb[0].mxu0
  %v179 = vadd.f32 0.0, %v178
  %v180 = vpop.f32.mrb[0].mxu0
  %181 = vmatprep.mubr.f32.mxu0 0.0
  %182 = vmatmul.mubr.f32.gmra.mrb[0].mxu0 %v61
  %v183 = vpop.f32.mrb[0].mxu0
  %v184 = vadd.f32 0.0, %v183
  %v185 = vpop.f32.mrb[0].mxu0
  %186 = vmatprep.mubr.f32.mxu0 0.0
  %187 = vmatmul.mubr.f32.gmra.mrb[0].mxu0 %v62
  %v188 = vpop.f32.mrb[0].mxu0
  %v189 = vadd.f32 0.0, %v188
  %v190 = vpop.f32.mrb[0].mxu0
  %191 = vmatprep.mubr.f32.mxu0 0.0
  %192 = vmatmul.mubr.f32.gmra.mrb[0].mxu0 %v63
  %v193 = vpop.f32.mrb[0].mxu0
  %v194 = vadd.f32 0.0, %v193
  %v195 = vpop.f32.mrb[0].mxu0
  %196 = vmatprep.mubr.f32.mxu0 0.0
  %197 = vmatmul.mubr.f32.gmra.mrb[0].mxu0 %v64
  %v198 = vpop.f32.mrb[0].mxu0
  %v199 = vadd.f32 0.0, %v198
  %v200 = vpop.f32.mrb[0].mxu0
  %201 = vmatprep.mubr.f32.mxu0 0.0
  %202 = vmatmul.mubr.f32.gmra.mrb[0].mxu0 %v65
  %v203 = vpop.f32.mrb[0].mxu0
  %v204 = vadd.f32 0.0, %v203
  %v205 = vpop.f32.mrb[0].mxu0
  %206 = vmatprep.mubr.f32.mxu0 0.0
  %207 = vmatmul.mubr.f32.gmra.mrb[0].mxu0 %v66
  %v208 = vpop.f32.mrb[0].mxu0
  %v209 = vadd.f32 0.0, %v208
  %v210 = vpop.f32.mrb[0].mxu0
  %211 = vmatprep.mubr.f32.mxu0 0.0
  %212 = vmatmul.mubr.f32.gmra.mrb[0].mxu0 %v67
  %v213 = vpop.f32.mrb[0].mxu0
  %v214 = vadd.f32 0.0, %v213
  %v215 = vpop.f32.mrb[0].mxu0
  %216 = vmatprep.mubr.f32.mxu0 0.0
  %217 = vmatmul.mubr.f32.gmra.mrb[0].mxu0 %v68
  %v218 = vpop.f32.mrb[0].mxu0
  %v219 = vadd.f32 0.0, %v218
  %v220 = vpop.f32.mrb[0].mxu0
  %221 = vmatprep.mubr.f32.mxu0 0.0
  %222 = vmatmul.mubr.f32.gmra.mrb[0].mxu0 %v69
  %v223 = vpop.f32.mrb[0].mxu0
  %v224 = vadd.f32 0.0, %v223
  %v225 = vpop.f32.mrb[0].mxu0
  %226 = vmatprep.mubr.f32.mxu0 0.0
  %227 = vmatmul.mubr.f32.gmra.mrb[0].mxu0 %v70
  %v228 = vpop.f32.mrb[0].mxu0
  %v229 = vadd.f32 0.0, %v228
  %v230 = vpop.f32.mrb[0].mxu0
  %231 = vdwg.mxu0
  %v232 = vld [vmem:[%s2] sm:$0xff]
  %v233 = vld [vmem:[%s2 + $0x8] sm:$0xff]
  %v234 = vld [vmem:[%s2 + $0x10] sm:$0xff]
  %v235 = vld [vmem:[%s2 + $0x18] sm:$0xff]
  %v236 = vld [vmem:[%s2 + $0x20] sm:$0xff]
  %v237 = vld [vmem:[%s2 + $0x28] sm:$0xff]
  %v238 = vld [vmem:[%s2 + $0x30] sm:$0xff]
  %v239 = vld [vmem:[%s2 + $0x38] sm:$0xff]
  %v240 = vld [vmem:[%s2 + $0x40] sm:$0xff]
  %v241 = vld [vmem:[%s2 + $0x48] sm:$0xff]
  %v242 = vld [vmem:[%s2 + $0x50] sm:$0xff]
  %v243 = vld [vmem:[%s2 + $0x58] sm:$0xff]
  %v244 = vld [vmem:[%s2 + $0x60] sm:$0xff]
  %v245 = vld [vmem:[%s2 + $0x68] sm:$0xff]
  %v246 = vld [vmem:[%s2 + $0x70] sm:$0xff]
  %v247 = vld [vmem:[%s2 + $0x78] sm:$0xff]
  %v248 = vld [vmem:[%s3] sm:$0xff]
  %v249 = vld [vmem:[%s3 + $0x8] sm:$0xff]
  %v250 = vld [vmem:[%s3 + $0x10] sm:$0xff]
  %v251 = vld [vmem:[%s3 + $0x18] sm:$0xff]
  %v252 = vld [vmem:[%s3 + $0x20] sm:$0xff]
  %v253 = vld [vmem:[%s3 + $0x28] sm:$0xff]
  %v254 = vld [vmem:[%s3 + $0x30] sm:$0xff]
  %v255 = vld [vmem:[%s3 + $0x38] sm:$0xff]
  %v256 = vld [vmem:[%s3 + $0x40] sm:$0xff]
  %v257 = vld [vmem:[%s3 + $0x48] sm:$0xff]
  %v258 = vld [vmem:[%s3 + $0x50] sm:$0xff]
  %v259 = vld [vmem:[%s3 + $0x58] sm:$0xff]
  %v260 = vld [vmem:[%s3 + $0x60] sm:$0xff]
  %v261 = vld [vmem:[%s3 + $0x68] sm:$0xff]
  %v262 = vld [vmem:[%s3 + $0x70] sm:$0xff]
  %v263 = vld [vmem:[%s3 + $0x78] sm:$0xff]
  %v264 = vld [vmem:[%s4] sm:$0x1]
  %265 = vmatprep.subr.mxu0 0.0
  %266 = vmatpush1.msra.mxu0 %v232
  %267 = vmatprep.subr.mxu0 0.0
  %268 = vmatpush1.msra.mxu0 %v233
  %269 = vmatprep.subr.mxu0 0.0
  %270 = vmatpush1.msra.mxu0 %v234
  %271 = vmatprep.subr.mxu0 0.0
  %272 = vmatpush1.msra.mxu0 %v235
  %273 = vmatprep.subr.mxu0 0.0
  %274 = vmatpush1.msra.mxu0 %v236
  %275 = vmatprep.subr.mxu0 0.0
  %276 = vmatpush1.msra.mxu0 %v237
  %277 = vmatprep.subr.mxu0 0.0
  %278 = vmatpush1.msra.mxu0 %v238
  %279 = vmatprep.subr.mxu0 0.0
  %280 = vmatpush1.msra.mxu0 %v239
  %281 = vmatprep.subr.mxu0 0.0
  %282 = vmatpush1.msra.mxu0 %v240
  %283 = vmatprep.subr.mxu0 0.0
  %284 = vmatpush1.msra.mxu0 %v241
  %285 = vmatprep.subr.mxu0 0.0
  %286 = vmatpush1.msra.mxu0 %v242
  %287 = vmatprep.subr.mxu0 0.0
  %288 = vmatpush1.msra.mxu0 %v243
  %289 = vmatprep.subr.mxu0 0.0
  %290 = vmatpush1.msra.mxu0 %v244
  %291 = vmatprep.subr.mxu0 0.0
  %292 = vmatpush1.msra.mxu0 %v245
  %293 = vmatprep.subr.mxu0 0.0
  %294 = vmatpush1.msra.mxu0 %v246
  %295 = vmatprep.subr.mxu0 0.0
  %296 = vmatpush1.msra.mxu0 %v247
  %297 = vmatprep.subr.mxu0 0.0
  %298 = vmatpush1.msra.mxu0 0.0
  %299 = vmatprep.subr.mxu0 0.0
  %300 = vmatpush1.msra.mxu0 0.0
  %301 = vmatprep.subr.mxu0 0.0
  %302 = vmatpush1.msra.mxu0 0.0
  %303 = vmatprep.subr.mxu0 0.0
  %304 = vmatpush1.msra.mxu0 0.0
  %305 = vmatprep.subr.mxu0 0.0
  %306 = vmatpush1.msra.mxu0 0.0
  %307 = vmatprep.subr.mxu0 0.0
  %308 = vmatpush1.msra.mxu0 0.0
  %309 = vmatprep.subr.mxu0 0.0
  %310 = vmatpush1.msra.mxu0 0.0
  %311 = vmatprep.subr.mxu0 0.0
  %312 = vmatpush1.msra.mxu0 0.0
  %313 = vmatprep.subr.mxu0 0.0
  %314 = vmatpush1.msra.mxu0 0.0
  %315 = vmatprep.subr.mxu0 0.0
  %316 = vmatpush1.msra.mxu0 0.0
  %317 = vmatprep.subr.mxu0 0.0
  %318 = vmatpush1.msra.mxu0 0.0
  %319 = vmatprep.subr.mxu0 0.0
  %320 = vmatpush1.msra.mxu0 0.0
  %321 = vmatprep.subr.mxu0 0.0
  %322 = vmatpush1.msra.mxu0 0.0
  %323 = vmatprep.subr.mxu0 0.0
  %324 = vmatpush1.msra.mxu0 0.0
  %325 = vmatprep.subr.mxu0 0.0
  %326 = vmatpush1.msra.mxu0 0.0
  %327 = vmatprep.subr.mxu0 0.0
  %328 = vmatpush1.msra.mxu0 0.0
  %329 = vmatprep.mubr.f32.mxu0 0.0
  %330 = vmatmul.mubr.f32.gmra.mrb[0].mxu0 %v154
  %v331 = vpop.f32.mrb[0].mxu0
  %v332 = vadd.f32 0.0, %v331
  %v333 = vpop.f32.mrb[0].mxu0
  %334 = vmatprep.mubr.f32.mxu0 0.0
  %335 = vmatmul.mubr.f32.gmra.mrb[0].mxu0 %v159
  %v336 = vpop.f32.mrb[0].mxu0
  %v337 = vadd.f32 0.0, %v336
  %v338 = vpop.f32.mrb[0].mxu0
  %339 = vmatprep.mubr.f32.mxu0 0.0
  %340 = vmatmul.mubr.f32.gmra.mrb[0].mxu0 %v164
  %v341 = vpop.f32.mrb[0].mxu0
  %v342 = vadd.f32 0.0, %v341
  %v343 = vpop.f32.mrb[0].mxu0
  %344 = vmatprep.mubr.f32.mxu0 0.0
  %345 = vmatmul.mubr.f32.gmra.mrb[0].mxu0 %v169
  %v346 = vpop.f32.mrb[0].mxu0
  %v347 = vadd.f32 0.0, %v346
  %v348 = vpop.f32.mrb[0].mxu0
  %349 = vmatprep.mubr.f32.mxu0 0.0
  %350 = vmatmul.mubr.f32.gmra.mrb[0].mxu0 %v174
  %v351 = vpop.f32.mrb[0].mxu0
  %v352 = vadd.f32 0.0, %v351
  %v353 = vpop.f32.mrb[0].mxu0
  %354 = vmatprep.mubr.f32.mxu0 0.0
  %355 = vmatmul.mubr.f32.gmra.mrb[0].mxu0 %v179
  %v356 = vpop.f32.mrb[0].mxu0
  %v357 = vadd.f32 0.0, %v356
  %v358 = vpop.f32.mrb[0].mxu0
  %359 = vmatprep.mubr.f32.mxu0 0.0
  %360 = vmatmul.mubr.f32.gmra.mrb[0].mxu0 %v184
  %v361 = vpop.f32.mrb[0].mxu0
  %v362 = vadd.f32 0.0, %v361
  %v363 = vpop.f32.mrb[0].mxu0
  %364 = vmatprep.mubr.f32.mxu0 0.0
  %365 = vmatmul.mubr.f32.gmra.mrb[0].mxu0 %v189
  %v366 = vpop.f32.mrb[0].mxu0
  %v367 = vadd.f32 0.0, %v366
  %v368 = vpop.f32.mrb[0].mxu0
  %369 = vmatprep.mubr.f32.mxu0 0.0
  %370 = vmatmul.mubr.f32.gmra.mrb[0].mxu0 %v194
  %v371 = vpop.f32.mrb[0].mxu0
  %v372 = vadd.f32 0.0, %v371
  %v373 = vpop.f32.mrb[0].mxu0
  %374 = vmatprep.mubr.f32.mxu0 0.0
  %375 = vmatmul.mubr.f32.gmra.mrb[0].mxu0 %v199
  %v376 = vpop.f32.mrb[0].mxu0
  %v377 = vadd.f32 0.0, %v376
  %v378 = vpop.f32.mrb[0].mxu0
  %379 = vmatprep.mubr.f32.mxu0 0.0
  %380 = vmatmul.mubr.f32.gmra.mrb[0].mxu0 %v204
  %v381 = vpop.f32.mrb[0].mxu0
  %v382 = vadd.f32 0.0, %v381
  %v383 = vpop.f32.mrb[0].mxu0
  %384 = vmatprep.mubr.f32.mxu0 0.0
  %385 = vmatmul.mubr.f32.gmra.mrb[0].mxu0 %v209
  %v386 = vpop.f32.mrb[0].mxu0
  %v387 = vadd.f32 0.0, %v386
  %v388 = vpop.f32.mrb[0].mxu0
  %389 = vmatprep.mubr.f32.mxu0 0.0
  %390 = vmatmul.mubr.f32.gmra.mrb[0].mxu0 %v214
  %v391 = vpop.f32.mrb[0].mxu0
  %v392 = vadd.f32 0.0, %v391
  %v393 = vpop.f32.mrb[0].mxu0
  %394 = vmatprep.mubr.f32.mxu0 0.0
  %395 = vmatmul.mubr.f32.gmra.mrb[0].mxu0 %v219
  %v396 = vpop.f32.mrb[0].mxu0
  %v397 = vadd.f32 0.0, %v396
  %v398 = vpop.f32.mrb[0].mxu0
  %399 = vmatprep.mubr.f32.mxu0 0.0
  %400 = vmatmul.mubr.f32.gmra.mrb[0].mxu0 %v224
  %v401 = vpop.f32.mrb[0].mxu0
  %v402 = vadd.f32 0.0, %v401
  %v403 = vpop.f32.mrb[0].mxu0
  %404 = vmatprep.mubr.f32.mxu0 0.0
  %405 = vmatmul.mubr.f32.gmra.mrb[0].mxu0 %v229
  %v406 = vpop.f32.mrb[0].mxu0
  %v407 = vadd.f32 0.0, %v406
  %v408 = vpop.f32.mrb[0].mxu0
  %409 = vdwg.mxu0
  %v411 = vlaneseq
  %v412 = vshrl.u32 %v411, 7
  %v413 = vsub.s32 0, %v412
  %v414 = vrot.slane %v264, %v413
  %416 = vmatprep.subr.mxu0 0.0
  %417 = vmatpush1.msra.mxu0 %v248
  %418 = vmatprep.subr.mxu0 0.0
  %419 = vmatpush1.msra.mxu0 %v249
  %420 = vmatprep.subr.mxu0 0.0
  %421 = vmatpush1.msra.mxu0 %v250
  %422 = vmatprep.subr.mxu0 0.0
  %423 = vmatpush1.msra.mxu0 %v251
  %424 = vmatprep.subr.mxu0 0.0
  %425 = vmatpush1.msra.mxu0 %v252
  %426 = vmatprep.subr.mxu0 0.0
  %427 = vmatpush1.msra.mxu0 %v253
  %428 = vmatprep.subr.mxu0 0.0
  %429 = vmatpush1.msra.mxu0 %v254
  %430 = vmatprep.subr.mxu0 0.0
  %431 = vmatpush1.msra.mxu0 %v255
  %432 = vmatprep.subr.mxu0 0.0
  %433 = vmatpush1.msra.mxu0 %v256
  %434 = vmatprep.subr.mxu0 0.0
  %435 = vmatpush1.msra.mxu0 %v257
  %436 = vmatprep.subr.mxu0 0.0
  %437 = vmatpush1.msra.mxu0 %v258
  %438 = vmatprep.subr.mxu0 0.0
  %439 = vmatpush1.msra.mxu0 %v259
  %440 = vmatprep.subr.mxu0 0.0
  %441 = vmatpush1.msra.mxu0 %v260
  %442 = vmatprep.subr.mxu0 0.0
  %443 = vmatpush1.msra.mxu0 %v261
  %444 = vmatprep.subr.mxu0 0.0
  %445 = vmatpush1.msra.mxu0 %v262
  %446 = vmatprep.subr.mxu0 0.0
  %447 = vmatpush1.msra.mxu0 %v263
  %448 = vmatprep.subr.mxu0 0.0
  %449 = vmatpush1.msra.mxu0 0.0
  %450 = vmatprep.subr.mxu0 0.0
  %451 = vmatpush1.msra.mxu0 0.0
  %452 = vmatprep.subr.mxu0 0.0
  %453 = vmatpush1.msra.mxu0 0.0
  %454 = vmatprep.subr.mxu0 0.0
  %455 = vmatpush1.msra.mxu0 0.0
  %456 = vmatprep.subr.mxu0 0.0
  %457 = vmatpush1.msra.mxu0 0.0
  %458 = vmatprep.subr.mxu0 0.0
  %459 = vmatpush1.msra.mxu0 0.0
  %460 = vmatprep.subr.mxu0 0.0
  %461 = vmatpush1.msra.mxu0 0.0
  %462 = vmatprep.subr.mxu0 0.0
  %463 = vmatpush1.msra.mxu0 0.0
  %464 = vmatprep.subr.mxu0 0.0
  %465 = vmatpush1.msra.mxu0 0.0
  %466 = vmatprep.subr.mxu0 0.0
  %467 = vmatpush1.msra.mxu0 0.0
  %468 = vmatprep.subr.mxu0 0.0
  %469 = vmatpush1.msra.mxu0 0.0
  %470 = vmatprep.subr.mxu0 0.0
  %471 = vmatpush1.msra.mxu0 0.0
  %472 = vmatprep.subr.mxu0 0.0
  %473 = vmatpush1.msra.mxu0 0.0
  %474 = vmatprep.subr.mxu0 0.0
  %475 = vmatpush1.msra.mxu0 0.0
  %476 = vmatprep.subr.mxu0 0.0
  %477 = vmatpush1.msra.mxu0 0.0
  %478 = vmatprep.subr.mxu0 0.0
  %479 = vmatpush1.msra.mxu0 0.0
  %480 = vmatprep.mubr.f32.mxu0 0.0
  %481 = vmatmul.mubr.f32.gmra.mrb[0].mxu0 %v332
  %v482 = vpop.f32.mrb[0].mxu0
  %v483 = vadd.f32 %v414, %v482
  %v484 = vpop.f32.mrb[0].mxu0
  %485 = vmatprep.mubr.f32.mxu0 0.0
  %486 = vmatmul.mubr.f32.gmra.mrb[0].mxu0 %v337
  %v487 = vpop.f32.mrb[0].mxu0
  %v488 = vadd.f32 %v414, %v487
  %v489 = vpop.f32.mrb[0].mxu0
  %490 = vmatprep.mubr.f32.mxu0 0.0
  %491 = vmatmul.mubr.f32.gmra.mrb[0].mxu0 %v342
  %v492 = vpop.f32.mrb[0].mxu0
  %v493 = vadd.f32 %v414, %v492
  %v494 = vpop.f32.mrb[0].mxu0
  %495 = vmatprep.mubr.f32.mxu0 0.0
  %496 = vmatmul.mubr.f32.gmra.mrb[0].mxu0 %v347
  %v497 = vpop.f32.mrb[0].mxu0
  %v498 = vadd.f32 %v414, %v497
  %v499 = vpop.f32.mrb[0].mxu0
  %500 = vmatprep.mubr.f32.mxu0 0.0
  %501 = vmatmul.mubr.f32.gmra.mrb[0].mxu0 %v352
  %v502 = vpop.f32.mrb[0].mxu0
  %v503 = vadd.f32 %v414, %v502
  %v504 = vpop.f32.mrb[0].mxu0
  %505 = vmatprep.mubr.f32.mxu0 0.0
  %506 = vmatmul.mubr.f32.gmra.mrb[0].mxu0 %v357
  %v507 = vpop.f32.mrb[0].mxu0
  %v508 = vadd.f32 %v414, %v507
  %v509 = vpop.f32.mrb[0].mxu0
  %510 = vmatprep.mubr.f32.mxu0 0.0
  %511 = vmatmul.mubr.f32.gmra.mrb[0].mxu0 %v362
  %v512 = vpop.f32.mrb[0].mxu0
  %v513 = vadd.f32 %v414, %v512
  %v514 = vpop.f32.mrb[0].mxu0
  %515 = vmatprep.mubr.f32.mxu0 0.0
  %516 = vmatmul.mubr.f32.gmra.mrb[0].mxu0 %v367
  %v517 = vpop.f32.mrb[0].mxu0
  %v518 = vadd.f32 %v414, %v517
  %v519 = vpop.f32.mrb[0].mxu0
  %520 = vmatprep.mubr.f32.mxu0 0.0
  %521 = vmatmul.mubr.f32.gmra.mrb[0].mxu0 %v372
  %v522 = vpop.f32.mrb[0].mxu0
  %v523 = vadd.f32 %v414, %v522
  %v524 = vpop.f32.mrb[0].mxu0
  %525 = vmatprep.mubr.f32.mxu0 0.0
  %526 = vmatmul.mubr.f32.gmra.mrb[0].mxu0 %v377
  %v527 = vpop.f32.mrb[0].mxu0
  %v528 = vadd.f32 %v414, %v527
  %v529 = vpop.f32.mrb[0].mxu0
  %530 = vmatprep.mubr.f32.mxu0 0.0
  %531 = vmatmul.mubr.f32.gmra.mrb[0].mxu0 %v382
  %v532 = vpop.f32.mrb[0].mxu0
  %v533 = vadd.f32 %v414, %v532
  %v534 = vpop.f32.mrb[0].mxu0
  %535 = vmatprep.mubr.f32.mxu0 0.0
  %536 = vmatmul.mubr.f32.gmra.mrb[0].mxu0 %v387
  %v537 = vpop.f32.mrb[0].mxu0
  %v538 = vadd.f32 %v414, %v537
  %v539 = vpop.f32.mrb[0].mxu0
  %540 = vmatprep.mubr.f32.mxu0 0.0
  %541 = vmatmul.mubr.f32.gmra.mrb[0].mxu0 %v392
  %v542 = vpop.f32.mrb[0].mxu0
  %v543 = vadd.f32 %v414, %v542
  %v544 = vpop.f32.mrb[0].mxu0
  %545 = vmatprep.mubr.f32.mxu0 0.0
  %546 = vmatmul.mubr.f32.gmra.mrb[0].mxu0 %v397
  %v547 = vpop.f32.mrb[0].mxu0
  %v548 = vadd.f32 %v414, %v547
  %v549 = vpop.f32.mrb[0].mxu0
  %550 = vmatprep.mubr.f32.mxu0 0.0
  %551 = vmatmul.mubr.f32.gmra.mrb[0].mxu0 %v402
  %v552 = vpop.f32.mrb[0].mxu0
  %v553 = vadd.f32 %v414, %v552
  %v554 = vpop.f32.mrb[0].mxu0
  %555 = vmatprep.mubr.f32.mxu0 0.0
  %556 = vmatmul.mubr.f32.gmra.mrb[0].mxu0 %v407
  %v557 = vpop.f32.mrb[0].mxu0
  %v558 = vadd.f32 %v414, %v557
  %v559 = vpop.f32.mrb[0].mxu0
  %560 = vdwg.mxu0
  %v561 = vmax.f32 %v483, 0.0
  %v562 = vmax.f32 %v488, 0.0
  %v563 = vmax.f32 %v493, 0.0
  %v564 = vmax.f32 %v498, 0.0
  %v565 = vmax.f32 %v503, 0.0
  %v566 = vmax.f32 %v508, 0.0
  %v567 = vmax.f32 %v513, 0.0
  %v568 = vmax.f32 %v518, 0.0
  %v569 = vmax.f32 %v523, 0.0
  %v570 = vmax.f32 %v528, 0.0
  %v571 = vmax.f32 %v533, 0.0
  %v572 = vmax.f32 %v538, 0.0
  %v573 = vmax.f32 %v543, 0.0
  %v574 = vmax.f32 %v548, 0.0
  %v575 = vmax.f32 %v553, 0.0
  %v576 = vmax.f32 %v558, 0.0
  %v577 = vld [vmem:[%s5] sm:$0xff]
  %v578 = vld [vmem:[%s5 + $0x8] sm:$0xff]
  %v579 = vld [vmem:[%s5 + $0x10] sm:$0xff]
  %v580 = vld [vmem:[%s5 + $0x18] sm:$0xff]
  %v581 = vld [vmem:[%s5 + $0x20] sm:$0xff]
  %v582 = vld [vmem:[%s5 + $0x28] sm:$0xff]
  %v583 = vld [vmem:[%s5 + $0x30] sm:$0xff]
  %v584 = vld [vmem:[%s5 + $0x38] sm:$0xff]
  %v585 = vld [vmem:[%s5 + $0x40] sm:$0xff]
  %v586 = vld [vmem:[%s5 + $0x48] sm:$0xff]
  %v587 = vld [vmem:[%s5 + $0x50] sm:$0xff]
  %v588 = vld [vmem:[%s5 + $0x58] sm:$0xff]
  %v589 = vld [vmem:[%s5 + $0x60] sm:$0xff]
  %v590 = vld [vmem:[%s5 + $0x68] sm:$0xff]
  %v591 = vld [vmem:[%s5 + $0x70] sm:$0xff]
  %v592 = vld [vmem:[%s5 + $0x78] sm:$0xff]
  %v593 = vadd.f32 %v561, %v577
  %v594 = vadd.f32 %v562, %v578
  %v595 = vadd.f32 %v563, %v579
  %v596 = vadd.f32 %v564, %v580
  %v597 = vadd.f32 %v565, %v581
  %v598 = vadd.f32 %v566, %v582
  %v599 = vadd.f32 %v567, %v583
  %v600 = vadd.f32 %v568, %v584
  %v601 = vadd.f32 %v569, %v585
  %v602 = vadd.f32 %v570, %v586
  %v603 = vadd.f32 %v571, %v587
  %v604 = vadd.f32 %v572, %v588
  %v605 = vadd.f32 %v573, %v589
  %v606 = vadd.f32 %v574, %v590
  %v607 = vadd.f32 %v575, %v591
  %v608 = vadd.f32 %v576, %v592
  %609 = vst [vmem:[%s6] sm:$0xff] %v593
  %610 = vst [vmem:[%s6 + $0x8] sm:$0xff] %v594
  %611 = vst [vmem:[%s6 + $0x10] sm:$0xff] %v595
  %612 = vst [vmem:[%s6 + $0x18] sm:$0xff] %v596
  %613 = vst [vmem:[%s6 + $0x20] sm:$0xff] %v597
  %614 = vst [vmem:[%s6 + $0x28] sm:$0xff] %v598
  %615 = vst [vmem:[%s6 + $0x30] sm:$0xff] %v599
  %616 = vst [vmem:[%s6 + $0x38] sm:$0xff] %v600
  %617 = vst [vmem:[%s6 + $0x40] sm:$0xff] %v601
  %618 = vst [vmem:[%s6 + $0x48] sm:$0xff] %v602
  %619 = vst [vmem:[%s6 + $0x50] sm:$0xff] %v603
  %620 = vst [vmem:[%s6 + $0x58] sm:$0xff] %v604
  %621 = vst [vmem:[%s6 + $0x60] sm:$0xff] %v605
  %622 = vst [vmem:[%s6 + $0x68] sm:$0xff] %v606
  %623 = vst [vmem:[%s6 + $0x70] sm:$0xff] %v607
  %624 = vst [vmem:[%s6 + $0x78] sm:$0xff] %v608
  // Predicated region
  $region26: #{graph_unet_forward.8} parent=0 // pred_check
    _
  $region27: #{graph_unet_forward.8} parent=0 // pred_check_branch
    %626 = sbr.rel (0) target = $region29
  $region28: #{graph_unet_forward.8} parent=0 // pred_region
    _
  $region29: #{graph_unet_forward.8} parent=0 // pred_fallthru
    _
  // Predicated region
  $region30: #{graph_unet_forward.8} parent=0 // pred_check
    _
  $region31: #{graph_unet_forward.8} parent=0 // pred_check_branch
    %628 = sbr.rel (0) target = $region33
  $region32: #{graph_unet_forward.8} parent=0 // pred_region
    _
  $region33: #{graph_unet_forward.8} parent=0 // pred_fallthru
    _

// kernel: graph_unet_forward.9
$region0: #{graph_unet_forward.9}
  #allocation0 [shape = 'u32[]', space=smem, size = 0x4, offset = 0x4, fixed_abs, tag = 'smem constant byte address 0x4 - core index']
  #allocation1 [shape = 'u32[144,128]{1,0:T(1,128)}', space=vmem, size = 0x12000, scoped, tag = 'internal scratch']
  %s0 = inlined_call_operand.vmem [shape: f32[128,128], index: 0, kind: input, shape index: {}]
  %s1 = inlined_call_operand.vmem [shape: f32[128,128], index: 1, kind: input, shape index: {}]
  %s2 = inlined_call_operand.vmem [shape: f32[128,128], index: 2, kind: input, shape index: {}]
  %s3 = inlined_call_operand.vmem [shape: f32[128,128], index: 3, kind: input, shape index: {}]
  %s4 = inlined_call_operand.vmem [shape: f32[1,128], index: 4, kind: input, shape index: {}]
  %s5 = inlined_call_operand.vmem [shape: f32[128,128], index: 5, kind: input, shape index: {}]
  %s6 = inlined_call_operand.vmem [shape: f32[128,128], index: 6, kind: input, shape index: {}]
  %s7 = inlined_call_operand.hbm [shape: f32[128,128], index: 7, kind: output, shape index: {0}]
  %s8 = inlined_call_operand.hbm [shape: f32[128,128], index: 8, kind: output, shape index: {1}]
  %9 = xla_tuple %s7, %s8
  %s10 = sld [smem:[#allocation0]]
  $region46: #{graph_unet_forward.9} parent=0
    _
  %s12 = ssub.s32 1, %s10
  %s13 = scalar_select 0, %s12, %s10
  $region1: #{graph_unet_forward.9} parent=0
    #allocation2 [shape = 'u8[65536]{0}', space=vmem, size = 0x10000, scoped, tag = 'output window, operand 0, single buffered']
    #allocation3 [shape = 's32[1]{0}', space=sflag, size = 0x4, scoped, tag = 'scoped memory for graph_unet_forward.9']
    #allocation4 [shape = 'u8[65536]{0}', space=vmem, size = 0x10000, scoped, tag = 'output window, operand 1, single buffered']
    #allocation5 [shape = 's32[1]{0}', space=sflag, size = 0x4, scoped, tag = 'scoped memory for graph_unet_forward.9']
    %14 = vsyncpa [#allocation3], 0
    %15 = vsyncpa [#allocation5], 0
    // Predicated region
    $region2: #{graph_unet_forward.9} parent=1 // pred_check
      _
    $region3: #{graph_unet_forward.9} parent=1 // pred_check_branch
      %17 = sbr.rel (0) target = $region5
    $region4: #{graph_unet_forward.9} parent=1 // pred_region
      _
    $region5: #{graph_unet_forward.9} parent=1 // pred_fallthru
      _
    // Predicated region
    $region6: #{graph_unet_forward.9} parent=1 // pred_check
      _
    $region7: #{graph_unet_forward.9} parent=1 // pred_check_branch
      %19 = sbr.rel (0) target = $region9
    $region8: #{graph_unet_forward.9} parent=1 // pred_region
      _
    $region9: #{graph_unet_forward.9} parent=1 // pred_fallthru
      _
    // Predicated region
    $region10: #{graph_unet_forward.9} parent=1 // pred_check
      _
    $region11: #{graph_unet_forward.9} parent=1 // pred_check_branch
      %21 = sbr.rel (0) target = $region13
    $region12: #{graph_unet_forward.9} parent=1 // pred_region
      _
    $region13: #{graph_unet_forward.9} parent=1 // pred_fallthru
      _
    // Predicated region
    $region14: #{graph_unet_forward.9} parent=1 // pred_check
      _
    $region15: #{graph_unet_forward.9} parent=1 // pred_check_branch
      %23 = sbr.rel (0) target = $region17
    $region16: #{graph_unet_forward.9} parent=1 // pred_region
      _
    $region17: #{graph_unet_forward.9} parent=1 // pred_fallthru
      _
    // Predicated region
    $region18: #{graph_unet_forward.9} parent=1 // pred_check
      _
    $region19: #{graph_unet_forward.9} parent=1 // pred_check_branch
      %25 = sbr.rel (0) target = $region21
    $region20: #{graph_unet_forward.9} parent=1 // pred_region
      _
    $region21: #{graph_unet_forward.9} parent=1 // pred_fallthru
      _
    // Predicated region
    $region22: #{graph_unet_forward.9} parent=1 // pred_check
      _
    $region23: #{graph_unet_forward.9} parent=1 // pred_check_branch
      %27 = sbr.rel (0) target = $region25
    $region24: #{graph_unet_forward.9} parent=1 // pred_region
      _
    $region25: #{graph_unet_forward.9} parent=1 // pred_fallthru
      _
    // Predicated region
    $region26: #{graph_unet_forward.9} parent=1 // pred_check
      _
    $region27: #{graph_unet_forward.9} parent=1 // pred_check_branch
      %29 = sbr.rel (0) target = $region29
    $region28: #{graph_unet_forward.9} parent=1 // pred_region
      _
    $region29: #{graph_unet_forward.9} parent=1 // pred_fallthru
      _
    %v30 = vld [vmem:[%s0] sm:$0xff]
    %v31 = vld [vmem:[%s0 + $0x8] sm:$0xff]
    %v32 = vld [vmem:[%s0 + $0x10] sm:$0xff]
    %v33 = vld [vmem:[%s0 + $0x18] sm:$0xff]
    %v34 = vld [vmem:[%s0 + $0x20] sm:$0xff]
    %v35 = vld [vmem:[%s0 + $0x28] sm:$0xff]
    %v36 = vld [vmem:[%s0 + $0x30] sm:$0xff]
    %v37 = vld [vmem:[%s0 + $0x38] sm:$0xff]
    %v38 = vld [vmem:[%s0 + $0x40] sm:$0xff]
    %v39 = vld [vmem:[%s0 + $0x48] sm:$0xff]
    %v40 = vld [vmem:[%s0 + $0x50] sm:$0xff]
    %v41 = vld [vmem:[%s0 + $0x58] sm:$0xff]
    %v42 = vld [vmem:[%s0 + $0x60] sm:$0xff]
    %v43 = vld [vmem:[%s0 + $0x68] sm:$0xff]
    %v44 = vld [vmem:[%s0 + $0x70] sm:$0xff]
    %v45 = vld [vmem:[%s0 + $0x78] sm:$0xff]
    %46 = vxpose.xlu0.b32.start [1/16] %v30, 128
    %47 = vxpose.xlu0.b32.cont [2/16] %v31, 128
    %48 = vxpose.xlu0.b32.cont [3/16] %v32, 128
    %49 = vxpose.xlu0.b32.cont [4/16] %v33, 128
    %50 = vxpose.xlu0.b32.cont [5/16] %v34, 128
    %51 = vxpose.xlu0.b32.cont [6/16] %v35, 128
    %52 = vxpose.xlu0.b32.cont [7/16] %v36, 128
    %53 = vxpose.xlu0.b32.cont [8/16] %v37, 128
    %54 = vxpose.xlu0.b32.cont [9/16] %v38, 128
    %55 = vxpose.xlu0.b32.cont [10/16] %v39, 128
    %56 = vxpose.xlu0.b32.cont [11/16] %v40, 128
    %57 = vxpose.xlu0.b32.cont [12/16] %v41, 128
    %58 = vxpose.xlu0.b32.cont [13/16] %v42, 128
    %59 = vxpose.xlu0.b32.cont [14/16] %v43, 128
    %60 = vxpose.xlu0.b32.cont [15/16] %v44, 128
    %61 = vxpose.xlu0.b32.end [16/16] %v45, 128
    %v62 = vpop.trf.xlu0
    %v63 = vpop.trf.xlu0
    %v64 = vpop.trf.xlu0
    %v65 = vpop.trf.xlu0
    %v66 = vpop.trf.xlu0
    %v67 = vpop.trf.xlu0
    %v68 = vpop.trf.xlu0
    %v69 = vpop.trf.xlu0
    %v70 = vpop.trf.xlu0
    %v71 = vpop.trf.xlu0
    %v72 = vpop.trf.xlu0
    %v73 = vpop.trf.xlu0
    %v74 = vpop.trf.xlu0
    %v75 = vpop.trf.xlu0
    %v76 = vpop.trf.xlu0
    %v77 = vpop.trf.xlu0
    %v78 = vld [vmem:[%s1] sm:$0xff]
    %v79 = vld [vmem:[%s1 + $0x8] sm:$0xff]
    %v80 = vld [vmem:[%s1 + $0x10] sm:$0xff]
    %v81 = vld [vmem:[%s1 + $0x18] sm:$0xff]
    %v82 = vld [vmem:[%s1 + $0x20] sm:$0xff]
    %v83 = vld [vmem:[%s1 + $0x28] sm:$0xff]
    %v84 = vld [vmem:[%s1 + $0x30] sm:$0xff]
    %v85 = vld [vmem:[%s1 + $0x38] sm:$0xff]
    %v86 = vld [vmem:[%s1 + $0x40] sm:$0xff]
    %v87 = vld [vmem:[%s1 + $0x48] sm:$0xff]
    %v88 = vld [vmem:[%s1 + $0x50] sm:$0xff]
    %v89 = vld [vmem:[%s1 + $0x58] sm:$0xff]
    %v90 = vld [vmem:[%s1 + $0x60] sm:$0xff]
    %v91 = vld [vmem:[%s1 + $0x68] sm:$0xff]
    %v92 = vld [vmem:[%s1 + $0x70] sm:$0xff]
    %v93 = vld [vmem:[%s1 + $0x78] sm:$0xff]
    %94 = vmatprep.subr.mxu0 0.0
    %95 = vmatpush1.msra.mxu0 %v78
    %96 = vmatprep.subr.mxu0 0.0
    %97 = vmatpush1.msra.mxu0 %v79
    %98 = vmatprep.subr.mxu0 0.0
    %99 = vmatpush1.msra.mxu0 %v80
    %100 = vmatprep.subr.mxu0 0.0
    %101 = vmatpush1.msra.mxu0 %v81
    %102 = vmatprep.subr.mxu0 0.0
    %103 = vmatpush1.msra.mxu0 %v82
    %104 = vmatprep.subr.mxu0 0.0
    %105 = vmatpush1.msra.mxu0 %v83
    %106 = vmatprep.subr.mxu0 0.0
    %107 = vmatpush1.msra.mxu0 %v84
    %108 = vmatprep.subr.mxu0 0.0
    %109 = vmatpush1.msra.mxu0 %v85
    %110 = vmatprep.subr.mxu0 0.0
    %111 = vmatpush1.msra.mxu0 %v86
    %112 = vmatprep.subr.mxu0 0.0
    %113 = vmatpush1.msra.mxu0 %v87
    %114 = vmatprep.subr.mxu0 0.0
    %115 = vmatpush1.msra.mxu0 %v88
    %116 = vmatprep.subr.mxu0 0.0
    %117 = vmatpush1.msra.mxu0 %v89
    %118 = vmatprep.subr.mxu0 0.0
    %119 = vmatpush1.msra.mxu0 %v90
    %120 = vmatprep.subr.mxu0 0.0
    %121 = vmatpush1.msra.mxu0 %v91
    %122 = vmatprep.subr.mxu0 0.0
    %123 = vmatpush1.msra.mxu0 %v92
    %124 = vmatprep.subr.mxu0 0.0
    %125 = vmatpush1.msra.mxu0 %v93
    %126 = vmatprep.subr.mxu0 0.0
    %127 = vmatpush1.msra.mxu0 0.0
    %128 = vmatprep.subr.mxu0 0.0
    %129 = vmatpush1.msra.mxu0 0.0
    %130 = vmatprep.subr.mxu0 0.0
    %131 = vmatpush1.msra.mxu0 0.0
    %132 = vmatprep.subr.mxu0 0.0
    %133 = vmatpush1.msra.mxu0 0.0
    %134 = vmatprep.subr.mxu0 0.0
    %135 = vmatpush1.msra.mxu0 0.0
    %136 = vmatprep.subr.mxu0 0.0
    %137 = vmatpush1.msra.mxu0 0.0
    %138 = vmatprep.subr.mxu0 0.0
    %139 = vmatpush1.msra.mxu0 0.0
    %140 = vmatprep.subr.mxu0 0.0
    %141 = vmatpush1.msra.mxu0 0.0
    %142 = vmatprep.subr.mxu0 0.0
    %143 = vmatpush1.msra.mxu0 0.0
    %144 = vmatprep.subr.mxu0 0.0
    %145 = vmatpush1.msra.mxu0 0.0
    %146 = vmatprep.subr.mxu0 0.0
    %147 = vmatpush1.msra.mxu0 0.0
    %148 = vmatprep.subr.mxu0 0.0
    %149 = vmatpush1.msra.mxu0 0.0
    %150 = vmatprep.subr.mxu0 0.0
    %151 = vmatpush1.msra.mxu0 0.0
    %152 = vmatprep.subr.mxu0 0.0
    %153 = vmatpush1.msra.mxu0 0.0
    %154 = vmatprep.subr.mxu0 0.0
    %155 = vmatpush1.msra.mxu0 0.0
    %156 = vmatprep.subr.mxu0 0.0
    %157 = vmatpush1.msra.mxu0 0.0
    %158 = vmatprep.mubr.f32.mxu0 0.0
    %159 = vmatmul.mubr.f32.gmra.mrb[0].mxu0 %v62
    %v160 = vpop.f32.mrb[0].mxu0
    %v161 = vadd.f32 0.0, %v160
    %v162 = vpop.f32.mrb[0].mxu0
    %163 = vmatprep.mubr.f32.mxu0 0.0
    %164 = vmatmul.mubr.f32.gmra.mrb[0].mxu0 %v63
    %v165 = vpop.f32.mrb[0].mxu0
    %v166 = vadd.f32 0.0, %v165
    %v167 = vpop.f32.mrb[0].mxu0
    %168 = vmatprep.mubr.f32.mxu0 0.0
    %169 = vmatmul.mubr.f32.gmra.mrb[0].mxu0 %v64
    %v170 = vpop.f32.mrb[0].mxu0
    %v171 = vadd.f32 0.0, %v170
    %v172 = vpop.f32.mrb[0].mxu0
    %173 = vmatprep.mubr.f32.mxu0 0.0
    %174 = vmatmul.mubr.f32.gmra.mrb[0].mxu0 %v65
    %v175 = vpop.f32.mrb[0].mxu0
    %v176 = vadd.f32 0.0, %v175
    %v177 = vpop.f32.mrb[0].mxu0
    %178 = vmatprep.mubr.f32.mxu0 0.0
    %179 = vmatmul.mubr.f32.gmra.mrb[0].mxu0 %v66
    %v180 = vpop.f32.mrb[0].mxu0
    %v181 = vadd.f32 0.0, %v180
    %v182 = vpop.f32.mrb[0].mxu0
    %183 = vmatprep.mubr.f32.mxu0 0.0
    %184 = vmatmul.mubr.f32.gmra.mrb[0].mxu0 %v67
    %v185 = vpop.f32.mrb[0].mxu0
    %v186 = vadd.f32 0.0, %v185
    %v187 = vpop.f32.mrb[0].mxu0
    %188 = vmatprep.mubr.f32.mxu0 0.0
    %189 = vmatmul.mubr.f32.gmra.mrb[0].mxu0 %v68
    %v190 = vpop.f32.mrb[0].mxu0
    %v191 = vadd.f32 0.0, %v190
    %v192 = vpop.f32.mrb[0].mxu0
    %193 = vmatprep.mubr.f32.mxu0 0.0
    %194 = vmatmul.mubr.f32.gmra.mrb[0].mxu0 %v69
    %v195 = vpop.f32.mrb[0].mxu0
    %v196 = vadd.f32 0.0, %v195
    %v197 = vpop.f32.mrb[0].mxu0
    %198 = vmatprep.mubr.f32.mxu0 0.0
    %199 = vmatmul.mubr.f32.gmra.mrb[0].mxu0 %v70
    %v200 = vpop.f32.mrb[0].mxu0
    %v201 = vadd.f32 0.0, %v200
    %v202 = vpop.f32.mrb[0].mxu0
    %203 = vmatprep.mubr.f32.mxu0 0.0
    %204 = vmatmul.mubr.f32.gmra.mrb[0].mxu0 %v71
    %v205 = vpop.f32.mrb[0].mxu0
    %v206 = vadd.f32 0.0, %v205
    %v207 = vpop.f32.mrb[0].mxu0
    %208 = vmatprep.mubr.f32.mxu0 0.0
    %209 = vmatmul.mubr.f32.gmra.mrb[0].mxu0 %v72
    %v210 = vpop.f32.mrb[0].mxu0
    %v211 = vadd.f32 0.0, %v210
    %v212 = vpop.f32.mrb[0].mxu0
    %213 = vmatprep.mubr.f32.mxu0 0.0
    %214 = vmatmul.mubr.f32.gmra.mrb[0].mxu0 %v73
    %v215 = vpop.f32.mrb[0].mxu0
    %v216 = vadd.f32 0.0, %v215
    %v217 = vpop.f32.mrb[0].mxu0
    %218 = vmatprep.mubr.f32.mxu0 0.0
    %219 = vmatmul.mubr.f32.gmra.mrb[0].mxu0 %v74
    %v220 = vpop.f32.mrb[0].mxu0
    %v221 = vadd.f32 0.0, %v220
    %v222 = vpop.f32.mrb[0].mxu0
    %223 = vmatprep.mubr.f32.mxu0 0.0
    %224 = vmatmul.mubr.f32.gmra.mrb[0].mxu0 %v75
    %v225 = vpop.f32.mrb[0].mxu0
    %v226 = vadd.f32 0.0, %v225
    %v227 = vpop.f32.mrb[0].mxu0
    %228 = vmatprep.mubr.f32.mxu0 0.0
    %229 = vmatmul.mubr.f32.gmra.mrb[0].mxu0 %v76
    %v230 = vpop.f32.mrb[0].mxu0
    %v231 = vadd.f32 0.0, %v230
    %v232 = vpop.f32.mrb[0].mxu0
    %233 = vmatprep.mubr.f32.mxu0 0.0
    %234 = vmatmul.mubr.f32.gmra.mrb[0].mxu0 %v77
    %v235 = vpop.f32.mrb[0].mxu0
    %v236 = vadd.f32 0.0, %v235
    %v237 = vpop.f32.mrb[0].mxu0
    %238 = vdwg.mxu0
    %v239 = vld [vmem:[%s2] sm:$0xff]
    %v240 = vld [vmem:[%s2 + $0x8] sm:$0xff]
    %v241 = vld [vmem:[%s2 + $0x10] sm:$0xff]
    %v242 = vld [vmem:[%s2 + $0x18] sm:$0xff]
    %v243 = vld [vmem:[%s2 + $0x20] sm:$0xff]
    %v244 = vld [vmem:[%s2 + $0x28] sm:$0xff]
    %v245 = vld [vmem:[%s2 + $0x30] sm:$0xff]
    %v246 = vld [vmem:[%s2 + $0x38] sm:$0xff]
    %v247 = vld [vmem:[%s2 + $0x40] sm:$0xff]
    %v248 = vld [vmem:[%s2 + $0x48] sm:$0xff]
    %v249 = vld [vmem:[%s2 + $0x50] sm:$0xff]
    %v250 = vld [vmem:[%s2 + $0x58] sm:$0xff]
    %v251 = vld [vmem:[%s2 + $0x60] sm:$0xff]
    %v252 = vld [vmem:[%s2 + $0x68] sm:$0xff]
    %v253 = vld [vmem:[%s2 + $0x70] sm:$0xff]
    %v254 = vld [vmem:[%s2 + $0x78] sm:$0xff]
    %v255 = vld [vmem:[%s3] sm:$0xff]
    %v256 = vld [vmem:[%s3 + $0x8] sm:$0xff]
    %v257 = vld [vmem:[%s3 + $0x10] sm:$0xff]
    %v258 = vld [vmem:[%s3 + $0x18] sm:$0xff]
    %v259 = vld [vmem:[%s3 + $0x20] sm:$0xff]
    %v260 = vld [vmem:[%s3 + $0x28] sm:$0xff]
    %v261 = vld [vmem:[%s3 + $0x30] sm:$0xff]
    %v262 = vld [vmem:[%s3 + $0x38] sm:$0xff]
    %v263 = vld [vmem:[%s3 + $0x40] sm:$0xff]
    %v264 = vld [vmem:[%s3 + $0x48] sm:$0xff]
    %v265 = vld [vmem:[%s3 + $0x50] sm:$0xff]
    %v266 = vld [vmem:[%s3 + $0x58] sm:$0xff]
    %v267 = vld [vmem:[%s3 + $0x60] sm:$0xff]
    %v268 = vld [vmem:[%s3 + $0x68] sm:$0xff]
    %v269 = vld [vmem:[%s3 + $0x70] sm:$0xff]
    %v270 = vld [vmem:[%s3 + $0x78] sm:$0xff]
    %v271 = vld [vmem:[%s4] sm:$0x1]
    %272 = vmatprep.subr.mxu0 0.0
    %273 = vmatpush1.msra.mxu0 %v239
    %274 = vmatprep.subr.mxu0 0.0
    %275 = vmatpush1.msra.mxu0 %v240
    %276 = vmatprep.subr.mxu0 0.0
    %277 = vmatpush1.msra.mxu0 %v241
    %278 = vmatprep.subr.mxu0 0.0
    %279 = vmatpush1.msra.mxu0 %v242
    %280 = vmatprep.subr.mxu0 0.0
    %281 = vmatpush1.msra.mxu0 %v243
    %282 = vmatprep.subr.mxu0 0.0
    %283 = vmatpush1.msra.mxu0 %v244
    %284 = vmatprep.subr.mxu0 0.0
    %285 = vmatpush1.msra.mxu0 %v245
    %286 = vmatprep.subr.mxu0 0.0
    %287 = vmatpush1.msra.mxu0 %v246
    %288 = vmatprep.subr.mxu0 0.0
    %289 = vmatpush1.msra.mxu0 %v247
    %290 = vmatprep.subr.mxu0 0.0
    %291 = vmatpush1.msra.mxu0 %v248
    %292 = vmatprep.subr.mxu0 0.0
    %293 = vmatpush1.msra.mxu0 %v249
    %294 = vmatprep.subr.mxu0 0.0
    %295 = vmatpush1.msra.mxu0 %v250
    %296 = vmatprep.subr.mxu0 0.0
    %297 = vmatpush1.msra.mxu0 %v251
    %298 = vmatprep.subr.mxu0 0.0
    %299 = vmatpush1.msra.mxu0 %v252
    %300 = vmatprep.subr.mxu0 0.0
    %301 = vmatpush1.msra.mxu0 %v253
    %302 = vmatprep.subr.mxu0 0.0
    %303 = vmatpush1.msra.mxu0 %v254
    %304 = vmatprep.subr.mxu0 0.0
    %305 = vmatpush1.msra.mxu0 0.0
    %306 = vmatprep.subr.mxu0 0.0
    %307 = vmatpush1.msra.mxu0 0.0
    %308 = vmatprep.subr.mxu0 0.0
    %309 = vmatpush1.msra.mxu0 0.0
    %310 = vmatprep.subr.mxu0 0.0
    %311 = vmatpush1.msra.mxu0 0.0
    %312 = vmatprep.subr.mxu0 0.0
    %313 = vmatpush1.msra.mxu0 0.0
    %314 = vmatprep.subr.mxu0 0.0
    %315 = vmatpush1.msra.mxu0 0.0
    %316 = vmatprep.subr.mxu0 0.0
    %317 = vmatpush1.msra.mxu0 0.0
    %318 = vmatprep.subr.mxu0 0.0
    %319 = vmatpush1.msra.mxu0 0.0
    %320 = vmatprep.subr.mxu0 0.0
    %321 = vmatpush1.msra.mxu0 0.0
    %322 = vmatprep.subr.mxu0 0.0
    %323 = vmatpush1.msra.mxu0 0.0
    %324 = vmatprep.subr.mxu0 0.0
    %325 = vmatpush1.msra.mxu0 0.0
    %326 = vmatprep.subr.mxu0 0.0
    %327 = vmatpush1.msra.mxu0 0.0
    %328 = vmatprep.subr.mxu0 0.0
    %329 = vmatpush1.msra.mxu0 0.0
    %330 = vmatprep.subr.mxu0 0.0
    %331 = vmatpush1.msra.mxu0 0.0
    %332 = vmatprep.subr.mxu0 0.0
    %333 = vmatpush1.msra.mxu0 0.0
    %334 = vmatprep.subr.mxu0 0.0
    %335 = vmatpush1.msra.mxu0 0.0
    %336 = vmatprep.mubr.f32.mxu0 0.0
    %337 = vmatmul.mubr.f32.gmra.mrb[0].mxu0 %v161
    %v338 = vpop.f32.mrb[0].mxu0
    %v339 = vadd.f32 0.0, %v338
    %v340 = vpop.f32.mrb[0].mxu0
    %341 = vmatprep.mubr.f32.mxu0 0.0
    %342 = vmatmul.mubr.f32.gmra.mrb[0].mxu0 %v166
    %v343 = vpop.f32.mrb[0].mxu0
    %v344 = vadd.f32 0.0, %v343
    %v345 = vpop.f32.mrb[0].mxu0
    %346 = vmatprep.mubr.f32.mxu0 0.0
    %347 = vmatmul.mubr.f32.gmra.mrb[0].mxu0 %v171
    %v348 = vpop.f32.mrb[0].mxu0
    %v349 = vadd.f32 0.0, %v348
    %v350 = vpop.f32.mrb[0].mxu0
    %351 = vmatprep.mubr.f32.mxu0 0.0
    %352 = vmatmul.mubr.f32.gmra.mrb[0].mxu0 %v176
    %v353 = vpop.f32.mrb[0].mxu0
    %v354 = vadd.f32 0.0, %v353
    %v355 = vpop.f32.mrb[0].mxu0
    %356 = vmatprep.mubr.f32.mxu0 0.0
    %357 = vmatmul.mubr.f32.gmra.mrb[0].mxu0 %v181
    %v358 = vpop.f32.mrb[0].mxu0
    %v359 = vadd.f32 0.0, %v358
    %v360 = vpop.f32.mrb[0].mxu0
    %361 = vmatprep.mubr.f32.mxu0 0.0
    %362 = vmatmul.mubr.f32.gmra.mrb[0].mxu0 %v186
    %v363 = vpop.f32.mrb[0].mxu0
    %v364 = vadd.f32 0.0, %v363
    %v365 = vpop.f32.mrb[0].mxu0
    %366 = vmatprep.mubr.f32.mxu0 0.0
    %367 = vmatmul.mubr.f32.gmra.mrb[0].mxu0 %v191
    %v368 = vpop.f32.mrb[0].mxu0
    %v369 = vadd.f32 0.0, %v368
    %v370 = vpop.f32.mrb[0].mxu0
    %371 = vmatprep.mubr.f32.mxu0 0.0
    %372 = vmatmul.mubr.f32.gmra.mrb[0].mxu0 %v196
    %v373 = vpop.f32.mrb[0].mxu0
    %v374 = vadd.f32 0.0, %v373
    %v375 = vpop.f32.mrb[0].mxu0
    %376 = vmatprep.mubr.f32.mxu0 0.0
    %377 = vmatmul.mubr.f32.gmra.mrb[0].mxu0 %v201
    %v378 = vpop.f32.mrb[0].mxu0
    %v379 = vadd.f32 0.0, %v378
    %v380 = vpop.f32.mrb[0].mxu0
    %381 = vmatprep.mubr.f32.mxu0 0.0
    %382 = vmatmul.mubr.f32.gmra.mrb[0].mxu0 %v206
    %v383 = vpop.f32.mrb[0].mxu0
    %v384 = vadd.f32 0.0, %v383
    %v385 = vpop.f32.mrb[0].mxu0
    %386 = vmatprep.mubr.f32.mxu0 0.0
    %387 = vmatmul.mubr.f32.gmra.mrb[0].mxu0 %v211
    %v388 = vpop.f32.mrb[0].mxu0
    %v389 = vadd.f32 0.0, %v388
    %v390 = vpop.f32.mrb[0].mxu0
    %391 = vmatprep.mubr.f32.mxu0 0.0
    %392 = vmatmul.mubr.f32.gmra.mrb[0].mxu0 %v216
    %v393 = vpop.f32.mrb[0].mxu0
    %v394 = vadd.f32 0.0, %v393
    %v395 = vpop.f32.mrb[0].mxu0
    %396 = vmatprep.mubr.f32.mxu0 0.0
    %397 = vmatmul.mubr.f32.gmra.mrb[0].mxu0 %v221
    %v398 = vpop.f32.mrb[0].mxu0
    %v399 = vadd.f32 0.0, %v398
    %v400 = vpop.f32.mrb[0].mxu0
    %401 = vmatprep.mubr.f32.mxu0 0.0
    %402 = vmatmul.mubr.f32.gmra.mrb[0].mxu0 %v226
    %v403 = vpop.f32.mrb[0].mxu0
    %v404 = vadd.f32 0.0, %v403
    %v405 = vpop.f32.mrb[0].mxu0
    %406 = vmatprep.mubr.f32.mxu0 0.0
    %407 = vmatmul.mubr.f32.gmra.mrb[0].mxu0 %v231
    %v408 = vpop.f32.mrb[0].mxu0
    %v409 = vadd.f32 0.0, %v408
    %v410 = vpop.f32.mrb[0].mxu0
    %411 = vmatprep.mubr.f32.mxu0 0.0
    %412 = vmatmul.mubr.f32.gmra.mrb[0].mxu0 %v236
    %v413 = vpop.f32.mrb[0].mxu0
    %v414 = vadd.f32 0.0, %v413
    %v415 = vpop.f32.mrb[0].mxu0
    %416 = vdwg.mxu0
    %v418 = vlaneseq
    %v419 = vshrl.u32 %v418, 7
    %v420 = vsub.s32 0, %v419
    %v421 = vrot.slane %v271, %v420
    %423 = vmatprep.subr.mxu0 0.0
    %424 = vmatpush1.msra.mxu0 %v255
    %425 = vmatprep.subr.mxu0 0.0
    %426 = vmatpush1.msra.mxu0 %v256
    %427 = vmatprep.subr.mxu0 0.0
    %428 = vmatpush1.msra.mxu0 %v257
    %429 = vmatprep.subr.mxu0 0.0
    %430 = vmatpush1.msra.mxu0 %v258
    %431 = vmatprep.subr.mxu0 0.0
    %432 = vmatpush1.msra.mxu0 %v259
    %433 = vmatprep.subr.mxu0 0.0
    %434 = vmatpush1.msra.mxu0 %v260
    %435 = vmatprep.subr.mxu0 0.0
    %436 = vmatpush1.msra.mxu0 %v261
    %437 = vmatprep.subr.mxu0 0.0
    %438 = vmatpush1.msra.mxu0 %v262
    %439 = vmatprep.subr.mxu0 0.0
    %440 = vmatpush1.msra.mxu0 %v263
    %441 = vmatprep.subr.mxu0 0.0
    %442 = vmatpush1.msra.mxu0 %v264
    %443 = vmatprep.subr.mxu0 0.0
    %444 = vmatpush1.msra.mxu0 %v265
    %445 = vmatprep.subr.mxu0 0.0
    %446 = vmatpush1.msra.mxu0 %v266
    %447 = vmatprep.subr.mxu0 0.0
    %448 = vmatpush1.msra.mxu0 %v267
    %449 = vmatprep.subr.mxu0 0.0
    %450 = vmatpush1.msra.mxu0 %v268
    %451 = vmatprep.subr.mxu0 0.0
    %452 = vmatpush1.msra.mxu0 %v269
    %453 = vmatprep.subr.mxu0 0.0
    %454 = vmatpush1.msra.mxu0 %v270
    %455 = vmatprep.subr.mxu0 0.0
    %456 = vmatpush1.msra.mxu0 0.0
    %457 = vmatprep.subr.mxu0 0.0
    %458 = vmatpush1.msra.mxu0 0.0
    %459 = vmatprep.subr.mxu0 0.0
    %460 = vmatpush1.msra.mxu0 0.0
    %461 = vmatprep.subr.mxu0 0.0
    %462 = vmatpush1.msra.mxu0 0.0
    %463 = vmatprep.subr.mxu0 0.0
    %464 = vmatpush1.msra.mxu0 0.0
    %465 = vmatprep.subr.mxu0 0.0
    %466 = vmatpush1.msra.mxu0 0.0
    %467 = vmatprep.subr.mxu0 0.0
    %468 = vmatpush1.msra.mxu0 0.0
    %469 = vmatprep.subr.mxu0 0.0
    %470 = vmatpush1.msra.mxu0 0.0
    %471 = vmatprep.subr.mxu0 0.0
    %472 = vmatpush1.msra.mxu0 0.0
    %473 = vmatprep.subr.mxu0 0.0
    %474 = vmatpush1.msra.mxu0 0.0
    %475 = vmatprep.subr.mxu0 0.0
    %476 = vmatpush1.msra.mxu0 0.0
    %477 = vmatprep.subr.mxu0 0.0
    %478 = vmatpush1.msra.mxu0 0.0
    %479 = vmatprep.subr.mxu0 0.0
    %480 = vmatpush1.msra.mxu0 0.0
    %481 = vmatprep.subr.mxu0 0.0
    %482 = vmatpush1.msra.mxu0 0.0
    %483 = vmatprep.subr.mxu0 0.0
    %484 = vmatpush1.msra.mxu0 0.0
    %485 = vmatprep.subr.mxu0 0.0
    %486 = vmatpush1.msra.mxu0 0.0
    %487 = vmatprep.mubr.f32.mxu0 0.0
    %488 = vmatmul.mubr.f32.gmra.mrb[0].mxu0 %v339
    %v489 = vpop.f32.mrb[0].mxu0
    %v490 = vadd.f32 %v421, %v489
    %v491 = vpop.f32.mrb[0].mxu0
    %492 = vmatprep.mubr.f32.mxu0 0.0
    %493 = vmatmul.mubr.f32.gmra.mrb[0].mxu0 %v344
    %v494 = vpop.f32.mrb[0].mxu0
    %v495 = vadd.f32 %v421, %v494
    %v496 = vpop.f32.mrb[0].mxu0
    %497 = vmatprep.mubr.f32.mxu0 0.0
    %498 = vmatmul.mubr.f32.gmra.mrb[0].mxu0 %v349
    %v499 = vpop.f32.mrb[0].mxu0
    %v500 = vadd.f32 %v421, %v499
    %v501 = vpop.f32.mrb[0].mxu0
    %502 = vmatprep.mubr.f32.mxu0 0.0
    %503 = vmatmul.mubr.f32.gmra.mrb[0].mxu0 %v354
    %v504 = vpop.f32.mrb[0].mxu0
    %v505 = vadd.f32 %v421, %v504
    %v506 = vpop.f32.mrb[0].mxu0
    %507 = vmatprep.mubr.f32.mxu0 0.0
    %508 = vmatmul.mubr.f32.gmra.mrb[0].mxu0 %v359
    %v509 = vpop.f32.mrb[0].mxu0
    %v510 = vadd.f32 %v421, %v509
    %v511 = vpop.f32.mrb[0].mxu0
    %512 = vmatprep.mubr.f32.mxu0 0.0
    %513 = vmatmul.mubr.f32.gmra.mrb[0].mxu0 %v364
    %v514 = vpop.f32.mrb[0].mxu0
    %v515 = vadd.f32 %v421, %v514
    %v516 = vpop.f32.mrb[0].mxu0
    %517 = vmatprep.mubr.f32.mxu0 0.0
    %518 = vmatmul.mubr.f32.gmra.mrb[0].mxu0 %v369
    %v519 = vpop.f32.mrb[0].mxu0
    %v520 = vadd.f32 %v421, %v519
    %v521 = vpop.f32.mrb[0].mxu0
    %522 = vmatprep.mubr.f32.mxu0 0.0
    %523 = vmatmul.mubr.f32.gmra.mrb[0].mxu0 %v374
    %v524 = vpop.f32.mrb[0].mxu0
    %v525 = vadd.f32 %v421, %v524
    %v526 = vpop.f32.mrb[0].mxu0
    %527 = vmatprep.mubr.f32.mxu0 0.0
    %528 = vmatmul.mubr.f32.gmra.mrb[0].mxu0 %v379
    %v529 = vpop.f32.mrb[0].mxu0
    %v530 = vadd.f32 %v421, %v529
    %v531 = vpop.f32.mrb[0].mxu0
    %532 = vmatprep.mubr.f32.mxu0 0.0
    %533 = vmatmul.mubr.f32.gmra.mrb[0].mxu0 %v384
    %v534 = vpop.f32.mrb[0].mxu0
    %v535 = vadd.f32 %v421, %v534
    %v536 = vpop.f32.mrb[0].mxu0
    %537 = vmatprep.mubr.f32.mxu0 0.0
    %538 = vmatmul.mubr.f32.gmra.mrb[0].mxu0 %v389
    %v539 = vpop.f32.mrb[0].mxu0
    %v540 = vadd.f32 %v421, %v539
    %v541 = vpop.f32.mrb[0].mxu0
    %542 = vmatprep.mubr.f32.mxu0 0.0
    %543 = vmatmul.mubr.f32.gmra.mrb[0].mxu0 %v394
    %v544 = vpop.f32.mrb[0].mxu0
    %v545 = vadd.f32 %v421, %v544
    %v546 = vpop.f32.mrb[0].mxu0
    %547 = vmatprep.mubr.f32.mxu0 0.0
    %548 = vmatmul.mubr.f32.gmra.mrb[0].mxu0 %v399
    %v549 = vpop.f32.mrb[0].mxu0
    %v550 = vadd.f32 %v421, %v549
    %v551 = vpop.f32.mrb[0].mxu0
    %552 = vmatprep.mubr.f32.mxu0 0.0
    %553 = vmatmul.mubr.f32.gmra.mrb[0].mxu0 %v404
    %v554 = vpop.f32.mrb[0].mxu0
    %v555 = vadd.f32 %v421, %v554
    %v556 = vpop.f32.mrb[0].mxu0
    %557 = vmatprep.mubr.f32.mxu0 0.0
    %558 = vmatmul.mubr.f32.gmra.mrb[0].mxu0 %v409
    %v559 = vpop.f32.mrb[0].mxu0
    %v560 = vadd.f32 %v421, %v559
    %v561 = vpop.f32.mrb[0].mxu0
    %562 = vmatprep.mubr.f32.mxu0 0.0
    %563 = vmatmul.mubr.f32.gmra.mrb[0].mxu0 %v414
    %v564 = vpop.f32.mrb[0].mxu0
    %v565 = vadd.f32 %v421, %v564
    %v566 = vpop.f32.mrb[0].mxu0
    %567 = vdwg.mxu0
    %v568 = vmax.f32 %v490, 0.0
    %v569 = vmax.f32 %v495, 0.0
    %v570 = vmax.f32 %v500, 0.0
    %v571 = vmax.f32 %v505, 0.0
    %v572 = vmax.f32 %v510, 0.0
    %v573 = vmax.f32 %v515, 0.0
    %v574 = vmax.f32 %v520, 0.0
    %v575 = vmax.f32 %v525, 0.0
    %v576 = vmax.f32 %v530, 0.0
    %v577 = vmax.f32 %v535, 0.0
    %v578 = vmax.f32 %v540, 0.0
    %v579 = vmax.f32 %v545, 0.0
    %v580 = vmax.f32 %v550, 0.0
    %v581 = vmax.f32 %v555, 0.0
    %v582 = vmax.f32 %v560, 0.0
    %v583 = vmax.f32 %v565, 0.0
    %v584 = vld [vmem:[%s5] sm:$0xff]
    %v585 = vld [vmem:[%s5 + $0x8] sm:$0xff]
    %v586 = vld [vmem:[%s5 + $0x10] sm:$0xff]
    %v587 = vld [vmem:[%s5 + $0x18] sm:$0xff]
    %v588 = vld [vmem:[%s5 + $0x20] sm:$0xff]
    %v589 = vld [vmem:[%s5 + $0x28] sm:$0xff]
    %v590 = vld [vmem:[%s5 + $0x30] sm:$0xff]
    %v591 = vld [vmem:[%s5 + $0x38] sm:$0xff]
    %v592 = vld [vmem:[%s5 + $0x40] sm:$0xff]
    %v593 = vld [vmem:[%s5 + $0x48] sm:$0xff]
    %v594 = vld [vmem:[%s5 + $0x50] sm:$0xff]
    %v595 = vld [vmem:[%s5 + $0x58] sm:$0xff]
    %v596 = vld [vmem:[%s5 + $0x60] sm:$0xff]
    %v597 = vld [vmem:[%s5 + $0x68] sm:$0xff]
    %v598 = vld [vmem:[%s5 + $0x70] sm:$0xff]
    %v599 = vld [vmem:[%s5 + $0x78] sm:$0xff]
    %v600 = vadd.f32 %v568, %v584
    %v601 = vadd.f32 %v569, %v585
    %v602 = vadd.f32 %v570, %v586
    %v603 = vadd.f32 %v571, %v587
    %v604 = vadd.f32 %v572, %v588
    %v605 = vadd.f32 %v573, %v589
    %v606 = vadd.f32 %v574, %v590
    %v607 = vadd.f32 %v575, %v591
    %v608 = vadd.f32 %v576, %v592
    %v609 = vadd.f32 %v577, %v593
    %v610 = vadd.f32 %v578, %v594
    %v611 = vadd.f32 %v579, %v595
    %v612 = vadd.f32 %v580, %v596
    %v613 = vadd.f32 %v581, %v597
    %v614 = vadd.f32 %v582, %v598
    %v615 = vadd.f32 %v583, %v599
    %616 = vst [vmem:[#allocation2] sm:$0xff] %v600
    %617 = vst [vmem:[#allocation2 + $0x8] sm:$0xff] %v601
    %618 = vst [vmem:[#allocation2 + $0x10] sm:$0xff] %v602
    %619 = vst [vmem:[#allocation2 + $0x18] sm:$0xff] %v603
    %620 = vst [vmem:[#allocation2 + $0x20] sm:$0xff] %v604
    %621 = vst [vmem:[#allocation2 + $0x28] sm:$0xff] %v605
    %622 = vst [vmem:[#allocation2 + $0x30] sm:$0xff] %v606
    %623 = vst [vmem:[#allocation2 + $0x38] sm:$0xff] %v607
    %624 = vst [vmem:[#allocation2 + $0x40] sm:$0xff] %v608
    %625 = vst [vmem:[#allocation2 + $0x48] sm:$0xff] %v609
    %626 = vst [vmem:[#allocation2 + $0x50] sm:$0xff] %v610
    %627 = vst [vmem:[#allocation2 + $0x58] sm:$0xff] %v611
    %628 = vst [vmem:[#allocation2 + $0x60] sm:$0xff] %v612
    %629 = vst [vmem:[#allocation2 + $0x68] sm:$0xff] %v613
    %630 = vst [vmem:[#allocation2 + $0x70] sm:$0xff] %v614
    %631 = vst [vmem:[#allocation2 + $0x78] sm:$0xff] %v615
    %v632 = vld [vmem:[%s6] sm:$0xff]
    %v633 = vld [vmem:[%s6 + $0x8] sm:$0xff]
    %v634 = vld [vmem:[%s6 + $0x10] sm:$0xff]
    %v635 = vld [vmem:[%s6 + $0x18] sm:$0xff]
    %v636 = vld [vmem:[%s6 + $0x20] sm:$0xff]
    %v637 = vld [vmem:[%s6 + $0x28] sm:$0xff]
    %v638 = vld [vmem:[%s6 + $0x30] sm:$0xff]
    %v639 = vld [vmem:[%s6 + $0x38] sm:$0xff]
    %v640 = vld [vmem:[%s6 + $0x40] sm:$0xff]
    %v641 = vld [vmem:[%s6 + $0x48] sm:$0xff]
    %v642 = vld [vmem:[%s6 + $0x50] sm:$0xff]
    %v643 = vld [vmem:[%s6 + $0x58] sm:$0xff]
    %v644 = vld [vmem:[%s6 + $0x60] sm:$0xff]
    %v645 = vld [vmem:[%s6 + $0x68] sm:$0xff]
    %v646 = vld [vmem:[%s6 + $0x70] sm:$0xff]
    %v647 = vld [vmem:[%s6 + $0x78] sm:$0xff]
    %v648 = vadd.f32 %v600, %v632
    %v649 = vadd.f32 %v601, %v633
    %v650 = vadd.f32 %v602, %v634
    %v651 = vadd.f32 %v603, %v635
    %v652 = vadd.f32 %v604, %v636
    %v653 = vadd.f32 %v605, %v637
    %v654 = vadd.f32 %v606, %v638
    %v655 = vadd.f32 %v607, %v639
    %v656 = vadd.f32 %v608, %v640
    %v657 = vadd.f32 %v609, %v641
    %v658 = vadd.f32 %v610, %v642
    %v659 = vadd.f32 %v611, %v643
    %v660 = vadd.f32 %v612, %v644
    %v661 = vadd.f32 %v613, %v645
    %v662 = vadd.f32 %v614, %v646
    %v663 = vadd.f32 %v615, %v647
    %664 = vst [vmem:[#allocation4] sm:$0xff] %v648
    %665 = vst [vmem:[#allocation4 + $0x8] sm:$0xff] %v649
    %666 = vst [vmem:[#allocation4 + $0x10] sm:$0xff] %v650
    %667 = vst [vmem:[#allocation4 + $0x18] sm:$0xff] %v651
    %668 = vst [vmem:[#allocation4 + $0x20] sm:$0xff] %v652
    %669 = vst [vmem:[#allocation4 + $0x28] sm:$0xff] %v653
    %670 = vst [vmem:[#allocation4 + $0x30] sm:$0xff] %v654
    %671 = vst [vmem:[#allocation4 + $0x38] sm:$0xff] %v655
    %672 = vst [vmem:[#allocation4 + $0x40] sm:$0xff] %v656
    %673 = vst [vmem:[#allocation4 + $0x48] sm:$0xff] %v657
    %674 = vst [vmem:[#allocation4 + $0x50] sm:$0xff] %v658
    %675 = vst [vmem:[#allocation4 + $0x58] sm:$0xff] %v659
    %676 = vst [vmem:[#allocation4 + $0x60] sm:$0xff] %v660
    %677 = vst [vmem:[#allocation4 + $0x68] sm:$0xff] %v661
    %678 = vst [vmem:[#allocation4 + $0x70] sm:$0xff] %v662
    %679 = vst [vmem:[#allocation4 + $0x78] sm:$0xff] %v663
    // Predicated region
    $region30: #{graph_unet_forward.9} parent=1 // pred_check
      _
    $region31: #{graph_unet_forward.9} parent=1 // pred_check_branch
      %681 = sbr.rel (0) target = $region33
    $region32: #{graph_unet_forward.9} parent=1 // pred_region
      %s683 = ssub.s32 2048, 2048
      %684 = vsyncadd [#allocation3], %s683
      %s685 = sshll.u32 [#allocation2], 4
      %s686 = int_to_ptr.vmem [resolvable:$true] %s685
      %691 = dma.vmem_to_hbm [thread:$0]  %s686, 2048, %s7, [#allocation3], 128, 128, 8
    $region33: #{graph_unet_forward.9} parent=1 // pred_fallthru
      _
    // Predicated region
    $region34: #{graph_unet_forward.9} parent=1 // pred_check
      _
    $region35: #{graph_unet_forward.9} parent=1 // pred_check_branch
      %693 = sbr.rel (0) target = $region37
    $region36: #{graph_unet_forward.9} parent=1 // pred_region
      %s695 = ssub.s32 2048, 2048
      %696 = vsyncadd [#allocation5], %s695
      %s697 = sshll.u32 [#allocation4], 4
      %s698 = int_to_ptr.vmem [resolvable:$true] %s697
      %703 = dma.vmem_to_hbm [thread:$0]  %s698, 2048, %s8, [#allocation5], 128, 128, 8
    $region37: #{graph_unet_forward.9} parent=1 // pred_fallthru
      _
    // Predicated region
    $region38: #{graph_unet_forward.9} parent=1 // pred_check
      _
    $region39: #{graph_unet_forward.9} parent=1 // pred_check_branch
      %705 = sbr.rel (0) target = $region41
    $region40: #{graph_unet_forward.9} parent=1 // pred_region
      %706 = dma.done [#allocation3], 2048
    $region41: #{graph_unet_forward.9} parent=1 // pred_fallthru
      _
    // Predicated region
    $region42: #{graph_unet_forward.9} parent=1 // pred_check
      _
    $region43: #{graph_unet_forward.9} parent=1 // pred_check_branch
      %708 = sbr.rel (0) target = $region45
    $region44: #{graph_unet_forward.9} parent=1 // pred_region
      %709 = dma.done [#allocation5], 2048
    $region45: #{graph_unet_forward.9} parent=1 // pred_fallthru
      _
    %710 = vsyncpa [#allocation3], 1
    %711 = vsyncpa [#allocation5], 1

// kernel: graph_unet_forward.6
$region0: #{graph_unet_forward.6}
  #allocation0 [shape = 'u32[]', space=smem, size = 0x4, offset = 0x4, fixed_abs, tag = 'smem constant byte address 0x4 - core index']
  #allocation1 [shape = 'u32[144,128]{1,0:T(1,128)}', space=vmem, size = 0x12000, scoped, tag = 'internal scratch']
  #allocation2 [shape = 'f32[1,1]{1,0:T(1,128)S(1)}', space=vmem, size = 0x200, scoped, tag = 'scoped memory for graph_unet_forward.6']
  %s0 = inlined_call_operand.vmem [shape: f32[128,128], index: 0, kind: input, shape index: {}]
  %s1 = inlined_call_operand.vmem [shape: f32[128,128], index: 1, kind: input, shape index: {}]
  %s2 = inlined_call_operand.vmem [shape: f32[128,128], index: 2, kind: input, shape index: {}]
  %s3 = inlined_call_operand.vmem [shape: f32[128,1], index: 3, kind: input, shape index: {}]
  %s4 = inlined_call_operand.vmem [shape: f32[128,128], index: 4, kind: input, shape index: {}]
  %s5 = inlined_call_operand.vmem [shape: f32[1,128], index: 5, kind: input, shape index: {}]
  %s6 = inlined_call_operand.vmem [shape: f32[1,128], index: 6, kind: input, shape index: {}]
  %s7 = inlined_call_operand.<no memory space> [shape: f32[1,1], index: 7, kind: input, shape index: {}]
  %s8 = inlined_call_operand.vmem [shape: f32[128,128], index: 8, kind: output, shape index: {0}]
  %s9 = inlined_call_operand.vmem [shape: f32[128,128], index: 9, kind: output, shape index: {1}]
  %s10 = inlined_call_operand.vmem [shape: f32[1,128], index: 10, kind: output, shape index: {2}]
  %11 = xla_tuple %s8, %s9, %s10
  %s12 = sld [smem:[#allocation0]]
  $region58: #{graph_unet_forward.6} parent=0
    _
  %s14 = ssub.s32 1, %s12
  %s15 = scalar_select 0, %s14, %s12
  %v16 = vstv %s7
  %17 = vst [vmem:[#allocation2] sm:$0x1] %v16
  // Predicated region
  $region2: #{graph_unet_forward.6} parent=0 // pred_check
    _
  $region3: #{graph_unet_forward.6} parent=0 // pred_check_branch
    %19 = sbr.rel (0) target = $region5
  $region4: #{graph_unet_forward.6} parent=0 // pred_region
    _
  $region5: #{graph_unet_forward.6} parent=0 // pred_fallthru
    _
  // Predicated region
  $region6: #{graph_unet_forward.6} parent=0 // pred_check
    _
  $region7: #{graph_unet_forward.6} parent=0 // pred_check_branch
    %21 = sbr.rel (0) target = $region9
  $region8: #{graph_unet_forward.6} parent=0 // pred_region
    _
  $region9: #{graph_unet_forward.6} parent=0 // pred_fallthru
    _
  // Predicated region
  $region10: #{graph_unet_forward.6} parent=0 // pred_check
    _
  $region11: #{graph_unet_forward.6} parent=0 // pred_check_branch
    %23 = sbr.rel (0) target = $region13
  $region12: #{graph_unet_forward.6} parent=0 // pred_region
    _
  $region13: #{graph_unet_forward.6} parent=0 // pred_fallthru
    _
  // Predicated region
  $region14: #{graph_unet_forward.6} parent=0 // pred_check
    _
  $region15: #{graph_unet_forward.6} parent=0 // pred_check_branch
    %25 = sbr.rel (0) target = $region17
  $region16: #{graph_unet_forward.6} parent=0 // pred_region
    _
  $region17: #{graph_unet_forward.6} parent=0 // pred_fallthru
    _
  // Predicated region
  $region18: #{graph_unet_forward.6} parent=0 // pred_check
    _
  $region19: #{graph_unet_forward.6} parent=0 // pred_check_branch
    %27 = sbr.rel (0) target = $region21
  $region20: #{graph_unet_forward.6} parent=0 // pred_region
    _
  $region21: #{graph_unet_forward.6} parent=0 // pred_fallthru
    _
  // Predicated region
  $region22: #{graph_unet_forward.6} parent=0 // pred_check
    _
  $region23: #{graph_unet_forward.6} parent=0 // pred_check_branch
    %29 = sbr.rel (0) target = $region25
  $region24: #{graph_unet_forward.6} parent=0 // pred_region
    _
  $region25: #{graph_unet_forward.6} parent=0 // pred_fallthru
    _
  // Predicated region
  $region26: #{graph_unet_forward.6} parent=0 // pred_check
    _
  $region27: #{graph_unet_forward.6} parent=0 // pred_check_branch
    %31 = sbr.rel (0) target = $region29
  $region28: #{graph_unet_forward.6} parent=0 // pred_region
    _
  $region29: #{graph_unet_forward.6} parent=0 // pred_fallthru
    _
  // Predicated region
  $region30: #{graph_unet_forward.6} parent=0 // pred_check
    _
  $region31: #{graph_unet_forward.6} parent=0 // pred_check_branch
    %33 = sbr.rel (0) target = $region33
  $region32: #{graph_unet_forward.6} parent=0 // pred_region
    _
  $region33: #{graph_unet_forward.6} parent=0 // pred_fallthru
    _
  %v34 = vld [vmem:[%s0] sm:$0xff]
  %v35 = vld [vmem:[%s0 + $0x8] sm:$0xff]
  %v36 = vld [vmem:[%s0 + $0x10] sm:$0xff]
  %v37 = vld [vmem:[%s0 + $0x18] sm:$0xff]
  %v38 = vld [vmem:[%s0 + $0x20] sm:$0xff]
  %v39 = vld [vmem:[%s0 + $0x28] sm:$0xff]
  %v40 = vld [vmem:[%s0 + $0x30] sm:$0xff]
  %v41 = vld [vmem:[%s0 + $0x38] sm:$0xff]
  %v42 = vld [vmem:[%s0 + $0x40] sm:$0xff]
  %v43 = vld [vmem:[%s0 + $0x48] sm:$0xff]
  %v44 = vld [vmem:[%s0 + $0x50] sm:$0xff]
  %v45 = vld [vmem:[%s0 + $0x58] sm:$0xff]
  %v46 = vld [vmem:[%s0 + $0x60] sm:$0xff]
  %v47 = vld [vmem:[%s0 + $0x68] sm:$0xff]
  %v48 = vld [vmem:[%s0 + $0x70] sm:$0xff]
  %v49 = vld [vmem:[%s0 + $0x78] sm:$0xff]
  %v50 = vld [vmem:[%s1] sm:$0xff]
  %v51 = vld [vmem:[%s1 + $0x8] sm:$0xff]
  %v52 = vld [vmem:[%s1 + $0x10] sm:$0xff]
  %v53 = vld [vmem:[%s1 + $0x18] sm:$0xff]
  %v54 = vld [vmem:[%s1 + $0x20] sm:$0xff]
  %v55 = vld [vmem:[%s1 + $0x28] sm:$0xff]
  %v56 = vld [vmem:[%s1 + $0x30] sm:$0xff]
  %v57 = vld [vmem:[%s1 + $0x38] sm:$0xff]
  %v58 = vld [vmem:[%s1 + $0x40] sm:$0xff]
  %v59 = vld [vmem:[%s1 + $0x48] sm:$0xff]
  %v60 = vld [vmem:[%s1 + $0x50] sm:$0xff]
  %v61 = vld [vmem:[%s1 + $0x58] sm:$0xff]
  %v62 = vld [vmem:[%s1 + $0x60] sm:$0xff]
  %v63 = vld [vmem:[%s1 + $0x68] sm:$0xff]
  %v64 = vld [vmem:[%s1 + $0x70] sm:$0xff]
  %v65 = vld [vmem:[%s1 + $0x78] sm:$0xff]
  %v66 = vld [vmem:[%s2] sm:$0xff]
  %v67 = vld [vmem:[%s2 + $0x8] sm:$0xff]
  %v68 = vld [vmem:[%s2 + $0x10] sm:$0xff]
  %v69 = vld [vmem:[%s2 + $0x18] sm:$0xff]
  %v70 = vld [vmem:[%s2 + $0x20] sm:$0xff]
  %v71 = vld [vmem:[%s2 + $0x28] sm:$0xff]
  %v72 = vld [vmem:[%s2 + $0x30] sm:$0xff]
  %v73 = vld [vmem:[%s2 + $0x38] sm:$0xff]
  %v74 = vld [vmem:[%s2 + $0x40] sm:$0xff]
  %v75 = vld [vmem:[%s2 + $0x48] sm:$0xff]
  %v76 = vld [vmem:[%s2 + $0x50] sm:$0xff]
  %v77 = vld [vmem:[%s2 + $0x58] sm:$0xff]
  %v78 = vld [vmem:[%s2 + $0x60] sm:$0xff]
  %v79 = vld [vmem:[%s2 + $0x68] sm:$0xff]
  %v80 = vld [vmem:[%s2 + $0x70] sm:$0xff]
  %v81 = vld [vmem:[%s2 + $0x78] sm:$0xff]
  %v82 = vld [vmem:[%s3] sm:$0xff]
  %v83 = vld [vmem:[%s3 + $0x8] sm:$0xff]
  %v84 = vld [vmem:[%s3 + $0x10] sm:$0xff]
  %v85 = vld [vmem:[%s3 + $0x18] sm:$0xff]
  %v86 = vld [vmem:[%s3 + $0x20] sm:$0xff]
  %v87 = vld [vmem:[%s3 + $0x28] sm:$0xff]
  %v88 = vld [vmem:[%s3 + $0x30] sm:$0xff]
  %v89 = vld [vmem:[%s3 + $0x38] sm:$0xff]
  %v90 = vld [vmem:[%s3 + $0x40] sm:$0xff]
  %v91 = vld [vmem:[%s3 + $0x48] sm:$0xff]
  %v92 = vld [vmem:[%s3 + $0x50] sm:$0xff]
  %v93 = vld [vmem:[%s3 + $0x58] sm:$0xff]
  %v94 = vld [vmem:[%s3 + $0x60] sm:$0xff]
  %v95 = vld [vmem:[%s3 + $0x68] sm:$0xff]
  %v96 = vld [vmem:[%s3 + $0x70] sm:$0xff]
  %v97 = vld [vmem:[%s3 + $0x78] sm:$0xff]
  %vm98 = vcmp.ne.f32.partialorder %v34, 0.0
  %vm99 = vcmp.ne.f32.partialorder %v35, 0.0
  %vm100 = vcmp.ne.f32.partialorder %v36, 0.0
  %vm101 = vcmp.ne.f32.partialorder %v37, 0.0
  %vm102 = vcmp.ne.f32.partialorder %v38, 0.0
  %vm103 = vcmp.ne.f32.partialorder %v39, 0.0
  %vm104 = vcmp.ne.f32.partialorder %v40, 0.0
  %vm105 = vcmp.ne.f32.partialorder %v41, 0.0
  %vm106 = vcmp.ne.f32.partialorder %v42, 0.0
  %vm107 = vcmp.ne.f32.partialorder %v43, 0.0
  %vm108 = vcmp.ne.f32.partialorder %v44, 0.0
  %vm109 = vcmp.ne.f32.partialorder %v45, 0.0
  %vm110 = vcmp.ne.f32.partialorder %v46, 0.0
  %vm111 = vcmp.ne.f32.partialorder %v47, 0.0
  %vm112 = vcmp.ne.f32.partialorder %v48, 0.0
  %vm113 = vcmp.ne.f32.partialorder %v49, 0.0
  %v114 = vsel %vm98, 1, 0
  %v115 = vsel %vm99, 1, 0
  %v116 = vsel %vm100, 1, 0
  %v117 = vsel %vm101, 1, 0
  %v118 = vsel %vm102, 1, 0
  %v119 = vsel %vm103, 1, 0
  %v120 = vsel %vm104, 1, 0
  %v121 = vsel %vm105, 1, 0
  %v122 = vsel %vm106, 1, 0
  %v123 = vsel %vm107, 1, 0
  %v124 = vsel %vm108, 1, 0
  %v125 = vsel %vm109, 1, 0
  %v126 = vsel %vm110, 1, 0
  %v127 = vsel %vm111, 1, 0
  %v128 = vsel %vm112, 1, 0
  %v129 = vsel %vm113, 1, 0
  %v130 = vcvt.s32.f32 %v114
  %v131 = vcvt.s32.f32 %v115
  %v132 = vcvt.s32.f32 %v116
  %v133 = vcvt.s32.f32 %v117
  %v134 = vcvt.s32.f32 %v118
  %v135 = vcvt.s32.f32 %v119
  %v136 = vcvt.s32.f32 %v120
  %v137 = vcvt.s32.f32 %v121
  %v138 = vcvt.s32.f32 %v122
  %v139 = vcvt.s32.f32 %v123
  %v140 = vcvt.s32.f32 %v124
  %v141 = vcvt.s32.f32 %v125
  %v142 = vcvt.s32.f32 %v126
  %v143 = vcvt.s32.f32 %v127
  %v144 = vcvt.s32.f32 %v128
  %v145 = vcvt.s32.f32 %v129
  %146 = vmatprep.subr.mxu0 0.0
  %147 = vmatpush1.msra.mxu0 %v130
  %148 = vmatprep.subr.mxu0 0.0
  %149 = vmatpush1.msra.mxu0 %v131
  %150 = vmatprep.subr.mxu0 0.0
  %151 = vmatpush1.msra.mxu0 %v132
  %152 = vmatprep.subr.mxu0 0.0
  %153 = vmatpush1.msra.mxu0 %v133
  %154 = vmatprep.subr.mxu0 0.0
  %155 = vmatpush1.msra.mxu0 %v134
  %156 = vmatprep.subr.mxu0 0.0
  %157 = vmatpush1.msra.mxu0 %v135
  %158 = vmatprep.subr.mxu0 0.0
  %159 = vmatpush1.msra.mxu0 %v136
  %160 = vmatprep.subr.mxu0 0.0
  %161 = vmatpush1.msra.mxu0 %v137
  %162 = vmatprep.subr.mxu0 0.0
  %163 = vmatpush1.msra.mxu0 %v138
  %164 = vmatprep.subr.mxu0 0.0
  %165 = vmatpush1.msra.mxu0 %v139
  %166 = vmatprep.subr.mxu0 0.0
  %167 = vmatpush1.msra.mxu0 %v140
  %168 = vmatprep.subr.mxu0 0.0
  %169 = vmatpush1.msra.mxu0 %v141
  %170 = vmatprep.subr.mxu0 0.0
  %171 = vmatpush1.msra.mxu0 %v142
  %172 = vmatprep.subr.mxu0 0.0
  %173 = vmatpush1.msra.mxu0 %v143
  %174 = vmatprep.subr.mxu0 0.0
  %175 = vmatpush1.msra.mxu0 %v144
  %176 = vmatprep.subr.mxu0 0.0
  %177 = vmatpush1.msra.mxu0 %v145
  %178 = vmatprep.subr.mxu0 0.0
  %179 = vmatpush1.msra.mxu0 0.0
  %180 = vmatprep.subr.mxu0 0.0
  %181 = vmatpush1.msra.mxu0 0.0
  %182 = vmatprep.subr.mxu0 0.0
  %183 = vmatpush1.msra.mxu0 0.0
  %184 = vmatprep.subr.mxu0 0.0
  %185 = vmatpush1.msra.mxu0 0.0
  %186 = vmatprep.subr.mxu0 0.0
  %187 = vmatpush1.msra.mxu0 0.0
  %188 = vmatprep.subr.mxu0 0.0
  %189 = vmatpush1.msra.mxu0 0.0
  %190 = vmatprep.subr.mxu0 0.0
  %191 = vmatpush1.msra.mxu0 0.0
  %192 = vmatprep.subr.mxu0 0.0
  %193 = vmatpush1.msra.mxu0 0.0
  %194 = vmatprep.subr.mxu0 0.0
  %195 = vmatpush1.msra.mxu0 0.0
  %196 = vmatprep.subr.mxu0 0.0
  %197 = vmatpush1.msra.mxu0 0.0
  %198 = vmatprep.subr.mxu0 0.0
  %199 = vmatpush1.msra.mxu0 0.0
  %200 = vmatprep.subr.mxu0 0.0
  %201 = vmatpush1.msra.mxu0 0.0
  %202 = vmatprep.subr.mxu0 0.0
  %203 = vmatpush1.msra.mxu0 0.0
  %204 = vmatprep.subr.mxu0 0.0
  %205 = vmatpush1.msra.mxu0 0.0
  %206 = vmatprep.subr.mxu0 0.0
  %207 = vmatpush1.msra.mxu0 0.0
  %208 = vmatprep.subr.mxu0 0.0
  %209 = vmatpush1.msra.mxu0 0.0
  %210 = vmatprep.mubr.f32.mxu0 0.0
  %211 = vmatmul.mubr.f32.gmra.mrb[0].mxu0 %v130
  %v212 = vpop.f32.mrb[0].mxu0
  %v213 = vadd.f32 0.0, %v212
  %v214 = vpop.f32.mrb[0].mxu0
  %215 = vmatprep.mubr.f32.mxu0 0.0
  %216 = vmatmul.mubr.f32.gmra.mrb[0].mxu0 %v131
  %v217 = vpop.f32.mrb[0].mxu0
  %v218 = vadd.f32 0.0, %v217
  %v219 = vpop.f32.mrb[0].mxu0
  %220 = vmatprep.mubr.f32.mxu0 0.0
  %221 = vmatmul.mubr.f32.gmra.mrb[0].mxu0 %v132
  %v222 = vpop.f32.mrb[0].mxu0
  %v223 = vadd.f32 0.0, %v222
  %v224 = vpop.f32.mrb[0].mxu0
  %225 = vmatprep.mubr.f32.mxu0 0.0
  %226 = vmatmul.mubr.f32.gmra.mrb[0].mxu0 %v133
  %v227 = vpop.f32.mrb[0].mxu0
  %v228 = vadd.f32 0.0, %v227
  %v229 = vpop.f32.mrb[0].mxu0
  %230 = vmatprep.mubr.f32.mxu0 0.0
  %231 = vmatmul.mubr.f32.gmra.mrb[0].mxu0 %v134
  %v232 = vpop.f32.mrb[0].mxu0
  %v233 = vadd.f32 0.0, %v232
  %v234 = vpop.f32.mrb[0].mxu0
  %235 = vmatprep.mubr.f32.mxu0 0.0
  %236 = vmatmul.mubr.f32.gmra.mrb[0].mxu0 %v135
  %v237 = vpop.f32.mrb[0].mxu0
  %v238 = vadd.f32 0.0, %v237
  %v239 = vpop.f32.mrb[0].mxu0
  %240 = vmatprep.mubr.f32.mxu0 0.0
  %241 = vmatmul.mubr.f32.gmra.mrb[0].mxu0 %v136
  %v242 = vpop.f32.mrb[0].mxu0
  %v243 = vadd.f32 0.0, %v242
  %v244 = vpop.f32.mrb[0].mxu0
  %245 = vmatprep.mubr.f32.mxu0 0.0
  %246 = vmatmul.mubr.f32.gmra.mrb[0].mxu0 %v137
  %v247 = vpop.f32.mrb[0].mxu0
  %v248 = vadd.f32 0.0, %v247
  %v249 = vpop.f32.mrb[0].mxu0
  %250 = vmatprep.mubr.f32.mxu0 0.0
  %251 = vmatmul.mubr.f32.gmra.mrb[0].mxu0 %v138
  %v252 = vpop.f32.mrb[0].mxu0
  %v253 = vadd.f32 0.0, %v252
  %v254 = vpop.f32.mrb[0].mxu0
  %255 = vmatprep.mubr.f32.mxu0 0.0
  %256 = vmatmul.mubr.f32.gmra.mrb[0].mxu0 %v139
  %v257 = vpop.f32.mrb[0].mxu0
  %v258 = vadd.f32 0.0, %v257
  %v259 = vpop.f32.mrb[0].mxu0
  %260 = vmatprep.mubr.f32.mxu0 0.0
  %261 = vmatmul.mubr.f32.gmra.mrb[0].mxu0 %v140
  %v262 = vpop.f32.mrb[0].mxu0
  %v263 = vadd.f32 0.0, %v262
  %v264 = vpop.f32.mrb[0].mxu0
  %265 = vmatprep.mubr.f32.mxu0 0.0
  %266 = vmatmul.mubr.f32.gmra.mrb[0].mxu0 %v141
  %v267 = vpop.f32.mrb[0].mxu0
  %v268 = vadd.f32 0.0, %v267
  %v269 = vpop.f32.mrb[0].mxu0
  %270 = vmatprep.mubr.f32.mxu0 0.0
  %271 = vmatmul.mubr.f32.gmra.mrb[0].mxu0 %v142
  %v272 = vpop.f32.mrb[0].mxu0
  %v273 = vadd.f32 0.0, %v272
  %v274 = vpop.f32.mrb[0].mxu0
  %275 = vmatprep.mubr.f32.mxu0 0.0
  %276 = vmatmul.mubr.f32.gmra.mrb[0].mxu0 %v143
  %v277 = vpop.f32.mrb[0].mxu0
  %v278 = vadd.f32 0.0, %v277
  %v279 = vpop.f32.mrb[0].mxu0
  %280 = vmatprep.mubr.f32.mxu0 0.0
  %281 = vmatmul.mubr.f32.gmra.mrb[0].mxu0 %v144
  %v282 = vpop.f32.mrb[0].mxu0
  %v283 = vadd.f32 0.0, %v282
  %v284 = vpop.f32.mrb[0].mxu0
  %285 = vmatprep.mubr.f32.mxu0 0.0
  %286 = vmatmul.mubr.f32.gmra.mrb[0].mxu0 %v145
  %v287 = vpop.f32.mrb[0].mxu0
  %v288 = vadd.f32 0.0, %v287
  %v289 = vpop.f32.mrb[0].mxu0
  %290 = vdwg.mxu0
  %vm291 = vcmp.ne.f32.partialorder %v213, 0.0
  %vm292 = vcmp.ne.f32.partialorder %v218, 0.0
  %vm293 = vcmp.ne.f32.partialorder %v223, 0.0
  %vm294 = vcmp.ne.f32.partialorder %v228, 0.0
  %vm295 = vcmp.ne.f32.partialorder %v233, 0.0
  %vm296 = vcmp.ne.f32.partialorder %v238, 0.0
  %vm297 = vcmp.ne.f32.partialorder %v243, 0.0
  %vm298 = vcmp.ne.f32.partialorder %v248, 0.0
  %vm299 = vcmp.ne.f32.partialorder %v253, 0.0
  %vm300 = vcmp.ne.f32.partialorder %v258, 0.0
  %vm301 = vcmp.ne.f32.partialorder %v263, 0.0
  %vm302 = vcmp.ne.f32.partialorder %v268, 0.0
  %vm303 = vcmp.ne.f32.partialorder %v273, 0.0
  %vm304 = vcmp.ne.f32.partialorder %v278, 0.0
  %vm305 = vcmp.ne.f32.partialorder %v283, 0.0
  %vm306 = vcmp.ne.f32.partialorder %v288, 0.0
  %v307 = vsel %vm291, 1, 0
  %v308 = vsel %vm292, 1, 0
  %v309 = vsel %vm293, 1, 0
  %v310 = vsel %vm294, 1, 0
  %v311 = vsel %vm295, 1, 0
  %v312 = vsel %vm296, 1, 0
  %v313 = vsel %vm297, 1, 0
  %v314 = vsel %vm298, 1, 0
  %v315 = vsel %vm299, 1, 0
  %v316 = vsel %vm300, 1, 0
  %v317 = vsel %vm301, 1, 0
  %v318 = vsel %vm302, 1, 0
  %v319 = vsel %vm303, 1, 0
  %v320 = vsel %vm304, 1, 0
  %v321 = vsel %vm305, 1, 0
  %v322 = vsel %vm306, 1, 0
  %v323 = vcvt.s32.f32 %v307
  %v324 = vcvt.s32.f32 %v308
  %v325 = vcvt.s32.f32 %v309
  %v326 = vcvt.s32.f32 %v310
  %v327 = vcvt.s32.f32 %v311
  %v328 = vcvt.s32.f32 %v312
  %v329 = vcvt.s32.f32 %v313
  %v330 = vcvt.s32.f32 %v314
  %v331 = vcvt.s32.f32 %v315
  %v332 = vcvt.s32.f32 %v316
  %v333 = vcvt.s32.f32 %v317
  %v334 = vcvt.s32.f32 %v318
  %v335 = vcvt.s32.f32 %v319
  %v336 = vcvt.s32.f32 %v320
  %v337 = vcvt.s32.f32 %v321
  %v338 = vcvt.s32.f32 %v322
  %339 = vmatprep.subr.mxu0 0.0
  %340 = vmatpush1.msra.mxu0 %v323
  %341 = vmatprep.subr.mxu0 0.0
  %342 = vmatpush1.msra.mxu0 %v324
  %343 = vmatprep.subr.mxu0 0.0
  %344 = vmatpush1.msra.mxu0 %v325
  %345 = vmatprep.subr.mxu0 0.0
  %346 = vmatpush1.msra.mxu0 %v326
  %347 = vmatprep.subr.mxu0 0.0
  %348 = vmatpush1.msra.mxu0 %v327
  %349 = vmatprep.subr.mxu0 0.0
  %350 = vmatpush1.msra.mxu0 %v328
  %351 = vmatprep.subr.mxu0 0.0
  %352 = vmatpush1.msra.mxu0 %v329
  %353 = vmatprep.subr.mxu0 0.0
  %354 = vmatpush1.msra.mxu0 %v330
  %355 = vmatprep.subr.mxu0 0.0
  %356 = vmatpush1.msra.mxu0 %v331
  %357 = vmatprep.subr.mxu0 0.0
  %358 = vmatpush1.msra.mxu0 %v332
  %359 = vmatprep.subr.mxu0 0.0
  %360 = vmatpush1.msra.mxu0 %v333
  %361 = vmatprep.subr.mxu0 0.0
  %362 = vmatpush1.msra.mxu0 %v334
  %363 = vmatprep.subr.mxu0 0.0
  %364 = vmatpush1.msra.mxu0 %v335
  %365 = vmatprep.subr.mxu0 0.0
  %366 = vmatpush1.msra.mxu0 %v336
  %367 = vmatprep.subr.mxu0 0.0
  %368 = vmatpush1.msra.mxu0 %v337
  %369 = vmatprep.subr.mxu0 0.0
  %370 = vmatpush1.msra.mxu0 %v338
  %371 = vmatprep.subr.mxu0 0.0
  %372 = vmatpush1.msra.mxu0 0.0
  %373 = vmatprep.subr.mxu0 0.0
  %374 = vmatpush1.msra.mxu0 0.0
  %375 = vmatprep.subr.mxu0 0.0
  %376 = vmatpush1.msra.mxu0 0.0
  %377 = vmatprep.subr.mxu0 0.0
  %378 = vmatpush1.msra.mxu0 0.0
  %379 = vmatprep.subr.mxu0 0.0
  %380 = vmatpush1.msra.mxu0 0.0
  %381 = vmatprep.subr.mxu0 0.0
  %382 = vmatpush1.msra.mxu0 0.0
  %383 = vmatprep.subr.mxu0 0.0
  %384 = vmatpush1.msra.mxu0 0.0
  %385 = vmatprep.subr.mxu0 0.0
  %386 = vmatpush1.msra.mxu0 0.0
  %387 = vmatprep.subr.mxu0 0.0
  %388 = vmatpush1.msra.mxu0 0.0
  %389 = vmatprep.subr.mxu0 0.0
  %390 = vmatpush1.msra.mxu0 0.0
  %391 = vmatprep.subr.mxu0 0.0
  %392 = vmatpush1.msra.mxu0 0.0
  %393 = vmatprep.subr.mxu0 0.0
  %394 = vmatpush1.msra.mxu0 0.0
  %395 = vmatprep.subr.mxu0 0.0
  %396 = vmatpush1.msra.mxu0 0.0
  %397 = vmatprep.subr.mxu0 0.0
  %398 = vmatpush1.msra.mxu0 0.0
  %399 = vmatprep.subr.mxu0 0.0
  %400 = vmatpush1.msra.mxu0 0.0
  %401 = vmatprep.subr.mxu0 0.0
  %402 = vmatpush1.msra.mxu0 0.0
  %403 = vmatprep.mubr.f32.mxu0 0.0
  %404 = vmatmul.mubr.f32.gmra.mrb[0].mxu0 %v66
  %v405 = vpop.f32.mrb[0].mxu0
  %v406 = vadd.f32 0.0, %v405
  %v407 = vpop.f32.mrb[0].mxu0
  %408 = vmatprep.mubr.f32.mxu0 0.0
  %409 = vmatmul.mubr.f32.gmra.mrb[0].mxu0 %v67
  %v410 = vpop.f32.mrb[0].mxu0
  %v411 = vadd.f32 0.0, %v410
  %v412 = vpop.f32.mrb[0].mxu0
  %413 = vmatprep.mubr.f32.mxu0 0.0
  %414 = vmatmul.mubr.f32.gmra.mrb[0].mxu0 %v68
  %v415 = vpop.f32.mrb[0].mxu0
  %v416 = vadd.f32 0.0, %v415
  %v417 = vpop.f32.mrb[0].mxu0
  %418 = vmatprep.mubr.f32.mxu0 0.0
  %419 = vmatmul.mubr.f32.gmra.mrb[0].mxu0 %v69
  %v420 = vpop.f32.mrb[0].mxu0
  %v421 = vadd.f32 0.0, %v420
  %v422 = vpop.f32.mrb[0].mxu0
  %423 = vmatprep.mubr.f32.mxu0 0.0
  %424 = vmatmul.mubr.f32.gmra.mrb[0].mxu0 %v70
  %v425 = vpop.f32.mrb[0].mxu0
  %v426 = vadd.f32 0.0, %v425
  %v427 = vpop.f32.mrb[0].mxu0
  %428 = vmatprep.mubr.f32.mxu0 0.0
  %429 = vmatmul.mubr.f32.gmra.mrb[0].mxu0 %v71
  %v430 = vpop.f32.mrb[0].mxu0
  %v431 = vadd.f32 0.0, %v430
  %v432 = vpop.f32.mrb[0].mxu0
  %433 = vmatprep.mubr.f32.mxu0 0.0
  %434 = vmatmul.mubr.f32.gmra.mrb[0].mxu0 %v72
  %v435 = vpop.f32.mrb[0].mxu0
  %v436 = vadd.f32 0.0, %v435
  %v437 = vpop.f32.mrb[0].mxu0
  %438 = vmatprep.mubr.f32.mxu0 0.0
  %439 = vmatmul.mubr.f32.gmra.mrb[0].mxu0 %v73
  %v440 = vpop.f32.mrb[0].mxu0
  %v441 = vadd.f32 0.0, %v440
  %v442 = vpop.f32.mrb[0].mxu0
  %443 = vmatprep.mubr.f32.mxu0 0.0
  %444 = vmatmul.mubr.f32.gmra.mrb[0].mxu0 %v74
  %v445 = vpop.f32.mrb[0].mxu0
  %v446 = vadd.f32 0.0, %v445
  %v447 = vpop.f32.mrb[0].mxu0
  %448 = vmatprep.mubr.f32.mxu0 0.0
  %449 = vmatmul.mubr.f32.gmra.mrb[0].mxu0 %v75
  %v450 = vpop.f32.mrb[0].mxu0
  %v451 = vadd.f32 0.0, %v450
  %v452 = vpop.f32.mrb[0].mxu0
  %453 = vmatprep.mubr.f32.mxu0 0.0
  %454 = vmatmul.mubr.f32.gmra.mrb[0].mxu0 %v76
  %v455 = vpop.f32.mrb[0].mxu0
  %v456 = vadd.f32 0.0, %v455
  %v457 = vpop.f32.mrb[0].mxu0
  %458 = vmatprep.mubr.f32.mxu0 0.0
  %459 = vmatmul.mubr.f32.gmra.mrb[0].mxu0 %v77
  %v460 = vpop.f32.mrb[0].mxu0
  %v461 = vadd.f32 0.0, %v460
  %v462 = vpop.f32.mrb[0].mxu0
  %463 = vmatprep.mubr.f32.mxu0 0.0
  %464 = vmatmul.mubr.f32.gmra.mrb[0].mxu0 %v78
  %v465 = vpop.f32.mrb[0].mxu0
  %v466 = vadd.f32 0.0, %v465
  %v467 = vpop.f32.mrb[0].mxu0
  %468 = vmatprep.mubr.f32.mxu0 0.0
  %469 = vmatmul.mubr.f32.gmra.mrb[0].mxu0 %v79
  %v470 = vpop.f32.mrb[0].mxu0
  %v471 = vadd.f32 0.0, %v470
  %v472 = vpop.f32.mrb[0].mxu0
  %473 = vmatprep.mubr.f32.mxu0 0.0
  %474 = vmatmul.mubr.f32.gmra.mrb[0].mxu0 %v80
  %v475 = vpop.f32.mrb[0].mxu0
  %v476 = vadd.f32 0.0, %v475
  %v477 = vpop.f32.mrb[0].mxu0
  %478 = vmatprep.mubr.f32.mxu0 0.0
  %479 = vmatmul.mubr.f32.gmra.mrb[0].mxu0 %v81
  %v480 = vpop.f32.mrb[0].mxu0
  %v481 = vadd.f32 0.0, %v480
  %v482 = vpop.f32.mrb[0].mxu0
  %483 = vdwg.mxu0
  %484 = vmatprep.subr.mxu0 0.0
  %485 = vmatpush1.xpose.msra.mxu0 %v66
  %486 = vmatprep.subr.mxu0 0.0
  %487 = vmatpush1.xpose.msra.mxu0 %v67
  %488 = vmatprep.subr.mxu0 0.0
  %489 = vmatpush1.xpose.msra.mxu0 %v68
  %490 = vmatprep.subr.mxu0 0.0
  %491 = vmatpush1.xpose.msra.mxu0 %v69
  %492 = vmatprep.subr.mxu0 0.0
  %493 = vmatpush1.xpose.msra.mxu0 %v70
  %494 = vmatprep.subr.mxu0 0.0
  %495 = vmatpush1.xpose.msra.mxu0 %v71
  %496 = vmatprep.subr.mxu0 0.0
  %497 = vmatpush1.xpose.msra.mxu0 %v72
  %498 = vmatprep.subr.mxu0 0.0
  %499 = vmatpush1.xpose.msra.mxu0 %v73
  %500 = vmatprep.subr.mxu0 0.0
  %501 = vmatpush1.xpose.msra.mxu0 %v74
  %502 = vmatprep.subr.mxu0 0.0
  %503 = vmatpush1.xpose.msra.mxu0 %v75
  %504 = vmatprep.subr.mxu0 0.0
  %505 = vmatpush1.xpose.msra.mxu0 %v76
  %506 = vmatprep.subr.mxu0 0.0
  %507 = vmatpush1.xpose.msra.mxu0 %v77
  %508 = vmatprep.subr.mxu0 0.0
  %509 = vmatpush1.xpose.msra.mxu0 %v78
  %510 = vmatprep.subr.mxu0 0.0
  %511 = vmatpush1.xpose.msra.mxu0 %v79
  %512 = vmatprep.subr.mxu0 0.0
  %513 = vmatpush1.xpose.msra.mxu0 %v80
  %514 = vmatprep.subr.mxu0 0.0
  %515 = vmatpush1.xpose.msra.mxu0 %v81
  %516 = vmatprep.subr.mxu0 0.0
  %517 = vmatpush1.xpose.msra.mxu0 0.0
  %518 = vmatprep.subr.mxu0 0.0
  %519 = vmatpush1.xpose.msra.mxu0 0.0
  %520 = vmatprep.subr.mxu0 0.0
  %521 = vmatpush1.xpose.msra.mxu0 0.0
  %522 = vmatprep.subr.mxu0 0.0
  %523 = vmatpush1.xpose.msra.mxu0 0.0
  %524 = vmatprep.subr.mxu0 0.0
  %525 = vmatpush1.xpose.msra.mxu0 0.0
  %526 = vmatprep.subr.mxu0 0.0
  %527 = vmatpush1.xpose.msra.mxu0 0.0
  %528 = vmatprep.subr.mxu0 0.0
  %529 = vmatpush1.xpose.msra.mxu0 0.0
  %530 = vmatprep.subr.mxu0 0.0
  %531 = vmatpush1.xpose.msra.mxu0 0.0
  %532 = vmatprep.subr.mxu0 0.0
  %533 = vmatpush1.xpose.msra.mxu0 0.0
  %534 = vmatprep.subr.mxu0 0.0
  %535 = vmatpush1.xpose.msra.mxu0 0.0
  %536 = vmatprep.subr.mxu0 0.0
  %537 = vmatpush1.xpose.msra.mxu0 0.0
  %538 = vmatprep.subr.mxu0 0.0
  %539 = vmatpush1.xpose.msra.mxu0 0.0
  %540 = vmatprep.subr.mxu0 0.0
  %541 = vmatpush1.xpose.msra.mxu0 0.0
  %542 = vmatprep.subr.mxu0 0.0
  %543 = vmatpush1.xpose.msra.mxu0 0.0
  %544 = vmatprep.subr.mxu0 0.0
  %545 = vmatpush1.xpose.msra.mxu0 0.0
  %546 = vmatprep.subr.mxu0 0.0
  %547 = vmatpush1.xpose.msra.mxu0 0.0
  %548 = vmatprep.mubr.f32.mxu0 0.0
  %549 = vmatmul.mubr.f32.gmra.mrb[0].mxu0 %v406
  %v550 = vpop.f32.mrb[0].mxu0
  %v551 = vadd.f32 0.0, %v550
  %v552 = vpop.f32.mrb[0].mxu0
  %553 = vmatprep.mubr.f32.mxu0 0.0
  %554 = vmatmul.mubr.f32.gmra.mrb[0].mxu0 %v411
  %v555 = vpop.f32.mrb[0].mxu0
  %v556 = vadd.f32 0.0, %v555
  %v557 = vpop.f32.mrb[0].mxu0
  %558 = vmatprep.mubr.f32.mxu0 0.0
  %559 = vmatmul.mubr.f32.gmra.mrb[0].mxu0 %v416
  %v560 = vpop.f32.mrb[0].mxu0
  %v561 = vadd.f32 0.0, %v560
  %v562 = vpop.f32.mrb[0].mxu0
  %563 = vmatprep.mubr.f32.mxu0 0.0
  %564 = vmatmul.mubr.f32.gmra.mrb[0].mxu0 %v421
  %v565 = vpop.f32.mrb[0].mxu0
  %v566 = vadd.f32 0.0, %v565
  %v567 = vpop.f32.mrb[0].mxu0
  %568 = vmatprep.mubr.f32.mxu0 0.0
  %569 = vmatmul.mubr.f32.gmra.mrb[0].mxu0 %v426
  %v570 = vpop.f32.mrb[0].mxu0
  %v571 = vadd.f32 0.0, %v570
  %v572 = vpop.f32.mrb[0].mxu0
  %573 = vmatprep.mubr.f32.mxu0 0.0
  %574 = vmatmul.mubr.f32.gmra.mrb[0].mxu0 %v431
  %v575 = vpop.f32.mrb[0].mxu0
  %v576 = vadd.f32 0.0, %v575
  %v577 = vpop.f32.mrb[0].mxu0
  %578 = vmatprep.mubr.f32.mxu0 0.0
  %579 = vmatmul.mubr.f32.gmra.mrb[0].mxu0 %v436
  %v580 = vpop.f32.mrb[0].mxu0
  %v581 = vadd.f32 0.0, %v580
  %v582 = vpop.f32.mrb[0].mxu0
  %583 = vmatprep.mubr.f32.mxu0 0.0
  %584 = vmatmul.mubr.f32.gmra.mrb[0].mxu0 %v441
  %v585 = vpop.f32.mrb[0].mxu0
  %v586 = vadd.f32 0.0, %v585
  %v587 = vpop.f32.mrb[0].mxu0
  %588 = vmatprep.mubr.f32.mxu0 0.0
  %589 = vmatmul.mubr.f32.gmra.mrb[0].mxu0 %v446
  %v590 = vpop.f32.mrb[0].mxu0
  %v591 = vadd.f32 0.0, %v590
  %v592 = vpop.f32.mrb[0].mxu0
  %593 = vmatprep.mubr.f32.mxu0 0.0
  %594 = vmatmul.mubr.f32.gmra.mrb[0].mxu0 %v451
  %v595 = vpop.f32.mrb[0].mxu0
  %v596 = vadd.f32 0.0, %v595
  %v597 = vpop.f32.mrb[0].mxu0
  %598 = vmatprep.mubr.f32.mxu0 0.0
  %599 = vmatmul.mubr.f32.gmra.mrb[0].mxu0 %v456
  %v600 = vpop.f32.mrb[0].mxu0
  %v601 = vadd.f32 0.0, %v600
  %v602 = vpop.f32.mrb[0].mxu0
  %603 = vmatprep.mubr.f32.mxu0 0.0
  %604 = vmatmul.mubr.f32.gmra.mrb[0].mxu0 %v461
  %v605 = vpop.f32.mrb[0].mxu0
  %v606 = vadd.f32 0.0, %v605
  %v607 = vpop.f32.mrb[0].mxu0
  %608 = vmatprep.mubr.f32.mxu0 0.0
  %609 = vmatmul.mubr.f32.gmra.mrb[0].mxu0 %v466
  %v610 = vpop.f32.mrb[0].mxu0
  %v611 = vadd.f32 0.0, %v610
  %v612 = vpop.f32.mrb[0].mxu0
  %613 = vmatprep.mubr.f32.mxu0 0.0
  %614 = vmatmul.mubr.f32.gmra.mrb[0].mxu0 %v471
  %v615 = vpop.f32.mrb[0].mxu0
  %v616 = vadd.f32 0.0, %v615
  %v617 = vpop.f32.mrb[0].mxu0
  %618 = vmatprep.mubr.f32.mxu0 0.0
  %619 = vmatmul.mubr.f32.gmra.mrb[0].mxu0 %v476
  %v620 = vpop.f32.mrb[0].mxu0
  %v621 = vadd.f32 0.0, %v620
  %v622 = vpop.f32.mrb[0].mxu0
  %623 = vmatprep.mubr.f32.mxu0 0.0
  %624 = vmatmul.mubr.f32.gmra.mrb[0].mxu0 %v481
  %v625 = vpop.f32.mrb[0].mxu0
  %v626 = vadd.f32 0.0, %v625
  %v627 = vpop.f32.mrb[0].mxu0
  %628 = vdwg.mxu0
  %629 = vadd.xlane.f32.xlu0 %v551
  %v630 = vpop.xlane.xlu0 %629
  %631 = vadd.xlane.f32.xlu0 %v556
  %v632 = vpop.xlane.xlu0 %631
  %633 = vadd.xlane.f32.xlu0 %v561
  %v634 = vpop.xlane.xlu0 %633
  %635 = vadd.xlane.f32.xlu0 %v566
  %v636 = vpop.xlane.xlu0 %635
  %637 = vadd.xlane.f32.xlu0 %v571
  %v638 = vpop.xlane.xlu0 %637
  %639 = vadd.xlane.f32.xlu0 %v576
  %v640 = vpop.xlane.xlu0 %639
  %641 = vadd.xlane.f32.xlu0 %v581
  %v642 = vpop.xlane.xlu0 %641
  %643 = vadd.xlane.f32.xlu0 %v586
  %v644 = vpop.xlane.xlu0 %643
  %645 = vadd.xlane.f32.xlu0 %v591
  %v646 = vpop.xlane.xlu0 %645
  %647 = vadd.xlane.f32.xlu0 %v596
  %v648 = vpop.xlane.xlu0 %647
  %649 = vadd.xlane.f32.xlu0 %v601
  %v650 = vpop.xlane.xlu0 %649
  %651 = vadd.xlane.f32.xlu0 %v606
  %v652 = vpop.xlane.xlu0 %651
  %653 = vadd.xlane.f32.xlu0 %v611
  %v654 = vpop.xlane.xlu0 %653
  %655 = vadd.xlane.f32.xlu0 %v616
  %v656 = vpop.xlane.xlu0 %655
  %657 = vadd.xlane.f32.xlu0 %v621
  %v658 = vpop.xlane.xlu0 %657
  %659 = vadd.xlane.f32.xlu0 %v626
  %v660 = vpop.xlane.xlu0 %659
  %v661 = vrcp.pop %v630
  %v662 = vrcp.pop %v632
  %v663 = vrcp.pop %v634
  %v664 = vrcp.pop %v636
  %v665 = vrcp.pop %v638
  %v666 = vrcp.pop %v640
  %v667 = vrcp.pop %v642
  %v668 = vrcp.pop %v644
  %v669 = vrcp.pop %v646
  %v670 = vrcp.pop %v648
  %v671 = vrcp.pop %v650
  %v672 = vrcp.pop %v652
  %v673 = vrcp.pop %v654
  %v674 = vrcp.pop %v656
  %v675 = vrcp.pop %v658
  %v676 = vrcp.pop %v660
  %v693 = vlaneseq
  %v694 = vand.u32 %v693, 127
  %v695 = vlaneseq
  %v696 = vshrl.u32 %v695, 7
  %v697 = vsub.s32 %v694, %v696
  %v698 = vrot.slane %v661, %v697
  %v699 = vadd.s32 %v694, 4294967288
  %v700 = vlaneseq
  %v701 = vshrl.u32 %v700, 7
  %v702 = vsub.s32 %v699, %v701
  %v703 = vrot.slane %v662, %v702
  %vm704 = vcmask 130112
  %v705 = vsel %vm704, %v703, %v698
  %v706 = vadd.s32 %v694, 4294967280
  %v707 = vlaneseq
  %v708 = vshrl.u32 %v707, 7
  %v709 = vsub.s32 %v706, %v708
  %v710 = vrot.slane %v663, %v709
  %vm711 = vcmask 195712
  %v712 = vsel %vm711, %v710, %v705
  %v713 = vadd.s32 %v694, 4294967272
  %v714 = vlaneseq
  %v715 = vshrl.u32 %v714, 7
  %v716 = vsub.s32 %v713, %v715
  %v717 = vrot.slane %v664, %v716
  %vm718 = vcmask 261312
  %v719 = vsel %vm718, %v717, %v712
  %v720 = vadd.s32 %v694, 4294967264
  %v721 = vlaneseq
  %v722 = vshrl.u32 %v721, 7
  %v723 = vsub.s32 %v720, %v722
  %v724 = vrot.slane %v665, %v723
  %vm725 = vcmask 326912
  %v726 = vsel %vm725, %v724, %v719
  %v727 = vadd.s32 %v694, 4294967256
  %v728 = vlaneseq
  %v729 = vshrl.u32 %v728, 7
  %v730 = vsub.s32 %v727, %v729
  %v731 = vrot.slane %v666, %v730
  %vm732 = vcmask 392512
  %v733 = vsel %vm732, %v731, %v726
  %v734 = vadd.s32 %v694, 4294967248
  %v735 = vlaneseq
  %v736 = vshrl.u32 %v735, 7
  %v737 = vsub.s32 %v734, %v736
  %v738 = vrot.slane %v667, %v737
  %vm739 = vcmask 458112
  %v740 = vsel %vm739, %v738, %v733
  %v741 = vadd.s32 %v694, 4294967240
  %v742 = vlaneseq
  %v743 = vshrl.u32 %v742, 7
  %v744 = vsub.s32 %v741, %v743
  %v745 = vrot.slane %v668, %v744
  %vm746 = vcmask 523712
  %v747 = vsel %vm746, %v745, %v740
  %v748 = vadd.s32 %v694, 4294967232
  %v749 = vlaneseq
  %v750 = vshrl.u32 %v749, 7
  %v751 = vsub.s32 %v748, %v750
  %v752 = vrot.slane %v669, %v751
  %vm753 = vcmask 589312
  %v754 = vsel %vm753, %v752, %v747
  %v755 = vadd.s32 %v694, 4294967224
  %v756 = vlaneseq
  %v757 = vshrl.u32 %v756, 7
  %v758 = vsub.s32 %v755, %v757
  %v759 = vrot.slane %v670, %v758
  %vm760 = vcmask 654912
  %v761 = vsel %vm760, %v759, %v754
  %v762 = vadd.s32 %v694, 4294967216
  %v763 = vlaneseq
  %v764 = vshrl.u32 %v763, 7
  %v765 = vsub.s32 %v762, %v764
  %v766 = vrot.slane %v671, %v765
  %vm767 = vcmask 720512
  %v768 = vsel %vm767, %v766, %v761
  %v769 = vadd.s32 %v694, 4294967208
  %v770 = vlaneseq
  %v771 = vshrl.u32 %v770, 7
  %v772 = vsub.s32 %v769, %v771
  %v773 = vrot.slane %v672, %v772
  %vm774 = vcmask 786112
  %v775 = vsel %vm774, %v773, %v768
  %v776 = vadd.s32 %v694, 4294967200
  %v777 = vlaneseq
  %v778 = vshrl.u32 %v777, 7
  %v779 = vsub.s32 %v776, %v778
  %v780 = vrot.slane %v673, %v779
  %vm781 = vcmask 851712
  %v782 = vsel %vm781, %v780, %v775
  %v783 = vadd.s32 %v694, 4294967192
  %v784 = vlaneseq
  %v785 = vshrl.u32 %v784, 7
  %v786 = vsub.s32 %v783, %v785
  %v787 = vrot.slane %v674, %v786
  %vm788 = vcmask 917312
  %v789 = vsel %vm788, %v787, %v782
  %v790 = vadd.s32 %v694, 4294967184
  %v791 = vlaneseq
  %v792 = vshrl.u32 %v791, 7
  %v793 = vsub.s32 %v790, %v792
  %v794 = vrot.slane %v675, %v793
  %vm795 = vcmask 982912
  %v796 = vsel %vm795, %v794, %v789
  %v797 = vadd.s32 %v694, 4294967176
  %v798 = vlaneseq
  %v799 = vshrl.u32 %v798, 7
  %v800 = vsub.s32 %v797, %v799
  %v801 = vrot.slane %v676, %v800
  %vm802 = vcmask 1048512
  %v803 = vsel %vm802, %v801, %v796
  %vm804 = vcmask 1042434
  %v805 = vsel %vm804, %v803, %v803
  %vm806 = vcmask 1043459
  %v807 = vsel %vm806, %v803, %v805
  %vm808 = vcmask 1044484
  %v809 = vsel %vm808, %v803, %v807
  %vm810 = vcmask 1045509
  %v811 = vsel %vm810, %v803, %v809
  %vm812 = vcmask 1046534
  %v813 = vsel %vm812, %v803, %v811
  %vm814 = vcmask 1047559
  %v815 = vsel %vm814, %v803, %v813
  %v817 = vmul.f32 %v551, %v815
  %v818 = vmul.f32 %v556, %v815
  %v819 = vmul.f32 %v561, %v815
  %v820 = vmul.f32 %v566, %v815
  %v821 = vmul.f32 %v571, %v815
  %v822 = vmul.f32 %v576, %v815
  %v823 = vmul.f32 %v581, %v815
  %v824 = vmul.f32 %v586, %v815
  %v825 = vmul.f32 %v591, %v815
  %v826 = vmul.f32 %v596, %v815
  %v827 = vmul.f32 %v601, %v815
  %v828 = vmul.f32 %v606, %v815
  %v829 = vmul.f32 %v611, %v815
  %v830 = vmul.f32 %v616, %v815
  %v831 = vmul.f32 %v621, %v815
  %v832 = vmul.f32 %v626, %v815
  %833 = vmatprep.subr.mxu0 0.0
  %834 = vmatpush1.msra.mxu0 %v50
  %835 = vmatprep.subr.mxu0 0.0
  %836 = vmatpush1.msra.mxu0 %v51
  %837 = vmatprep.subr.mxu0 0.0
  %838 = vmatpush1.msra.mxu0 %v52
  %839 = vmatprep.subr.mxu0 0.0
  %840 = vmatpush1.msra.mxu0 %v53
  %841 = vmatprep.subr.mxu0 0.0
  %842 = vmatpush1.msra.mxu0 %v54
  %843 = vmatprep.subr.mxu0 0.0
  %844 = vmatpush1.msra.mxu0 %v55
  %845 = vmatprep.subr.mxu0 0.0
  %846 = vmatpush1.msra.mxu0 %v56
  %847 = vmatprep.subr.mxu0 0.0
  %848 = vmatpush1.msra.mxu0 %v57
  %849 = vmatprep.subr.mxu0 0.0
  %850 = vmatpush1.msra.mxu0 %v58
  %851 = vmatprep.subr.mxu0 0.0
  %852 = vmatpush1.msra.mxu0 %v59
  %853 = vmatprep.subr.mxu0 0.0
  %854 = vmatpush1.msra.mxu0 %v60
  %855 = vmatprep.subr.mxu0 0.0
  %856 = vmatpush1.msra.mxu0 %v61
  %857 = vmatprep.subr.mxu0 0.0
  %858 = vmatpush1.msra.mxu0 %v62
  %859 = vmatprep.subr.mxu0 0.0
  %860 = vmatpush1.msra.mxu0 %v63
  %861 = vmatprep.subr.mxu0 0.0
  %862 = vmatpush1.msra.mxu0 %v64
  %863 = vmatprep.subr.mxu0 0.0
  %864 = vmatpush1.msra.mxu0 %v65
  %865 = vmatprep.subr.mxu0 0.0
  %866 = vmatpush1.msra.mxu0 0.0
  %867 = vmatprep.subr.mxu0 0.0
  %868 = vmatpush1.msra.mxu0 0.0
  %869 = vmatprep.subr.mxu0 0.0
  %870 = vmatpush1.msra.mxu0 0.0
  %871 = vmatprep.subr.mxu0 0.0
  %872 = vmatpush1.msra.mxu0 0.0
  %873 = vmatprep.subr.mxu0 0.0
  %874 = vmatpush1.msra.mxu0 0.0
  %875 = vmatprep.subr.mxu0 0.0
  %876 = vmatpush1.msra.mxu0 0.0
  %877 = vmatprep.subr.mxu0 0.0
  %878 = vmatpush1.msra.mxu0 0.0
  %879 = vmatprep.subr.mxu0 0.0
  %880 = vmatpush1.msra.mxu0 0.0
  %881 = vmatprep.subr.mxu0 0.0
  %882 = vmatpush1.msra.mxu0 0.0
  %883 = vmatprep.subr.mxu0 0.0
  %884 = vmatpush1.msra.mxu0 0.0
  %885 = vmatprep.subr.mxu0 0.0
  %886 = vmatpush1.msra.mxu0 0.0
  %887 = vmatprep.subr.mxu0 0.0
  %888 = vmatpush1.msra.mxu0 0.0
  %889 = vmatprep.subr.mxu0 0.0
  %890 = vmatpush1.msra.mxu0 0.0
  %891 = vmatprep.subr.mxu0 0.0
  %892 = vmatpush1.msra.mxu0 0.0
  %893 = vmatprep.subr.mxu0 0.0
  %894 = vmatpush1.msra.mxu0 0.0
  %895 = vmatprep.subr.mxu0 0.0
  %896 = vmatpush1.msra.mxu0 0.0
  %897 = vmatprep.mubr.f32.mxu0 0.0
  %898 = vmatmul.mubr.f32.gmra.mrb[0].mxu0 %v66
  %v899 = vpop.f32.mrb[0].mxu0
  %v900 = vadd.f32 0.0, %v899
  %v901 = vpop.f32.mrb[0].mxu0
  %902 = vmatprep.mubr.f32.mxu0 0.0
  %903 = vmatmul.mubr.f32.gmra.mrb[0].mxu0 %v67
  %v904 = vpop.f32.mrb[0].mxu0
  %v905 = vadd.f32 0.0, %v904
  %v906 = vpop.f32.mrb[0].mxu0
  %907 = vmatprep.mubr.f32.mxu0 0.0
  %908 = vmatmul.mubr.f32.gmra.mrb[0].mxu0 %v68
  %v909 = vpop.f32.mrb[0].mxu0
  %v910 = vadd.f32 0.0, %v909
  %v911 = vpop.f32.mrb[0].mxu0
  %912 = vmatprep.mubr.f32.mxu0 0.0
  %913 = vmatmul.mubr.f32.gmra.mrb[0].mxu0 %v69
  %v914 = vpop.f32.mrb[0].mxu0
  %v915 = vadd.f32 0.0, %v914
  %v916 = vpop.f32.mrb[0].mxu0
  %917 = vmatprep.mubr.f32.mxu0 0.0
  %918 = vmatmul.mubr.f32.gmra.mrb[0].mxu0 %v70
  %v919 = vpop.f32.mrb[0].mxu0
  %v920 = vadd.f32 0.0, %v919
  %v921 = vpop.f32.mrb[0].mxu0
  %922 = vmatprep.mubr.f32.mxu0 0.0
  %923 = vmatmul.mubr.f32.gmra.mrb[0].mxu0 %v71
  %v924 = vpop.f32.mrb[0].mxu0
  %v925 = vadd.f32 0.0, %v924
  %v926 = vpop.f32.mrb[0].mxu0
  %927 = vmatprep.mubr.f32.mxu0 0.0
  %928 = vmatmul.mubr.f32.gmra.mrb[0].mxu0 %v72
  %v929 = vpop.f32.mrb[0].mxu0
  %v930 = vadd.f32 0.0, %v929
  %v931 = vpop.f32.mrb[0].mxu0
  %932 = vmatprep.mubr.f32.mxu0 0.0
  %933 = vmatmul.mubr.f32.gmra.mrb[0].mxu0 %v73
  %v934 = vpop.f32.mrb[0].mxu0
  %v935 = vadd.f32 0.0, %v934
  %v936 = vpop.f32.mrb[0].mxu0
  %937 = vmatprep.mubr.f32.mxu0 0.0
  %938 = vmatmul.mubr.f32.gmra.mrb[0].mxu0 %v74
  %v939 = vpop.f32.mrb[0].mxu0
  %v940 = vadd.f32 0.0, %v939
  %v941 = vpop.f32.mrb[0].mxu0
  %942 = vmatprep.mubr.f32.mxu0 0.0
  %943 = vmatmul.mubr.f32.gmra.mrb[0].mxu0 %v75
  %v944 = vpop.f32.mrb[0].mxu0
  %v945 = vadd.f32 0.0, %v944
  %v946 = vpop.f32.mrb[0].mxu0
  %947 = vmatprep.mubr.f32.mxu0 0.0
  %948 = vmatmul.mubr.f32.gmra.mrb[0].mxu0 %v76
  %v949 = vpop.f32.mrb[0].mxu0
  %v950 = vadd.f32 0.0, %v949
  %v951 = vpop.f32.mrb[0].mxu0
  %952 = vmatprep.mubr.f32.mxu0 0.0
  %953 = vmatmul.mubr.f32.gmra.mrb[0].mxu0 %v77
  %v954 = vpop.f32.mrb[0].mxu0
  %v955 = vadd.f32 0.0, %v954
  %v956 = vpop.f32.mrb[0].mxu0
  %957 = vmatprep.mubr.f32.mxu0 0.0
  %958 = vmatmul.mubr.f32.gmra.mrb[0].mxu0 %v78
  %v959 = vpop.f32.mrb[0].mxu0
  %v960 = vadd.f32 0.0, %v959
  %v961 = vpop.f32.mrb[0].mxu0
  %962 = vmatprep.mubr.f32.mxu0 0.0
  %963 = vmatmul.mubr.f32.gmra.mrb[0].mxu0 %v79
  %v964 = vpop.f32.mrb[0].mxu0
  %v965 = vadd.f32 0.0, %v964
  %v966 = vpop.f32.mrb[0].mxu0
  %967 = vmatprep.mubr.f32.mxu0 0.0
  %968 = vmatmul.mubr.f32.gmra.mrb[0].mxu0 %v80
  %v969 = vpop.f32.mrb[0].mxu0
  %v970 = vadd.f32 0.0, %v969
  %v971 = vpop.f32.mrb[0].mxu0
  %972 = vmatprep.mubr.f32.mxu0 0.0
  %973 = vmatmul.mubr.f32.gmra.mrb[0].mxu0 %v81
  %v974 = vpop.f32.mrb[0].mxu0
  %v975 = vadd.f32 0.0, %v974
  %v976 = vpop.f32.mrb[0].mxu0
  %977 = vdwg.mxu0
  %979 = vset.pattern.permute.xlu0 0
  %980 = vperm.xlu0 %979, %v82
  %v981 = vpop.permute.xlu0 %980
  %984 = vset.pattern.permute.xlu0 0
  %985 = vperm.xlu0 %984, %v83
  %v986 = vpop.permute.xlu0 %985
  %989 = vset.pattern.permute.xlu0 0
  %990 = vperm.xlu0 %989, %v84
  %v991 = vpop.permute.xlu0 %990
  %994 = vset.pattern.permute.xlu0 0
  %995 = vperm.xlu0 %994, %v85
  %v996 = vpop.permute.xlu0 %995
  %999 = vset.pattern.permute.xlu0 0
  %1000 = vperm.xlu0 %999, %v86
  %v1001 = vpop.permute.xlu0 %1000
  %1004 = vset.pattern.permute.xlu0 0
  %1005 = vperm.xlu0 %1004, %v87
  %v1006 = vpop.permute.xlu0 %1005
  %1009 = vset.pattern.permute.xlu0 0
  %1010 = vperm.xlu0 %1009, %v88
  %v1011 = vpop.permute.xlu0 %1010
  %1014 = vset.pattern.permute.xlu0 0
  %1015 = vperm.xlu0 %1014, %v89
  %v1016 = vpop.permute.xlu0 %1015
  %1019 = vset.pattern.permute.xlu0 0
  %1020 = vperm.xlu0 %1019, %v90
  %v1021 = vpop.permute.xlu0 %1020
  %1024 = vset.pattern.permute.xlu0 0
  %1025 = vperm.xlu0 %1024, %v91
  %v1026 = vpop.permute.xlu0 %1025
  %1029 = vset.pattern.permute.xlu0 0
  %1030 = vperm.xlu0 %1029, %v92
  %v1031 = vpop.permute.xlu0 %1030
  %1034 = vset.pattern.permute.xlu0 0
  %1035 = vperm.xlu0 %1034, %v93
  %v1036 = vpop.permute.xlu0 %1035
  %1039 = vset.pattern.permute.xlu0 0
  %1040 = vperm.xlu0 %1039, %v94
  %v1041 = vpop.permute.xlu0 %1040
  %1044 = vset.pattern.permute.xlu0 0
  %1045 = vperm.xlu0 %1044, %v95
  %v1046 = vpop.permute.xlu0 %1045
  %1049 = vset.pattern.permute.xlu0 0
  %1050 = vperm.xlu0 %1049, %v96
  %v1051 = vpop.permute.xlu0 %1050
  %1054 = vset.pattern.permute.xlu0 0
  %1055 = vperm.xlu0 %1054, %v97
  %v1056 = vpop.permute.xlu0 %1055
  %v1058 = vmul.f32 %v900, %v981
  %v1059 = vmul.f32 %v905, %v986
  %v1060 = vmul.f32 %v910, %v991
  %v1061 = vmul.f32 %v915, %v996
  %v1062 = vmul.f32 %v920, %v1001
  %v1063 = vmul.f32 %v925, %v1006
  %v1064 = vmul.f32 %v930, %v1011
  %v1065 = vmul.f32 %v935, %v1016
  %v1066 = vmul.f32 %v940, %v1021
  %v1067 = vmul.f32 %v945, %v1026
  %v1068 = vmul.f32 %v950, %v1031
  %v1069 = vmul.f32 %v955, %v1036
  %v1070 = vmul.f32 %v960, %v1041
  %v1071 = vmul.f32 %v965, %v1046
  %v1072 = vmul.f32 %v970, %v1051
  %v1073 = vmul.f32 %v975, %v1056
  %v1074 = vld [vmem:[%s4] sm:$0xff]
  %v1075 = vld [vmem:[%s4 + $0x8] sm:$0xff]
  %v1076 = vld [vmem:[%s4 + $0x10] sm:$0xff]
  %v1077 = vld [vmem:[%s4 + $0x18] sm:$0xff]
  %v1078 = vld [vmem:[%s4 + $0x20] sm:$0xff]
  %v1079 = vld [vmem:[%s4 + $0x28] sm:$0xff]
  %v1080 = vld [vmem:[%s4 + $0x30] sm:$0xff]
  %v1081 = vld [vmem:[%s4 + $0x38] sm:$0xff]
  %v1082 = vld [vmem:[%s4 + $0x40] sm:$0xff]
  %v1083 = vld [vmem:[%s4 + $0x48] sm:$0xff]
  %v1084 = vld [vmem:[%s4 + $0x50] sm:$0xff]
  %v1085 = vld [vmem:[%s4 + $0x58] sm:$0xff]
  %v1086 = vld [vmem:[%s4 + $0x60] sm:$0xff]
  %v1087 = vld [vmem:[%s4 + $0x68] sm:$0xff]
  %v1088 = vld [vmem:[%s4 + $0x70] sm:$0xff]
  %v1089 = vld [vmem:[%s4 + $0x78] sm:$0xff]
  %v1090 = vld [vmem:[%s5] sm:$0x1]
  %1091 = vmatprep.subr.mxu0 0.0
  %1092 = vmatpush1.msra.mxu0 %v817
  %1093 = vmatprep.subr.mxu0 0.0
  %1094 = vmatpush1.msra.mxu0 %v818
  %1095 = vmatprep.subr.mxu0 0.0
  %1096 = vmatpush1.msra.mxu0 %v819
  %1097 = vmatprep.subr.mxu0 0.0
  %1098 = vmatpush1.msra.mxu0 %v820
  %1099 = vmatprep.subr.mxu0 0.0
  %1100 = vmatpush1.msra.mxu0 %v821
  %1101 = vmatprep.subr.mxu0 0.0
  %1102 = vmatpush1.msra.mxu0 %v822
  %1103 = vmatprep.subr.mxu0 0.0
  %1104 = vmatpush1.msra.mxu0 %v823
  %1105 = vmatprep.subr.mxu0 0.0
  %1106 = vmatpush1.msra.mxu0 %v824
  %1107 = vmatprep.subr.mxu0 0.0
  %1108 = vmatpush1.msra.mxu0 %v825
  %1109 = vmatprep.subr.mxu0 0.0
  %1110 = vmatpush1.msra.mxu0 %v826
  %1111 = vmatprep.subr.mxu0 0.0
  %1112 = vmatpush1.msra.mxu0 %v827
  %1113 = vmatprep.subr.mxu0 0.0
  %1114 = vmatpush1.msra.mxu0 %v828
  %1115 = vmatprep.subr.mxu0 0.0
  %1116 = vmatpush1.msra.mxu0 %v829
  %1117 = vmatprep.subr.mxu0 0.0
  %1118 = vmatpush1.msra.mxu0 %v830
  %1119 = vmatprep.subr.mxu0 0.0
  %1120 = vmatpush1.msra.mxu0 %v831
  %1121 = vmatprep.subr.mxu0 0.0
  %1122 = vmatpush1.msra.mxu0 %v832
  %1123 = vmatprep.subr.mxu0 0.0
  %1124 = vmatpush1.msra.mxu0 0.0
  %1125 = vmatprep.subr.mxu0 0.0
  %1126 = vmatpush1.msra.mxu0 0.0
  %1127 = vmatprep.subr.mxu0 0.0
  %1128 = vmatpush1.msra.mxu0 0.0
  %1129 = vmatprep.subr.mxu0 0.0
  %1130 = vmatpush1.msra.mxu0 0.0
  %1131 = vmatprep.subr.mxu0 0.0
  %1132 = vmatpush1.msra.mxu0 0.0
  %1133 = vmatprep.subr.mxu0 0.0
  %1134 = vmatpush1.msra.mxu0 0.0
  %1135 = vmatprep.subr.mxu0 0.0
  %1136 = vmatpush1.msra.mxu0 0.0
  %1137 = vmatprep.subr.mxu0 0.0
  %1138 = vmatpush1.msra.mxu0 0.0
  %1139 = vmatprep.subr.mxu0 0.0
  %1140 = vmatpush1.msra.mxu0 0.0
  %1141 = vmatprep.subr.mxu0 0.0
  %1142 = vmatpush1.msra.mxu0 0.0
  %1143 = vmatprep.subr.mxu0 0.0
  %1144 = vmatpush1.msra.mxu0 0.0
  %1145 = vmatprep.subr.mxu0 0.0
  %1146 = vmatpush1.msra.mxu0 0.0
  %1147 = vmatprep.subr.mxu0 0.0
  %1148 = vmatpush1.msra.mxu0 0.0
  %1149 = vmatprep.subr.mxu0 0.0
  %1150 = vmatpush1.msra.mxu0 0.0
  %1151 = vmatprep.subr.mxu0 0.0
  %1152 = vmatpush1.msra.mxu0 0.0
  %1153 = vmatprep.subr.mxu0 0.0
  %1154 = vmatpush1.msra.mxu0 0.0
  %1155 = vmatprep.mubr.f32.mxu0 0.0
  %1156 = vmatmul.mubr.f32.gmra.mrb[0].mxu0 %v1058
  %v1157 = vpop.f32.mrb[0].mxu0
  %v1158 = vadd.f32 0.0, %v1157
  %v1159 = vpop.f32.mrb[0].mxu0
  %1160 = vmatprep.mubr.f32.mxu0 0.0
  %1161 = vmatmul.mubr.f32.gmra.mrb[0].mxu0 %v1059
  %v1162 = vpop.f32.mrb[0].mxu0
  %v1163 = vadd.f32 0.0, %v1162
  %v1164 = vpop.f32.mrb[0].mxu0
  %1165 = vmatprep.mubr.f32.mxu0 0.0
  %1166 = vmatmul.mubr.f32.gmra.mrb[0].mxu0 %v1060
  %v1167 = vpop.f32.mrb[0].mxu0
  %v1168 = vadd.f32 0.0, %v1167
  %v1169 = vpop.f32.mrb[0].mxu0
  %1170 = vmatprep.mubr.f32.mxu0 0.0
  %1171 = vmatmul.mubr.f32.gmra.mrb[0].mxu0 %v1061
  %v1172 = vpop.f32.mrb[0].mxu0
  %v1173 = vadd.f32 0.0, %v1172
  %v1174 = vpop.f32.mrb[0].mxu0
  %1175 = vmatprep.mubr.f32.mxu0 0.0
  %1176 = vmatmul.mubr.f32.gmra.mrb[0].mxu0 %v1062
  %v1177 = vpop.f32.mrb[0].mxu0
  %v1178 = vadd.f32 0.0, %v1177
  %v1179 = vpop.f32.mrb[0].mxu0
  %1180 = vmatprep.mubr.f32.mxu0 0.0
  %1181 = vmatmul.mubr.f32.gmra.mrb[0].mxu0 %v1063
  %v1182 = vpop.f32.mrb[0].mxu0
  %v1183 = vadd.f32 0.0, %v1182
  %v1184 = vpop.f32.mrb[0].mxu0
  %1185 = vmatprep.mubr.f32.mxu0 0.0
  %1186 = vmatmul.mubr.f32.gmra.mrb[0].mxu0 %v1064
  %v1187 = vpop.f32.mrb[0].mxu0
  %v1188 = vadd.f32 0.0, %v1187
  %v1189 = vpop.f32.mrb[0].mxu0
  %1190 = vmatprep.mubr.f32.mxu0 0.0
  %1191 = vmatmul.mubr.f32.gmra.mrb[0].mxu0 %v1065
  %v1192 = vpop.f32.mrb[0].mxu0
  %v1193 = vadd.f32 0.0, %v1192
  %v1194 = vpop.f32.mrb[0].mxu0
  %1195 = vmatprep.mubr.f32.mxu0 0.0
  %1196 = vmatmul.mubr.f32.gmra.mrb[0].mxu0 %v1066
  %v1197 = vpop.f32.mrb[0].mxu0
  %v1198 = vadd.f32 0.0, %v1197
  %v1199 = vpop.f32.mrb[0].mxu0
  %1200 = vmatprep.mubr.f32.mxu0 0.0
  %1201 = vmatmul.mubr.f32.gmra.mrb[0].mxu0 %v1067
  %v1202 = vpop.f32.mrb[0].mxu0
  %v1203 = vadd.f32 0.0, %v1202
  %v1204 = vpop.f32.mrb[0].mxu0
  %1205 = vmatprep.mubr.f32.mxu0 0.0
  %1206 = vmatmul.mubr.f32.gmra.mrb[0].mxu0 %v1068
  %v1207 = vpop.f32.mrb[0].mxu0
  %v1208 = vadd.f32 0.0, %v1207
  %v1209 = vpop.f32.mrb[0].mxu0
  %1210 = vmatprep.mubr.f32.mxu0 0.0
  %1211 = vmatmul.mubr.f32.gmra.mrb[0].mxu0 %v1069
  %v1212 = vpop.f32.mrb[0].mxu0
  %v1213 = vadd.f32 0.0, %v1212
  %v1214 = vpop.f32.mrb[0].mxu0
  %1215 = vmatprep.mubr.f32.mxu0 0.0
  %1216 = vmatmul.mubr.f32.gmra.mrb[0].mxu0 %v1070
  %v1217 = vpop.f32.mrb[0].mxu0
  %v1218 = vadd.f32 0.0, %v1217
  %v1219 = vpop.f32.mrb[0].mxu0
  %1220 = vmatprep.mubr.f32.mxu0 0.0
  %1221 = vmatmul.mubr.f32.gmra.mrb[0].mxu0 %v1071
  %v1222 = vpop.f32.mrb[0].mxu0
  %v1223 = vadd.f32 0.0, %v1222
  %v1224 = vpop.f32.mrb[0].mxu0
  %1225 = vmatprep.mubr.f32.mxu0 0.0
  %1226 = vmatmul.mubr.f32.gmra.mrb[0].mxu0 %v1072
  %v1227 = vpop.f32.mrb[0].mxu0
  %v1228 = vadd.f32 0.0, %v1227
  %v1229 = vpop.f32.mrb[0].mxu0
  %1230 = vmatprep.mubr.f32.mxu0 0.0
  %1231 = vmatmul.mubr.f32.gmra.mrb[0].mxu0 %v1073
  %v1232 = vpop.f32.mrb[0].mxu0
  %v1233 = vadd.f32 0.0, %v1232
  %v1234 = vpop.f32.mrb[0].mxu0
  %1235 = vdwg.mxu0
  %v1237 = vlaneseq
  %v1238 = vshrl.u32 %v1237, 7
  %v1239 = vsub.s32 0, %v1238
  %v1240 = vrot.slane %v1090, %v1239
  %1242 = vmatprep.subr.mxu0 0.0
  %1243 = vmatpush1.msra.mxu0 %v1074
  %1244 = vmatprep.subr.mxu0 0.0
  %1245 = vmatpush1.msra.mxu0 %v1075
  %1246 = vmatprep.subr.mxu0 0.0
  %1247 = vmatpush1.msra.mxu0 %v1076
  %1248 = vmatprep.subr.mxu0 0.0
  %1249 = vmatpush1.msra.mxu0 %v1077
  %1250 = vmatprep.subr.mxu0 0.0
  %1251 = vmatpush1.msra.mxu0 %v1078
  %1252 = vmatprep.subr.mxu0 0.0
  %1253 = vmatpush1.msra.mxu0 %v1079
  %1254 = vmatprep.subr.mxu0 0.0
  %1255 = vmatpush1.msra.mxu0 %v1080
  %1256 = vmatprep.subr.mxu0 0.0
  %1257 = vmatpush1.msra.mxu0 %v1081
  %1258 = vmatprep.subr.mxu0 0.0
  %1259 = vmatpush1.msra.mxu0 %v1082
  %1260 = vmatprep.subr.mxu0 0.0
  %1261 = vmatpush1.msra.mxu0 %v1083
  %1262 = vmatprep.subr.mxu0 0.0
  %1263 = vmatpush1.msra.mxu0 %v1084
  %1264 = vmatprep.subr.mxu0 0.0
  %1265 = vmatpush1.msra.mxu0 %v1085
  %1266 = vmatprep.subr.mxu0 0.0
  %1267 = vmatpush1.msra.mxu0 %v1086
  %1268 = vmatprep.subr.mxu0 0.0
  %1269 = vmatpush1.msra.mxu0 %v1087
  %1270 = vmatprep.subr.mxu0 0.0
  %1271 = vmatpush1.msra.mxu0 %v1088
  %1272 = vmatprep.subr.mxu0 0.0
  %1273 = vmatpush1.msra.mxu0 %v1089
  %1274 = vmatprep.subr.mxu0 0.0
  %1275 = vmatpush1.msra.mxu0 0.0
  %1276 = vmatprep.subr.mxu0 0.0
  %1277 = vmatpush1.msra.mxu0 0.0
  %1278 = vmatprep.subr.mxu0 0.0
  %1279 = vmatpush1.msra.mxu0 0.0
  %1280 = vmatprep.subr.mxu0 0.0
  %1281 = vmatpush1.msra.mxu0 0.0
  %1282 = vmatprep.subr.mxu0 0.0
  %1283 = vmatpush1.msra.mxu0 0.0
  %1284 = vmatprep.subr.mxu0 0.0
  %1285 = vmatpush1.msra.mxu0 0.0
  %1286 = vmatprep.subr.mxu0 0.0
  %1287 = vmatpush1.msra.mxu0 0.0
  %1288 = vmatprep.subr.mxu0 0.0
  %1289 = vmatpush1.msra.mxu0 0.0
  %1290 = vmatprep.subr.mxu0 0.0
  %1291 = vmatpush1.msra.mxu0 0.0
  %1292 = vmatprep.subr.mxu0 0.0
  %1293 = vmatpush1.msra.mxu0 0.0
  %1294 = vmatprep.subr.mxu0 0.0
  %1295 = vmatpush1.msra.mxu0 0.0
  %1296 = vmatprep.subr.mxu0 0.0
  %1297 = vmatpush1.msra.mxu0 0.0
  %1298 = vmatprep.subr.mxu0 0.0
  %1299 = vmatpush1.msra.mxu0 0.0
  %1300 = vmatprep.subr.mxu0 0.0
  %1301 = vmatpush1.msra.mxu0 0.0
  %1302 = vmatprep.subr.mxu0 0.0
  %1303 = vmatpush1.msra.mxu0 0.0
  %1304 = vmatprep.subr.mxu0 0.0
  %1305 = vmatpush1.msra.mxu0 0.0
  %1306 = vmatprep.mubr.f32.mxu0 0.0
  %1307 = vmatmul.mubr.f32.gmra.mrb[0].mxu0 %v1158
  %v1308 = vpop.f32.mrb[0].mxu0
  %v1309 = vadd.f32 %v1240, %v1308
  %v1310 = vpop.f32.mrb[0].mxu0
  %1311 = vmatprep.mubr.f32.mxu0 0.0
  %1312 = vmatmul.mubr.f32.gmra.mrb[0].mxu0 %v1163
  %v1313 = vpop.f32.mrb[0].mxu0
  %v1314 = vadd.f32 %v1240, %v1313
  %v1315 = vpop.f32.mrb[0].mxu0
  %1316 = vmatprep.mubr.f32.mxu0 0.0
  %1317 = vmatmul.mubr.f32.gmra.mrb[0].mxu0 %v1168
  %v1318 = vpop.f32.mrb[0].mxu0
  %v1319 = vadd.f32 %v1240, %v1318
  %v1320 = vpop.f32.mrb[0].mxu0
  %1321 = vmatprep.mubr.f32.mxu0 0.0
  %1322 = vmatmul.mubr.f32.gmra.mrb[0].mxu0 %v1173
  %v1323 = vpop.f32.mrb[0].mxu0
  %v1324 = vadd.f32 %v1240, %v1323
  %v1325 = vpop.f32.mrb[0].mxu0
  %1326 = vmatprep.mubr.f32.mxu0 0.0
  %1327 = vmatmul.mubr.f32.gmra.mrb[0].mxu0 %v1178
  %v1328 = vpop.f32.mrb[0].mxu0
  %v1329 = vadd.f32 %v1240, %v1328
  %v1330 = vpop.f32.mrb[0].mxu0
  %1331 = vmatprep.mubr.f32.mxu0 0.0
  %1332 = vmatmul.mubr.f32.gmra.mrb[0].mxu0 %v1183
  %v1333 = vpop.f32.mrb[0].mxu0
  %v1334 = vadd.f32 %v1240, %v1333
  %v1335 = vpop.f32.mrb[0].mxu0
  %1336 = vmatprep.mubr.f32.mxu0 0.0
  %1337 = vmatmul.mubr.f32.gmra.mrb[0].mxu0 %v1188
  %v1338 = vpop.f32.mrb[0].mxu0
  %v1339 = vadd.f32 %v1240, %v1338
  %v1340 = vpop.f32.mrb[0].mxu0
  %1341 = vmatprep.mubr.f32.mxu0 0.0
  %1342 = vmatmul.mubr.f32.gmra.mrb[0].mxu0 %v1193
  %v1343 = vpop.f32.mrb[0].mxu0
  %v1344 = vadd.f32 %v1240, %v1343
  %v1345 = vpop.f32.mrb[0].mxu0
  %1346 = vmatprep.mubr.f32.mxu0 0.0
  %1347 = vmatmul.mubr.f32.gmra.mrb[0].mxu0 %v1198
  %v1348 = vpop.f32.mrb[0].mxu0
  %v1349 = vadd.f32 %v1240, %v1348
  %v1350 = vpop.f32.mrb[0].mxu0
  %1351 = vmatprep.mubr.f32.mxu0 0.0
  %1352 = vmatmul.mubr.f32.gmra.mrb[0].mxu0 %v1203
  %v1353 = vpop.f32.mrb[0].mxu0
  %v1354 = vadd.f32 %v1240, %v1353
  %v1355 = vpop.f32.mrb[0].mxu0
  %1356 = vmatprep.mubr.f32.mxu0 0.0
  %1357 = vmatmul.mubr.f32.gmra.mrb[0].mxu0 %v1208
  %v1358 = vpop.f32.mrb[0].mxu0
  %v1359 = vadd.f32 %v1240, %v1358
  %v1360 = vpop.f32.mrb[0].mxu0
  %1361 = vmatprep.mubr.f32.mxu0 0.0
  %1362 = vmatmul.mubr.f32.gmra.mrb[0].mxu0 %v1213
  %v1363 = vpop.f32.mrb[0].mxu0
  %v1364 = vadd.f32 %v1240, %v1363
  %v1365 = vpop.f32.mrb[0].mxu0
  %1366 = vmatprep.mubr.f32.mxu0 0.0
  %1367 = vmatmul.mubr.f32.gmra.mrb[0].mxu0 %v1218
  %v1368 = vpop.f32.mrb[0].mxu0
  %v1369 = vadd.f32 %v1240, %v1368
  %v1370 = vpop.f32.mrb[0].mxu0
  %1371 = vmatprep.mubr.f32.mxu0 0.0
  %1372 = vmatmul.mubr.f32.gmra.mrb[0].mxu0 %v1223
  %v1373 = vpop.f32.mrb[0].mxu0
  %v1374 = vadd.f32 %v1240, %v1373
  %v1375 = vpop.f32.mrb[0].mxu0
  %1376 = vmatprep.mubr.f32.mxu0 0.0
  %1377 = vmatmul.mubr.f32.gmra.mrb[0].mxu0 %v1228
  %v1378 = vpop.f32.mrb[0].mxu0
  %v1379 = vadd.f32 %v1240, %v1378
  %v1380 = vpop.f32.mrb[0].mxu0
  %1381 = vmatprep.mubr.f32.mxu0 0.0
  %1382 = vmatmul.mubr.f32.gmra.mrb[0].mxu0 %v1233
  %v1383 = vpop.f32.mrb[0].mxu0
  %v1384 = vadd.f32 %v1240, %v1383
  %v1385 = vpop.f32.mrb[0].mxu0
  %1386 = vdwg.mxu0
  %v1387 = vmax.f32 %v1309, 0.0
  %v1388 = vmax.f32 %v1314, 0.0
  %v1389 = vmax.f32 %v1319, 0.0
  %v1390 = vmax.f32 %v1324, 0.0
  %v1391 = vmax.f32 %v1329, 0.0
  %v1392 = vmax.f32 %v1334, 0.0
  %v1393 = vmax.f32 %v1339, 0.0
  %v1394 = vmax.f32 %v1344, 0.0
  %v1395 = vmax.f32 %v1349, 0.0
  %v1396 = vmax.f32 %v1354, 0.0
  %v1397 = vmax.f32 %v1359, 0.0
  %v1398 = vmax.f32 %v1364, 0.0
  %v1399 = vmax.f32 %v1369, 0.0
  %v1400 = vmax.f32 %v1374, 0.0
  %v1401 = vmax.f32 %v1379, 0.0
  %v1402 = vmax.f32 %v1384, 0.0
  %1403 = vst [vmem:[%s8] sm:$0xff] %v817
  %1404 = vst [vmem:[%s8 + $0x8] sm:$0xff] %v818
  %1405 = vst [vmem:[%s8 + $0x10] sm:$0xff] %v819
  %1406 = vst [vmem:[%s8 + $0x18] sm:$0xff] %v820
  %1407 = vst [vmem:[%s8 + $0x20] sm:$0xff] %v821
  %1408 = vst [vmem:[%s8 + $0x28] sm:$0xff] %v822
  %1409 = vst [vmem:[%s8 + $0x30] sm:$0xff] %v823
  %1410 = vst [vmem:[%s8 + $0x38] sm:$0xff] %v824
  %1411 = vst [vmem:[%s8 + $0x40] sm:$0xff] %v825
  %1412 = vst [vmem:[%s8 + $0x48] sm:$0xff] %v826
  %1413 = vst [vmem:[%s8 + $0x50] sm:$0xff] %v827
  %1414 = vst [vmem:[%s8 + $0x58] sm:$0xff] %v828
  %1415 = vst [vmem:[%s8 + $0x60] sm:$0xff] %v829
  %1416 = vst [vmem:[%s8 + $0x68] sm:$0xff] %v830
  %1417 = vst [vmem:[%s8 + $0x70] sm:$0xff] %v831
  %1418 = vst [vmem:[%s8 + $0x78] sm:$0xff] %v832
  %1419 = vst [vmem:[%s9] sm:$0xff] %v1387
  %1420 = vst [vmem:[%s9 + $0x8] sm:$0xff] %v1388
  %1421 = vst [vmem:[%s9 + $0x10] sm:$0xff] %v1389
  %1422 = vst [vmem:[%s9 + $0x18] sm:$0xff] %v1390
  %1423 = vst [vmem:[%s9 + $0x20] sm:$0xff] %v1391
  %1424 = vst [vmem:[%s9 + $0x28] sm:$0xff] %v1392
  %1425 = vst [vmem:[%s9 + $0x30] sm:$0xff] %v1393
  %1426 = vst [vmem:[%s9 + $0x38] sm:$0xff] %v1394
  %1427 = vst [vmem:[%s9 + $0x40] sm:$0xff] %v1395
  %1428 = vst [vmem:[%s9 + $0x48] sm:$0xff] %v1396
  %1429 = vst [vmem:[%s9 + $0x50] sm:$0xff] %v1397
  %1430 = vst [vmem:[%s9 + $0x58] sm:$0xff] %v1398
  %1431 = vst [vmem:[%s9 + $0x60] sm:$0xff] %v1399
  %1432 = vst [vmem:[%s9 + $0x68] sm:$0xff] %v1400
  %1433 = vst [vmem:[%s9 + $0x70] sm:$0xff] %v1401
  %1434 = vst [vmem:[%s9 + $0x78] sm:$0xff] %v1402
  %v1435 = vld [vmem:[%s6] sm:$0x1]
  %v1436 = vld [vmem:[#allocation2] sm:$0x1]
  %1438 = vset.pattern.permute.xlu0 0
  %1439 = vperm.xlu0 %1438, %v1436
  %v1440 = vpop.permute.xlu0 %1439
  %v1442 = vlaneseq
  %v1443 = vshrl.u32 %v1442, 7
  %v1444 = vsub.s32 0, %v1443
  %v1445 = vrot.slane %v1440, %v1444
  %1446 = vmatprep.subr.mxu0 0.0
  %1447 = vmatpush1.xpose.msra.mxu0 %v1387
  %1448 = vmatprep.subr.mxu0 0.0
  %1449 = vmatpush1.xpose.msra.mxu0 %v1388
  %1450 = vmatprep.subr.mxu0 0.0
  %1451 = vmatpush1.xpose.msra.mxu0 %v1389
  %1452 = vmatprep.subr.mxu0 0.0
  %1453 = vmatpush1.xpose.msra.mxu0 %v1390
  %1454 = vmatprep.subr.mxu0 0.0
  %1455 = vmatpush1.xpose.msra.mxu0 %v1391
  %1456 = vmatprep.subr.mxu0 0.0
  %1457 = vmatpush1.xpose.msra.mxu0 %v1392
  %1458 = vmatprep.subr.mxu0 0.0
  %1459 = vmatpush1.xpose.msra.mxu0 %v1393
  %1460 = vmatprep.subr.mxu0 0.0
  %1461 = vmatpush1.xpose.msra.mxu0 %v1394
  %1462 = vmatprep.subr.mxu0 0.0
  %1463 = vmatpush1.xpose.msra.mxu0 %v1395
  %1464 = vmatprep.subr.mxu0 0.0
  %1465 = vmatpush1.xpose.msra.mxu0 %v1396
  %1466 = vmatprep.subr.mxu0 0.0
  %1467 = vmatpush1.xpose.msra.mxu0 %v1397
  %1468 = vmatprep.subr.mxu0 0.0
  %1469 = vmatpush1.xpose.msra.mxu0 %v1398
  %1470 = vmatprep.subr.mxu0 0.0
  %1471 = vmatpush1.xpose.msra.mxu0 %v1399
  %1472 = vmatprep.subr.mxu0 0.0
  %1473 = vmatpush1.xpose.msra.mxu0 %v1400
  %1474 = vmatprep.subr.mxu0 0.0
  %1475 = vmatpush1.xpose.msra.mxu0 %v1401
  %1476 = vmatprep.subr.mxu0 0.0
  %1477 = vmatpush1.xpose.msra.mxu0 %v1402
  %1478 = vmatprep.subr.mxu0 0.0
  %1479 = vmatpush1.xpose.msra.mxu0 0.0
  %1480 = vmatprep.subr.mxu0 0.0
  %1481 = vmatpush1.xpose.msra.mxu0 0.0
  %1482 = vmatprep.subr.mxu0 0.0
  %1483 = vmatpush1.xpose.msra.mxu0 0.0
  %1484 = vmatprep.subr.mxu0 0.0
  %1485 = vmatpush1.xpose.msra.mxu0 0.0
  %1486 = vmatprep.subr.mxu0 0.0
  %1487 = vmatpush1.xpose.msra.mxu0 0.0
  %1488 = vmatprep.subr.mxu0 0.0
  %1489 = vmatpush1.xpose.msra.mxu0 0.0
  %1490 = vmatprep.subr.mxu0 0.0
  %1491 = vmatpush1.xpose.msra.mxu0 0.0
  %1492 = vmatprep.subr.mxu0 0.0
  %1493 = vmatpush1.xpose.msra.mxu0 0.0
  %1494 = vmatprep.subr.mxu0 0.0
  %1495 = vmatpush1.xpose.msra.mxu0 0.0
  %1496 = vmatprep.subr.mxu0 0.0
  %1497 = vmatpush1.xpose.msra.mxu0 0.0
  %1498 = vmatprep.subr.mxu0 0.0
  %1499 = vmatpush1.xpose.msra.mxu0 0.0
  %1500 = vmatprep.subr.mxu0 0.0
  %1501 = vmatpush1.xpose.msra.mxu0 0.0
  %1502 = vmatprep.subr.mxu0 0.0
  %1503 = vmatpush1.xpose.msra.mxu0 0.0
  %1504 = vmatprep.subr.mxu0 0.0
  %1505 = vmatpush1.xpose.msra.mxu0 0.0
  %1506 = vmatprep.subr.mxu0 0.0
  %1507 = vmatpush1.xpose.msra.mxu0 0.0
  %1508 = vmatprep.subr.mxu0 0.0
  %1509 = vmatpush1.xpose.msra.mxu0 0.0
  %1510 = vmatprep.mubr.f32.mxu0 0.0
  %1511 = vmatmul.mubr.f32.gmra.mrb[0].mxu0 %v1435
  %v1512 = vpop.f32.mrb[0].mxu0
  %v1513 = vadd.f32 %v1445, %v1512
  %v1514 = vpop.f32.mrb[0].mxu0
  %1515 = vdwg.mxu0
  %v1516 = vxor.u32 %v1513, 2147483648
  %v1517 = vmul.f32 %v1516, 1.442695
  %v1518 = vpow.pop %v1517
  %v1519 = vadd.f32 %v1518, 1.0
  %v1520 = vrcp.pop %v1519
  %v1521 = vmul.f32 1.0, %v1520
  %1522 = vst [vmem:[%s10] sm:$0x1] %v1521
  // Predicated region
  $region34: #{graph_unet_forward.6} parent=0 // pred_check
    _
  $region35: #{graph_unet_forward.6} parent=0 // pred_check_branch
    %1524 = sbr.rel (0) target = $region37
  $region36: #{graph_unet_forward.6} parent=0 // pred_region
    _
  $region37: #{graph_unet_forward.6} parent=0 // pred_fallthru
    _
  // Predicated region
  $region38: #{graph_unet_forward.6} parent=0 // pred_check
    _
  $region39: #{graph_unet_forward.6} parent=0 // pred_check_branch
    %1526 = sbr.rel (0) target = $region41
  $region40: #{graph_unet_forward.6} parent=0 // pred_region
    _
  $region41: #{graph_unet_forward.6} parent=0 // pred_fallthru
    _
  // Predicated region
  $region42: #{graph_unet_forward.6} parent=0 // pred_check
    _
  $region43: #{graph_unet_forward.6} parent=0 // pred_check_branch
    %1528 = sbr.rel (0) target = $region45
  $region44: #{graph_unet_forward.6} parent=0 // pred_region
    _
  $region45: #{graph_unet_forward.6} parent=0 // pred_fallthru
    _
  // Predicated region
  $region46: #{graph_unet_forward.6} parent=0 // pred_check
    _
  $region47: #{graph_unet_forward.6} parent=0 // pred_check_branch
    %1530 = sbr.rel (0) target = $region49
  $region48: #{graph_unet_forward.6} parent=0 // pred_region
    _
  $region49: #{graph_unet_forward.6} parent=0 // pred_fallthru
    _
  // Predicated region
  $region50: #{graph_unet_forward.6} parent=0 // pred_check
    _
  $region51: #{graph_unet_forward.6} parent=0 // pred_check_branch
    %1532 = sbr.rel (0) target = $region53
  $region52: #{graph_unet_forward.6} parent=0 // pred_region
    _
  $region53: #{graph_unet_forward.6} parent=0 // pred_fallthru
    _
  // Predicated region
  $region54: #{graph_unet_forward.6} parent=0 // pred_check
    _
  $region55: #{graph_unet_forward.6} parent=0 // pred_check_branch
    %1534 = sbr.rel (0) target = $region57
  $region56: #{graph_unet_forward.6} parent=0 // pred_region
    _
  $region57: #{graph_unet_forward.6} parent=0 // pred_fallthru
    _

// kernel: graph_unet_forward.7
$region0: #{graph_unet_forward.7}
  #allocation0 [shape = 'u32[]', space=smem, size = 0x4, offset = 0x4, fixed_abs, tag = 'smem constant byte address 0x4 - core index']
  #allocation1 [shape = 'u32[144,128]{1,0:T(1,128)}', space=vmem, size = 0x12000, scoped, tag = 'internal scratch']
  %s0 = inlined_call_operand.vmem [shape: f32[128,128], index: 0, kind: input, shape index: {}]
  %s1 = inlined_call_operand.vmem [shape: f32[128,128], index: 1, kind: input, shape index: {}]
  %s2 = inlined_call_operand.vmem [shape: f32[128,128], index: 2, kind: input, shape index: {}]
  %s3 = inlined_call_operand.vmem [shape: f32[128,1], index: 3, kind: input, shape index: {}]
  %s4 = inlined_call_operand.vmem [shape: f32[128,128], index: 4, kind: input, shape index: {}]
  %s5 = inlined_call_operand.vmem [shape: f32[1,128], index: 5, kind: input, shape index: {}]
  %s6 = inlined_call_operand.vmem [shape: f32[128,128], index: 6, kind: output, shape index: {}]
  %s7 = sld [smem:[#allocation0]]
  $region34: #{graph_unet_forward.7} parent=0
    _
  %s9 = ssub.s32 1, %s7
  %s10 = scalar_select 0, %s9, %s7
  // Predicated region
  $region2: #{graph_unet_forward.7} parent=0 // pred_check
    _
  $region3: #{graph_unet_forward.7} parent=0 // pred_check_branch
    %12 = sbr.rel (0) target = $region5
  $region4: #{graph_unet_forward.7} parent=0 // pred_region
    _
  $region5: #{graph_unet_forward.7} parent=0 // pred_fallthru
    _
  // Predicated region
  $region6: #{graph_unet_forward.7} parent=0 // pred_check
    _
  $region7: #{graph_unet_forward.7} parent=0 // pred_check_branch
    %14 = sbr.rel (0) target = $region9
  $region8: #{graph_unet_forward.7} parent=0 // pred_region
    _
  $region9: #{graph_unet_forward.7} parent=0 // pred_fallthru
    _
  // Predicated region
  $region10: #{graph_unet_forward.7} parent=0 // pred_check
    _
  $region11: #{graph_unet_forward.7} parent=0 // pred_check_branch
    %16 = sbr.rel (0) target = $region13
  $region12: #{graph_unet_forward.7} parent=0 // pred_region
    _
  $region13: #{graph_unet_forward.7} parent=0 // pred_fallthru
    _
  // Predicated region
  $region14: #{graph_unet_forward.7} parent=0 // pred_check
    _
  $region15: #{graph_unet_forward.7} parent=0 // pred_check_branch
    %18 = sbr.rel (0) target = $region17
  $region16: #{graph_unet_forward.7} parent=0 // pred_region
    _
  $region17: #{graph_unet_forward.7} parent=0 // pred_fallthru
    _
  // Predicated region
  $region18: #{graph_unet_forward.7} parent=0 // pred_check
    _
  $region19: #{graph_unet_forward.7} parent=0 // pred_check_branch
    %20 = sbr.rel (0) target = $region21
  $region20: #{graph_unet_forward.7} parent=0 // pred_region
    _
  $region21: #{graph_unet_forward.7} parent=0 // pred_fallthru
    _
  // Predicated region
  $region22: #{graph_unet_forward.7} parent=0 // pred_check
    _
  $region23: #{graph_unet_forward.7} parent=0 // pred_check_branch
    %22 = sbr.rel (0) target = $region25
  $region24: #{graph_unet_forward.7} parent=0 // pred_region
    _
  $region25: #{graph_unet_forward.7} parent=0 // pred_fallthru
    _
  %v23 = vld [vmem:[%s0] sm:$0xff]
  %v24 = vld [vmem:[%s0 + $0x8] sm:$0xff]
  %v25 = vld [vmem:[%s0 + $0x10] sm:$0xff]
  %v26 = vld [vmem:[%s0 + $0x18] sm:$0xff]
  %v27 = vld [vmem:[%s0 + $0x20] sm:$0xff]
  %v28 = vld [vmem:[%s0 + $0x28] sm:$0xff]
  %v29 = vld [vmem:[%s0 + $0x30] sm:$0xff]
  %v30 = vld [vmem:[%s0 + $0x38] sm:$0xff]
  %v31 = vld [vmem:[%s0 + $0x40] sm:$0xff]
  %v32 = vld [vmem:[%s0 + $0x48] sm:$0xff]
  %v33 = vld [vmem:[%s0 + $0x50] sm:$0xff]
  %v34 = vld [vmem:[%s0 + $0x58] sm:$0xff]
  %v35 = vld [vmem:[%s0 + $0x60] sm:$0xff]
  %v36 = vld [vmem:[%s0 + $0x68] sm:$0xff]
  %v37 = vld [vmem:[%s0 + $0x70] sm:$0xff]
  %v38 = vld [vmem:[%s0 + $0x78] sm:$0xff]
  %v39 = vld [vmem:[%s1] sm:$0xff]
  %v40 = vld [vmem:[%s1 + $0x8] sm:$0xff]
  %v41 = vld [vmem:[%s1 + $0x10] sm:$0xff]
  %v42 = vld [vmem:[%s1 + $0x18] sm:$0xff]
  %v43 = vld [vmem:[%s1 + $0x20] sm:$0xff]
  %v44 = vld [vmem:[%s1 + $0x28] sm:$0xff]
  %v45 = vld [vmem:[%s1 + $0x30] sm:$0xff]
  %v46 = vld [vmem:[%s1 + $0x38] sm:$0xff]
  %v47 = vld [vmem:[%s1 + $0x40] sm:$0xff]
  %v48 = vld [vmem:[%s1 + $0x48] sm:$0xff]
  %v49 = vld [vmem:[%s1 + $0x50] sm:$0xff]
  %v50 = vld [vmem:[%s1 + $0x58] sm:$0xff]
  %v51 = vld [vmem:[%s1 + $0x60] sm:$0xff]
  %v52 = vld [vmem:[%s1 + $0x68] sm:$0xff]
  %v53 = vld [vmem:[%s1 + $0x70] sm:$0xff]
  %v54 = vld [vmem:[%s1 + $0x78] sm:$0xff]
  %v55 = vld [vmem:[%s2] sm:$0xff]
  %v56 = vld [vmem:[%s2 + $0x8] sm:$0xff]
  %v57 = vld [vmem:[%s2 + $0x10] sm:$0xff]
  %v58 = vld [vmem:[%s2 + $0x18] sm:$0xff]
  %v59 = vld [vmem:[%s2 + $0x20] sm:$0xff]
  %v60 = vld [vmem:[%s2 + $0x28] sm:$0xff]
  %v61 = vld [vmem:[%s2 + $0x30] sm:$0xff]
  %v62 = vld [vmem:[%s2 + $0x38] sm:$0xff]
  %v63 = vld [vmem:[%s2 + $0x40] sm:$0xff]
  %v64 = vld [vmem:[%s2 + $0x48] sm:$0xff]
  %v65 = vld [vmem:[%s2 + $0x50] sm:$0xff]
  %v66 = vld [vmem:[%s2 + $0x58] sm:$0xff]
  %v67 = vld [vmem:[%s2 + $0x60] sm:$0xff]
  %v68 = vld [vmem:[%s2 + $0x68] sm:$0xff]
  %v69 = vld [vmem:[%s2 + $0x70] sm:$0xff]
  %v70 = vld [vmem:[%s2 + $0x78] sm:$0xff]
  %v71 = vld [vmem:[%s3] sm:$0xff]
  %v72 = vld [vmem:[%s3 + $0x8] sm:$0xff]
  %v73 = vld [vmem:[%s3 + $0x10] sm:$0xff]
  %v74 = vld [vmem:[%s3 + $0x18] sm:$0xff]
  %v75 = vld [vmem:[%s3 + $0x20] sm:$0xff]
  %v76 = vld [vmem:[%s3 + $0x28] sm:$0xff]
  %v77 = vld [vmem:[%s3 + $0x30] sm:$0xff]
  %v78 = vld [vmem:[%s3 + $0x38] sm:$0xff]
  %v79 = vld [vmem:[%s3 + $0x40] sm:$0xff]
  %v80 = vld [vmem:[%s3 + $0x48] sm:$0xff]
  %v81 = vld [vmem:[%s3 + $0x50] sm:$0xff]
  %v82 = vld [vmem:[%s3 + $0x58] sm:$0xff]
  %v83 = vld [vmem:[%s3 + $0x60] sm:$0xff]
  %v84 = vld [vmem:[%s3 + $0x68] sm:$0xff]
  %v85 = vld [vmem:[%s3 + $0x70] sm:$0xff]
  %v86 = vld [vmem:[%s3 + $0x78] sm:$0xff]
  %vm87 = vcmp.ne.f32.partialorder %v23, 0.0
  %vm88 = vcmp.ne.f32.partialorder %v24, 0.0
  %vm89 = vcmp.ne.f32.partialorder %v25, 0.0
  %vm90 = vcmp.ne.f32.partialorder %v26, 0.0
  %vm91 = vcmp.ne.f32.partialorder %v27, 0.0
  %vm92 = vcmp.ne.f32.partialorder %v28, 0.0
  %vm93 = vcmp.ne.f32.partialorder %v29, 0.0
  %vm94 = vcmp.ne.f32.partialorder %v30, 0.0
  %vm95 = vcmp.ne.f32.partialorder %v31, 0.0
  %vm96 = vcmp.ne.f32.partialorder %v32, 0.0
  %vm97 = vcmp.ne.f32.partialorder %v33, 0.0
  %vm98 = vcmp.ne.f32.partialorder %v34, 0.0
  %vm99 = vcmp.ne.f32.partialorder %v35, 0.0
  %vm100 = vcmp.ne.f32.partialorder %v36, 0.0
  %vm101 = vcmp.ne.f32.partialorder %v37, 0.0
  %vm102 = vcmp.ne.f32.partialorder %v38, 0.0
  %v103 = vsel %vm87, 1, 0
  %v104 = vsel %vm88, 1, 0
  %v105 = vsel %vm89, 1, 0
  %v106 = vsel %vm90, 1, 0
  %v107 = vsel %vm91, 1, 0
  %v108 = vsel %vm92, 1, 0
  %v109 = vsel %vm93, 1, 0
  %v110 = vsel %vm94, 1, 0
  %v111 = vsel %vm95, 1, 0
  %v112 = vsel %vm96, 1, 0
  %v113 = vsel %vm97, 1, 0
  %v114 = vsel %vm98, 1, 0
  %v115 = vsel %vm99, 1, 0
  %v116 = vsel %vm100, 1, 0
  %v117 = vsel %vm101, 1, 0
  %v118 = vsel %vm102, 1, 0
  %v119 = vcvt.s32.f32 %v103
  %v120 = vcvt.s32.f32 %v104
  %v121 = vcvt.s32.f32 %v105
  %v122 = vcvt.s32.f32 %v106
  %v123 = vcvt.s32.f32 %v107
  %v124 = vcvt.s32.f32 %v108
  %v125 = vcvt.s32.f32 %v109
  %v126 = vcvt.s32.f32 %v110
  %v127 = vcvt.s32.f32 %v111
  %v128 = vcvt.s32.f32 %v112
  %v129 = vcvt.s32.f32 %v113
  %v130 = vcvt.s32.f32 %v114
  %v131 = vcvt.s32.f32 %v115
  %v132 = vcvt.s32.f32 %v116
  %v133 = vcvt.s32.f32 %v117
  %v134 = vcvt.s32.f32 %v118
  %135 = vmatprep.subr.mxu0 0.0
  %136 = vmatpush1.msra.mxu0 %v119
  %137 = vmatprep.subr.mxu0 0.0
  %138 = vmatpush1.msra.mxu0 %v120
  %139 = vmatprep.subr.mxu0 0.0
  %140 = vmatpush1.msra.mxu0 %v121
  %141 = vmatprep.subr.mxu0 0.0
  %142 = vmatpush1.msra.mxu0 %v122
  %143 = vmatprep.subr.mxu0 0.0
  %144 = vmatpush1.msra.mxu0 %v123
  %145 = vmatprep.subr.mxu0 0.0
  %146 = vmatpush1.msra.mxu0 %v124
  %147 = vmatprep.subr.mxu0 0.0
  %148 = vmatpush1.msra.mxu0 %v125
  %149 = vmatprep.subr.mxu0 0.0
  %150 = vmatpush1.msra.mxu0 %v126
  %151 = vmatprep.subr.mxu0 0.0
  %152 = vmatpush1.msra.mxu0 %v127
  %153 = vmatprep.subr.mxu0 0.0
  %154 = vmatpush1.msra.mxu0 %v128
  %155 = vmatprep.subr.mxu0 0.0
  %156 = vmatpush1.msra.mxu0 %v129
  %157 = vmatprep.subr.mxu0 0.0
  %158 = vmatpush1.msra.mxu0 %v130
  %159 = vmatprep.subr.mxu0 0.0
  %160 = vmatpush1.msra.mxu0 %v131
  %161 = vmatprep.subr.mxu0 0.0
  %162 = vmatpush1.msra.mxu0 %v132
  %163 = vmatprep.subr.mxu0 0.0
  %164 = vmatpush1.msra.mxu0 %v133
  %165 = vmatprep.subr.mxu0 0.0
  %166 = vmatpush1.msra.mxu0 %v134
  %167 = vmatprep.subr.mxu0 0.0
  %168 = vmatpush1.msra.mxu0 0.0
  %169 = vmatprep.subr.mxu0 0.0
  %170 = vmatpush1.msra.mxu0 0.0
  %171 = vmatprep.subr.mxu0 0.0
  %172 = vmatpush1.msra.mxu0 0.0
  %173 = vmatprep.subr.mxu0 0.0
  %174 = vmatpush1.msra.mxu0 0.0
  %175 = vmatprep.subr.mxu0 0.0
  %176 = vmatpush1.msra.mxu0 0.0
  %177 = vmatprep.subr.mxu0 0.0
  %178 = vmatpush1.msra.mxu0 0.0
  %179 = vmatprep.subr.mxu0 0.0
  %180 = vmatpush1.msra.mxu0 0.0
  %181 = vmatprep.subr.mxu0 0.0
  %182 = vmatpush1.msra.mxu0 0.0
  %183 = vmatprep.subr.mxu0 0.0
  %184 = vmatpush1.msra.mxu0 0.0
  %185 = vmatprep.subr.mxu0 0.0
  %186 = vmatpush1.msra.mxu0 0.0
  %187 = vmatprep.subr.mxu0 0.0
  %188 = vmatpush1.msra.mxu0 0.0
  %189 = vmatprep.subr.mxu0 0.0
  %190 = vmatpush1.msra.mxu0 0.0
  %191 = vmatprep.subr.mxu0 0.0
  %192 = vmatpush1.msra.mxu0 0.0
  %193 = vmatprep.subr.mxu0 0.0
  %194 = vmatpush1.msra.mxu0 0.0
  %195 = vmatprep.subr.mxu0 0.0
  %196 = vmatpush1.msra.mxu0 0.0
  %197 = vmatprep.subr.mxu0 0.0
  %198 = vmatpush1.msra.mxu0 0.0
  %199 = vmatprep.mubr.f32.mxu0 0.0
  %200 = vmatmul.mubr.f32.gmra.mrb[0].mxu0 %v119
  %v201 = vpop.f32.mrb[0].mxu0
  %v202 = vadd.f32 0.0, %v201
  %v203 = vpop.f32.mrb[0].mxu0
  %204 = vmatprep.mubr.f32.mxu0 0.0
  %205 = vmatmul.mubr.f32.gmra.mrb[0].mxu0 %v120
  %v206 = vpop.f32.mrb[0].mxu0
  %v207 = vadd.f32 0.0, %v206
  %v208 = vpop.f32.mrb[0].mxu0
  %209 = vmatprep.mubr.f32.mxu0 0.0
  %210 = vmatmul.mubr.f32.gmra.mrb[0].mxu0 %v121
  %v211 = vpop.f32.mrb[0].mxu0
  %v212 = vadd.f32 0.0, %v211
  %v213 = vpop.f32.mrb[0].mxu0
  %214 = vmatprep.mubr.f32.mxu0 0.0
  %215 = vmatmul.mubr.f32.gmra.mrb[0].mxu0 %v122
  %v216 = vpop.f32.mrb[0].mxu0
  %v217 = vadd.f32 0.0, %v216
  %v218 = vpop.f32.mrb[0].mxu0
  %219 = vmatprep.mubr.f32.mxu0 0.0
  %220 = vmatmul.mubr.f32.gmra.mrb[0].mxu0 %v123
  %v221 = vpop.f32.mrb[0].mxu0
  %v222 = vadd.f32 0.0, %v221
  %v223 = vpop.f32.mrb[0].mxu0
  %224 = vmatprep.mubr.f32.mxu0 0.0
  %225 = vmatmul.mubr.f32.gmra.mrb[0].mxu0 %v124
  %v226 = vpop.f32.mrb[0].mxu0
  %v227 = vadd.f32 0.0, %v226
  %v228 = vpop.f32.mrb[0].mxu0
  %229 = vmatprep.mubr.f32.mxu0 0.0
  %230 = vmatmul.mubr.f32.gmra.mrb[0].mxu0 %v125
  %v231 = vpop.f32.mrb[0].mxu0
  %v232 = vadd.f32 0.0, %v231
  %v233 = vpop.f32.mrb[0].mxu0
  %234 = vmatprep.mubr.f32.mxu0 0.0
  %235 = vmatmul.mubr.f32.gmra.mrb[0].mxu0 %v126
  %v236 = vpop.f32.mrb[0].mxu0
  %v237 = vadd.f32 0.0, %v236
  %v238 = vpop.f32.mrb[0].mxu0
  %239 = vmatprep.mubr.f32.mxu0 0.0
  %240 = vmatmul.mubr.f32.gmra.mrb[0].mxu0 %v127
  %v241 = vpop.f32.mrb[0].mxu0
  %v242 = vadd.f32 0.0, %v241
  %v243 = vpop.f32.mrb[0].mxu0
  %244 = vmatprep.mubr.f32.mxu0 0.0
  %245 = vmatmul.mubr.f32.gmra.mrb[0].mxu0 %v128
  %v246 = vpop.f32.mrb[0].mxu0
  %v247 = vadd.f32 0.0, %v246
  %v248 = vpop.f32.mrb[0].mxu0
  %249 = vmatprep.mubr.f32.mxu0 0.0
  %250 = vmatmul.mubr.f32.gmra.mrb[0].mxu0 %v129
  %v251 = vpop.f32.mrb[0].mxu0
  %v252 = vadd.f32 0.0, %v251
  %v253 = vpop.f32.mrb[0].mxu0
  %254 = vmatprep.mubr.f32.mxu0 0.0
  %255 = vmatmul.mubr.f32.gmra.mrb[0].mxu0 %v130
  %v256 = vpop.f32.mrb[0].mxu0
  %v257 = vadd.f32 0.0, %v256
  %v258 = vpop.f32.mrb[0].mxu0
  %259 = vmatprep.mubr.f32.mxu0 0.0
  %260 = vmatmul.mubr.f32.gmra.mrb[0].mxu0 %v131
  %v261 = vpop.f32.mrb[0].mxu0
  %v262 = vadd.f32 0.0, %v261
  %v263 = vpop.f32.mrb[0].mxu0
  %264 = vmatprep.mubr.f32.mxu0 0.0
  %265 = vmatmul.mubr.f32.gmra.mrb[0].mxu0 %v132
  %v266 = vpop.f32.mrb[0].mxu0
  %v267 = vadd.f32 0.0, %v266
  %v268 = vpop.f32.mrb[0].mxu0
  %269 = vmatprep.mubr.f32.mxu0 0.0
  %270 = vmatmul.mubr.f32.gmra.mrb[0].mxu0 %v133
  %v271 = vpop.f32.mrb[0].mxu0
  %v272 = vadd.f32 0.0, %v271
  %v273 = vpop.f32.mrb[0].mxu0
  %274 = vmatprep.mubr.f32.mxu0 0.0
  %275 = vmatmul.mubr.f32.gmra.mrb[0].mxu0 %v134
  %v276 = vpop.f32.mrb[0].mxu0
  %v277 = vadd.f32 0.0, %v276
  %v278 = vpop.f32.mrb[0].mxu0
  %279 = vdwg.mxu0
  %vm280 = vcmp.ne.f32.partialorder %v202, 0.0
  %vm281 = vcmp.ne.f32.partialorder %v207, 0.0
  %vm282 = vcmp.ne.f32.partialorder %v212, 0.0
  %vm283 = vcmp.ne.f32.partialorder %v217, 0.0
  %vm284 = vcmp.ne.f32.partialorder %v222, 0.0
  %vm285 = vcmp.ne.f32.partialorder %v227, 0.0
  %vm286 = vcmp.ne.f32.partialorder %v232, 0.0
  %vm287 = vcmp.ne.f32.partialorder %v237, 0.0
  %vm288 = vcmp.ne.f32.partialorder %v242, 0.0
  %vm289 = vcmp.ne.f32.partialorder %v247, 0.0
  %vm290 = vcmp.ne.f32.partialorder %v252, 0.0
  %vm291 = vcmp.ne.f32.partialorder %v257, 0.0
  %vm292 = vcmp.ne.f32.partialorder %v262, 0.0
  %vm293 = vcmp.ne.f32.partialorder %v267, 0.0
  %vm294 = vcmp.ne.f32.partialorder %v272, 0.0
  %vm295 = vcmp.ne.f32.partialorder %v277, 0.0
  %v296 = vsel %vm280, 1, 0
  %v297 = vsel %vm281, 1, 0
  %v298 = vsel %vm282, 1, 0
  %v299 = vsel %vm283, 1, 0
  %v300 = vsel %vm284, 1, 0
  %v301 = vsel %vm285, 1, 0
  %v302 = vsel %vm286, 1, 0
  %v303 = vsel %vm287, 1, 0
  %v304 = vsel %vm288, 1, 0
  %v305 = vsel %vm289, 1, 0
  %v306 = vsel %vm290, 1, 0
  %v307 = vsel %vm291, 1, 0
  %v308 = vsel %vm292, 1, 0
  %v309 = vsel %vm293, 1, 0
  %v310 = vsel %vm294, 1, 0
  %v311 = vsel %vm295, 1, 0
  %v312 = vcvt.s32.f32 %v296
  %v313 = vcvt.s32.f32 %v297
  %v314 = vcvt.s32.f32 %v298
  %v315 = vcvt.s32.f32 %v299
  %v316 = vcvt.s32.f32 %v300
  %v317 = vcvt.s32.f32 %v301
  %v318 = vcvt.s32.f32 %v302
  %v319 = vcvt.s32.f32 %v303
  %v320 = vcvt.s32.f32 %v304
  %v321 = vcvt.s32.f32 %v305
  %v322 = vcvt.s32.f32 %v306
  %v323 = vcvt.s32.f32 %v307
  %v324 = vcvt.s32.f32 %v308
  %v325 = vcvt.s32.f32 %v309
  %v326 = vcvt.s32.f32 %v310
  %v327 = vcvt.s32.f32 %v311
  %328 = vmatprep.subr.mxu0 0.0
  %329 = vmatpush1.msra.mxu0 %v312
  %330 = vmatprep.subr.mxu0 0.0
  %331 = vmatpush1.msra.mxu0 %v313
  %332 = vmatprep.subr.mxu0 0.0
  %333 = vmatpush1.msra.mxu0 %v314
  %334 = vmatprep.subr.mxu0 0.0
  %335 = vmatpush1.msra.mxu0 %v315
  %336 = vmatprep.subr.mxu0 0.0
  %337 = vmatpush1.msra.mxu0 %v316
  %338 = vmatprep.subr.mxu0 0.0
  %339 = vmatpush1.msra.mxu0 %v317
  %340 = vmatprep.subr.mxu0 0.0
  %341 = vmatpush1.msra.mxu0 %v318
  %342 = vmatprep.subr.mxu0 0.0
  %343 = vmatpush1.msra.mxu0 %v319
  %344 = vmatprep.subr.mxu0 0.0
  %345 = vmatpush1.msra.mxu0 %v320
  %346 = vmatprep.subr.mxu0 0.0
  %347 = vmatpush1.msra.mxu0 %v321
  %348 = vmatprep.subr.mxu0 0.0
  %349 = vmatpush1.msra.mxu0 %v322
  %350 = vmatprep.subr.mxu0 0.0
  %351 = vmatpush1.msra.mxu0 %v323
  %352 = vmatprep.subr.mxu0 0.0
  %353 = vmatpush1.msra.mxu0 %v324
  %354 = vmatprep.subr.mxu0 0.0
  %355 = vmatpush1.msra.mxu0 %v325
  %356 = vmatprep.subr.mxu0 0.0
  %357 = vmatpush1.msra.mxu0 %v326
  %358 = vmatprep.subr.mxu0 0.0
  %359 = vmatpush1.msra.mxu0 %v327
  %360 = vmatprep.subr.mxu0 0.0
  %361 = vmatpush1.msra.mxu0 0.0
  %362 = vmatprep.subr.mxu0 0.0
  %363 = vmatpush1.msra.mxu0 0.0
  %364 = vmatprep.subr.mxu0 0.0
  %365 = vmatpush1.msra.mxu0 0.0
  %366 = vmatprep.subr.mxu0 0.0
  %367 = vmatpush1.msra.mxu0 0.0
  %368 = vmatprep.subr.mxu0 0.0
  %369 = vmatpush1.msra.mxu0 0.0
  %370 = vmatprep.subr.mxu0 0.0
  %371 = vmatpush1.msra.mxu0 0.0
  %372 = vmatprep.subr.mxu0 0.0
  %373 = vmatpush1.msra.mxu0 0.0
  %374 = vmatprep.subr.mxu0 0.0
  %375 = vmatpush1.msra.mxu0 0.0
  %376 = vmatprep.subr.mxu0 0.0
  %377 = vmatpush1.msra.mxu0 0.0
  %378 = vmatprep.subr.mxu0 0.0
  %379 = vmatpush1.msra.mxu0 0.0
  %380 = vmatprep.subr.mxu0 0.0
  %381 = vmatpush1.msra.mxu0 0.0
  %382 = vmatprep.subr.mxu0 0.0
  %383 = vmatpush1.msra.mxu0 0.0
  %384 = vmatprep.subr.mxu0 0.0
  %385 = vmatpush1.msra.mxu0 0.0
  %386 = vmatprep.subr.mxu0 0.0
  %387 = vmatpush1.msra.mxu0 0.0
  %388 = vmatprep.subr.mxu0 0.0
  %389 = vmatpush1.msra.mxu0 0.0
  %390 = vmatprep.subr.mxu0 0.0
  %391 = vmatpush1.msra.mxu0 0.0
  %392 = vmatprep.mubr.f32.mxu0 0.0
  %393 = vmatmul.mubr.f32.gmra.mrb[0].mxu0 %v55
  %v394 = vpop.f32.mrb[0].mxu0
  %v395 = vadd.f32 0.0, %v394
  %v396 = vpop.f32.mrb[0].mxu0
  %397 = vmatprep.mubr.f32.mxu0 0.0
  %398 = vmatmul.mubr.f32.gmra.mrb[0].mxu0 %v56
  %v399 = vpop.f32.mrb[0].mxu0
  %v400 = vadd.f32 0.0, %v399
  %v401 = vpop.f32.mrb[0].mxu0
  %402 = vmatprep.mubr.f32.mxu0 0.0
  %403 = vmatmul.mubr.f32.gmra.mrb[0].mxu0 %v57
  %v404 = vpop.f32.mrb[0].mxu0
  %v405 = vadd.f32 0.0, %v404
  %v406 = vpop.f32.mrb[0].mxu0
  %407 = vmatprep.mubr.f32.mxu0 0.0
  %408 = vmatmul.mubr.f32.gmra.mrb[0].mxu0 %v58
  %v409 = vpop.f32.mrb[0].mxu0
  %v410 = vadd.f32 0.0, %v409
  %v411 = vpop.f32.mrb[0].mxu0
  %412 = vmatprep.mubr.f32.mxu0 0.0
  %413 = vmatmul.mubr.f32.gmra.mrb[0].mxu0 %v59
  %v414 = vpop.f32.mrb[0].mxu0
  %v415 = vadd.f32 0.0, %v414
  %v416 = vpop.f32.mrb[0].mxu0
  %417 = vmatprep.mubr.f32.mxu0 0.0
  %418 = vmatmul.mubr.f32.gmra.mrb[0].mxu0 %v60
  %v419 = vpop.f32.mrb[0].mxu0
  %v420 = vadd.f32 0.0, %v419
  %v421 = vpop.f32.mrb[0].mxu0
  %422 = vmatprep.mubr.f32.mxu0 0.0
  %423 = vmatmul.mubr.f32.gmra.mrb[0].mxu0 %v61
  %v424 = vpop.f32.mrb[0].mxu0
  %v425 = vadd.f32 0.0, %v424
  %v426 = vpop.f32.mrb[0].mxu0
  %427 = vmatprep.mubr.f32.mxu0 0.0
  %428 = vmatmul.mubr.f32.gmra.mrb[0].mxu0 %v62
  %v429 = vpop.f32.mrb[0].mxu0
  %v430 = vadd.f32 0.0, %v429
  %v431 = vpop.f32.mrb[0].mxu0
  %432 = vmatprep.mubr.f32.mxu0 0.0
  %433 = vmatmul.mubr.f32.gmra.mrb[0].mxu0 %v63
  %v434 = vpop.f32.mrb[0].mxu0
  %v435 = vadd.f32 0.0, %v434
  %v436 = vpop.f32.mrb[0].mxu0
  %437 = vmatprep.mubr.f32.mxu0 0.0
  %438 = vmatmul.mubr.f32.gmra.mrb[0].mxu0 %v64
  %v439 = vpop.f32.mrb[0].mxu0
  %v440 = vadd.f32 0.0, %v439
  %v441 = vpop.f32.mrb[0].mxu0
  %442 = vmatprep.mubr.f32.mxu0 0.0
  %443 = vmatmul.mubr.f32.gmra.mrb[0].mxu0 %v65
  %v444 = vpop.f32.mrb[0].mxu0
  %v445 = vadd.f32 0.0, %v444
  %v446 = vpop.f32.mrb[0].mxu0
  %447 = vmatprep.mubr.f32.mxu0 0.0
  %448 = vmatmul.mubr.f32.gmra.mrb[0].mxu0 %v66
  %v449 = vpop.f32.mrb[0].mxu0
  %v450 = vadd.f32 0.0, %v449
  %v451 = vpop.f32.mrb[0].mxu0
  %452 = vmatprep.mubr.f32.mxu0 0.0
  %453 = vmatmul.mubr.f32.gmra.mrb[0].mxu0 %v67
  %v454 = vpop.f32.mrb[0].mxu0
  %v455 = vadd.f32 0.0, %v454
  %v456 = vpop.f32.mrb[0].mxu0
  %457 = vmatprep.mubr.f32.mxu0 0.0
  %458 = vmatmul.mubr.f32.gmra.mrb[0].mxu0 %v68
  %v459 = vpop.f32.mrb[0].mxu0
  %v460 = vadd.f32 0.0, %v459
  %v461 = vpop.f32.mrb[0].mxu0
  %462 = vmatprep.mubr.f32.mxu0 0.0
  %463 = vmatmul.mubr.f32.gmra.mrb[0].mxu0 %v69
  %v464 = vpop.f32.mrb[0].mxu0
  %v465 = vadd.f32 0.0, %v464
  %v466 = vpop.f32.mrb[0].mxu0
  %467 = vmatprep.mubr.f32.mxu0 0.0
  %468 = vmatmul.mubr.f32.gmra.mrb[0].mxu0 %v70
  %v469 = vpop.f32.mrb[0].mxu0
  %v470 = vadd.f32 0.0, %v469
  %v471 = vpop.f32.mrb[0].mxu0
  %472 = vdwg.mxu0
  %473 = vmatprep.subr.mxu0 0.0
  %474 = vmatpush1.xpose.msra.mxu0 %v55
  %475 = vmatprep.subr.mxu0 0.0
  %476 = vmatpush1.xpose.msra.mxu0 %v56
  %477 = vmatprep.subr.mxu0 0.0
  %478 = vmatpush1.xpose.msra.mxu0 %v57
  %479 = vmatprep.subr.mxu0 0.0
  %480 = vmatpush1.xpose.msra.mxu0 %v58
  %481 = vmatprep.subr.mxu0 0.0
  %482 = vmatpush1.xpose.msra.mxu0 %v59
  %483 = vmatprep.subr.mxu0 0.0
  %484 = vmatpush1.xpose.msra.mxu0 %v60
  %485 = vmatprep.subr.mxu0 0.0
  %486 = vmatpush1.xpose.msra.mxu0 %v61
  %487 = vmatprep.subr.mxu0 0.0
  %488 = vmatpush1.xpose.msra.mxu0 %v62
  %489 = vmatprep.subr.mxu0 0.0
  %490 = vmatpush1.xpose.msra.mxu0 %v63
  %491 = vmatprep.subr.mxu0 0.0
  %492 = vmatpush1.xpose.msra.mxu0 %v64
  %493 = vmatprep.subr.mxu0 0.0
  %494 = vmatpush1.xpose.msra.mxu0 %v65
  %495 = vmatprep.subr.mxu0 0.0
  %496 = vmatpush1.xpose.msra.mxu0 %v66
  %497 = vmatprep.subr.mxu0 0.0
  %498 = vmatpush1.xpose.msra.mxu0 %v67
  %499 = vmatprep.subr.mxu0 0.0
  %500 = vmatpush1.xpose.msra.mxu0 %v68
  %501 = vmatprep.subr.mxu0 0.0
  %502 = vmatpush1.xpose.msra.mxu0 %v69
  %503 = vmatprep.subr.mxu0 0.0
  %504 = vmatpush1.xpose.msra.mxu0 %v70
  %505 = vmatprep.subr.mxu0 0.0
  %506 = vmatpush1.xpose.msra.mxu0 0.0
  %507 = vmatprep.subr.mxu0 0.0
  %508 = vmatpush1.xpose.msra.mxu0 0.0
  %509 = vmatprep.subr.mxu0 0.0
  %510 = vmatpush1.xpose.msra.mxu0 0.0
  %511 = vmatprep.subr.mxu0 0.0
  %512 = vmatpush1.xpose.msra.mxu0 0.0
  %513 = vmatprep.subr.mxu0 0.0
  %514 = vmatpush1.xpose.msra.mxu0 0.0
  %515 = vmatprep.subr.mxu0 0.0
  %516 = vmatpush1.xpose.msra.mxu0 0.0
  %517 = vmatprep.subr.mxu0 0.0
  %518 = vmatpush1.xpose.msra.mxu0 0.0
  %519 = vmatprep.subr.mxu0 0.0
  %520 = vmatpush1.xpose.msra.mxu0 0.0
  %521 = vmatprep.subr.mxu0 0.0
  %522 = vmatpush1.xpose.msra.mxu0 0.0
  %523 = vmatprep.subr.mxu0 0.0
  %524 = vmatpush1.xpose.msra.mxu0 0.0
  %525 = vmatprep.subr.mxu0 0.0
  %526 = vmatpush1.xpose.msra.mxu0 0.0
  %527 = vmatprep.subr.mxu0 0.0
  %528 = vmatpush1.xpose.msra.mxu0 0.0
  %529 = vmatprep.subr.mxu0 0.0
  %530 = vmatpush1.xpose.msra.mxu0 0.0
  %531 = vmatprep.subr.mxu0 0.0
  %532 = vmatpush1.xpose.msra.mxu0 0.0
  %533 = vmatprep.subr.mxu0 0.0
  %534 = vmatpush1.xpose.msra.mxu0 0.0
  %535 = vmatprep.subr.mxu0 0.0
  %536 = vmatpush1.xpose.msra.mxu0 0.0
  %537 = vmatprep.mubr.f32.mxu0 0.0
  %538 = vmatmul.mubr.f32.gmra.mrb[0].mxu0 %v395
  %v539 = vpop.f32.mrb[0].mxu0
  %v540 = vadd.f32 0.0, %v539
  %v541 = vpop.f32.mrb[0].mxu0
  %542 = vmatprep.mubr.f32.mxu0 0.0
  %543 = vmatmul.mubr.f32.gmra.mrb[0].mxu0 %v400
  %v544 = vpop.f32.mrb[0].mxu0
  %v545 = vadd.f32 0.0, %v544
  %v546 = vpop.f32.mrb[0].mxu0
  %547 = vmatprep.mubr.f32.mxu0 0.0
  %548 = vmatmul.mubr.f32.gmra.mrb[0].mxu0 %v405
  %v549 = vpop.f32.mrb[0].mxu0
  %v550 = vadd.f32 0.0, %v549
  %v551 = vpop.f32.mrb[0].mxu0
  %552 = vmatprep.mubr.f32.mxu0 0.0
  %553 = vmatmul.mubr.f32.gmra.mrb[0].mxu0 %v410
  %v554 = vpop.f32.mrb[0].mxu0
  %v555 = vadd.f32 0.0, %v554
  %v556 = vpop.f32.mrb[0].mxu0
  %557 = vmatprep.mubr.f32.mxu0 0.0
  %558 = vmatmul.mubr.f32.gmra.mrb[0].mxu0 %v415
  %v559 = vpop.f32.mrb[0].mxu0
  %v560 = vadd.f32 0.0, %v559
  %v561 = vpop.f32.mrb[0].mxu0
  %562 = vmatprep.mubr.f32.mxu0 0.0
  %563 = vmatmul.mubr.f32.gmra.mrb[0].mxu0 %v420
  %v564 = vpop.f32.mrb[0].mxu0
  %v565 = vadd.f32 0.0, %v564
  %v566 = vpop.f32.mrb[0].mxu0
  %567 = vmatprep.mubr.f32.mxu0 0.0
  %568 = vmatmul.mubr.f32.gmra.mrb[0].mxu0 %v425
  %v569 = vpop.f32.mrb[0].mxu0
  %v570 = vadd.f32 0.0, %v569
  %v571 = vpop.f32.mrb[0].mxu0
  %572 = vmatprep.mubr.f32.mxu0 0.0
  %573 = vmatmul.mubr.f32.gmra.mrb[0].mxu0 %v430
  %v574 = vpop.f32.mrb[0].mxu0
  %v575 = vadd.f32 0.0, %v574
  %v576 = vpop.f32.mrb[0].mxu0
  %577 = vmatprep.mubr.f32.mxu0 0.0
  %578 = vmatmul.mubr.f32.gmra.mrb[0].mxu0 %v435
  %v579 = vpop.f32.mrb[0].mxu0
  %v580 = vadd.f32 0.0, %v579
  %v581 = vpop.f32.mrb[0].mxu0
  %582 = vmatprep.mubr.f32.mxu0 0.0
  %583 = vmatmul.mubr.f32.gmra.mrb[0].mxu0 %v440
  %v584 = vpop.f32.mrb[0].mxu0
  %v585 = vadd.f32 0.0, %v584
  %v586 = vpop.f32.mrb[0].mxu0
  %587 = vmatprep.mubr.f32.mxu0 0.0
  %588 = vmatmul.mubr.f32.gmra.mrb[0].mxu0 %v445
  %v589 = vpop.f32.mrb[0].mxu0
  %v590 = vadd.f32 0.0, %v589
  %v591 = vpop.f32.mrb[0].mxu0
  %592 = vmatprep.mubr.f32.mxu0 0.0
  %593 = vmatmul.mubr.f32.gmra.mrb[0].mxu0 %v450
  %v594 = vpop.f32.mrb[0].mxu0
  %v595 = vadd.f32 0.0, %v594
  %v596 = vpop.f32.mrb[0].mxu0
  %597 = vmatprep.mubr.f32.mxu0 0.0
  %598 = vmatmul.mubr.f32.gmra.mrb[0].mxu0 %v455
  %v599 = vpop.f32.mrb[0].mxu0
  %v600 = vadd.f32 0.0, %v599
  %v601 = vpop.f32.mrb[0].mxu0
  %602 = vmatprep.mubr.f32.mxu0 0.0
  %603 = vmatmul.mubr.f32.gmra.mrb[0].mxu0 %v460
  %v604 = vpop.f32.mrb[0].mxu0
  %v605 = vadd.f32 0.0, %v604
  %v606 = vpop.f32.mrb[0].mxu0
  %607 = vmatprep.mubr.f32.mxu0 0.0
  %608 = vmatmul.mubr.f32.gmra.mrb[0].mxu0 %v465
  %v609 = vpop.f32.mrb[0].mxu0
  %v610 = vadd.f32 0.0, %v609
  %v611 = vpop.f32.mrb[0].mxu0
  %612 = vmatprep.mubr.f32.mxu0 0.0
  %613 = vmatmul.mubr.f32.gmra.mrb[0].mxu0 %v470
  %v614 = vpop.f32.mrb[0].mxu0
  %v615 = vadd.f32 0.0, %v614
  %v616 = vpop.f32.mrb[0].mxu0
  %617 = vdwg.mxu0
  %618 = vadd.xlane.f32.xlu0 %v540
  %v619 = vpop.xlane.xlu0 %618
  %620 = vadd.xlane.f32.xlu0 %v545
  %v621 = vpop.xlane.xlu0 %620
  %622 = vadd.xlane.f32.xlu0 %v550
  %v623 = vpop.xlane.xlu0 %622
  %624 = vadd.xlane.f32.xlu0 %v555
  %v625 = vpop.xlane.xlu0 %624
  %626 = vadd.xlane.f32.xlu0 %v560
  %v627 = vpop.xlane.xlu0 %626
  %628 = vadd.xlane.f32.xlu0 %v565
  %v629 = vpop.xlane.xlu0 %628
  %630 = vadd.xlane.f32.xlu0 %v570
  %v631 = vpop.xlane.xlu0 %630
  %632 = vadd.xlane.f32.xlu0 %v575
  %v633 = vpop.xlane.xlu0 %632
  %634 = vadd.xlane.f32.xlu0 %v580
  %v635 = vpop.xlane.xlu0 %634
  %636 = vadd.xlane.f32.xlu0 %v585
  %v637 = vpop.xlane.xlu0 %636
  %638 = vadd.xlane.f32.xlu0 %v590
  %v639 = vpop.xlane.xlu0 %638
  %640 = vadd.xlane.f32.xlu0 %v595
  %v641 = vpop.xlane.xlu0 %640
  %642 = vadd.xlane.f32.xlu0 %v600
  %v643 = vpop.xlane.xlu0 %642
  %644 = vadd.xlane.f32.xlu0 %v605
  %v645 = vpop.xlane.xlu0 %644
  %646 = vadd.xlane.f32.xlu0 %v610
  %v647 = vpop.xlane.xlu0 %646
  %648 = vadd.xlane.f32.xlu0 %v615
  %v649 = vpop.xlane.xlu0 %648
  %v650 = vrcp.pop %v619
  %v651 = vrcp.pop %v621
  %v652 = vrcp.pop %v623
  %v653 = vrcp.pop %v625
  %v654 = vrcp.pop %v627
  %v655 = vrcp.pop %v629
  %v656 = vrcp.pop %v631
  %v657 = vrcp.pop %v633
  %v658 = vrcp.pop %v635
  %v659 = vrcp.pop %v637
  %v660 = vrcp.pop %v639
  %v661 = vrcp.pop %v641
  %v662 = vrcp.pop %v643
  %v663 = vrcp.pop %v645
  %v664 = vrcp.pop %v647
  %v665 = vrcp.pop %v649
  %v682 = vlaneseq
  %v683 = vand.u32 %v682, 127
  %v684 = vlaneseq
  %v685 = vshrl.u32 %v684, 7
  %v686 = vsub.s32 %v683, %v685
  %v687 = vrot.slane %v650, %v686
  %v688 = vadd.s32 %v683, 4294967288
  %v689 = vlaneseq
  %v690 = vshrl.u32 %v689, 7
  %v691 = vsub.s32 %v688, %v690
  %v692 = vrot.slane %v651, %v691
  %vm693 = vcmask 130112
  %v694 = vsel %vm693, %v692, %v687
  %v695 = vadd.s32 %v683, 4294967280
  %v696 = vlaneseq
  %v697 = vshrl.u32 %v696, 7
  %v698 = vsub.s32 %v695, %v697
  %v699 = vrot.slane %v652, %v698
  %vm700 = vcmask 195712
  %v701 = vsel %vm700, %v699, %v694
  %v702 = vadd.s32 %v683, 4294967272
  %v703 = vlaneseq
  %v704 = vshrl.u32 %v703, 7
  %v705 = vsub.s32 %v702, %v704
  %v706 = vrot.slane %v653, %v705
  %vm707 = vcmask 261312
  %v708 = vsel %vm707, %v706, %v701
  %v709 = vadd.s32 %v683, 4294967264
  %v710 = vlaneseq
  %v711 = vshrl.u32 %v710, 7
  %v712 = vsub.s32 %v709, %v711
  %v713 = vrot.slane %v654, %v712
  %vm714 = vcmask 326912
  %v715 = vsel %vm714, %v713, %v708
  %v716 = vadd.s32 %v683, 4294967256
  %v717 = vlaneseq
  %v718 = vshrl.u32 %v717, 7
  %v719 = vsub.s32 %v716, %v718
  %v720 = vrot.slane %v655, %v719
  %vm721 = vcmask 392512
  %v722 = vsel %vm721, %v720, %v715
  %v723 = vadd.s32 %v683, 4294967248
  %v724 = vlaneseq
  %v725 = vshrl.u32 %v724, 7
  %v726 = vsub.s32 %v723, %v725
  %v727 = vrot.slane %v656, %v726
  %vm728 = vcmask 458112
  %v729 = vsel %vm728, %v727, %v722
  %v730 = vadd.s32 %v683, 4294967240
  %v731 = vlaneseq
  %v732 = vshrl.u32 %v731, 7
  %v733 = vsub.s32 %v730, %v732
  %v734 = vrot.slane %v657, %v733
  %vm735 = vcmask 523712
  %v736 = vsel %vm735, %v734, %v729
  %v737 = vadd.s32 %v683, 4294967232
  %v738 = vlaneseq
  %v739 = vshrl.u32 %v738, 7
  %v740 = vsub.s32 %v737, %v739
  %v741 = vrot.slane %v658, %v740
  %vm742 = vcmask 589312
  %v743 = vsel %vm742, %v741, %v736
  %v744 = vadd.s32 %v683, 4294967224
  %v745 = vlaneseq
  %v746 = vshrl.u32 %v745, 7
  %v747 = vsub.s32 %v744, %v746
  %v748 = vrot.slane %v659, %v747
  %vm749 = vcmask 654912
  %v750 = vsel %vm749, %v748, %v743
  %v751 = vadd.s32 %v683, 4294967216
  %v752 = vlaneseq
  %v753 = vshrl.u32 %v752, 7
  %v754 = vsub.s32 %v751, %v753
  %v755 = vrot.slane %v660, %v754
  %vm756 = vcmask 720512
  %v757 = vsel %vm756, %v755, %v750
  %v758 = vadd.s32 %v683, 4294967208
  %v759 = vlaneseq
  %v760 = vshrl.u32 %v759, 7
  %v761 = vsub.s32 %v758, %v760
  %v762 = vrot.slane %v661, %v761
  %vm763 = vcmask 786112
  %v764 = vsel %vm763, %v762, %v757
  %v765 = vadd.s32 %v683, 4294967200
  %v766 = vlaneseq
  %v767 = vshrl.u32 %v766, 7
  %v768 = vsub.s32 %v765, %v767
  %v769 = vrot.slane %v662, %v768
  %vm770 = vcmask 851712
  %v771 = vsel %vm770, %v769, %v764
  %v772 = vadd.s32 %v683, 4294967192
  %v773 = vlaneseq
  %v774 = vshrl.u32 %v773, 7
  %v775 = vsub.s32 %v772, %v774
  %v776 = vrot.slane %v663, %v775
  %vm777 = vcmask 917312
  %v778 = vsel %vm777, %v776, %v771
  %v779 = vadd.s32 %v683, 4294967184
  %v780 = vlaneseq
  %v781 = vshrl.u32 %v780, 7
  %v782 = vsub.s32 %v779, %v781
  %v783 = vrot.slane %v664, %v782
  %vm784 = vcmask 982912
  %v785 = vsel %vm784, %v783, %v778
  %v786 = vadd.s32 %v683, 4294967176
  %v787 = vlaneseq
  %v788 = vshrl.u32 %v787, 7
  %v789 = vsub.s32 %v786, %v788
  %v790 = vrot.slane %v665, %v789
  %vm791 = vcmask 1048512
  %v792 = vsel %vm791, %v790, %v785
  %vm793 = vcmask 1042434
  %v794 = vsel %vm793, %v792, %v792
  %vm795 = vcmask 1043459
  %v796 = vsel %vm795, %v792, %v794
  %vm797 = vcmask 1044484
  %v798 = vsel %vm797, %v792, %v796
  %vm799 = vcmask 1045509
  %v800 = vsel %vm799, %v792, %v798
  %vm801 = vcmask 1046534
  %v802 = vsel %vm801, %v792, %v800
  %vm803 = vcmask 1047559
  %v804 = vsel %vm803, %v792, %v802
  %v806 = vmul.f32 %v540, %v804
  %v807 = vmul.f32 %v545, %v804
  %v808 = vmul.f32 %v550, %v804
  %v809 = vmul.f32 %v555, %v804
  %v810 = vmul.f32 %v560, %v804
  %v811 = vmul.f32 %v565, %v804
  %v812 = vmul.f32 %v570, %v804
  %v813 = vmul.f32 %v575, %v804
  %v814 = vmul.f32 %v580, %v804
  %v815 = vmul.f32 %v585, %v804
  %v816 = vmul.f32 %v590, %v804
  %v817 = vmul.f32 %v595, %v804
  %v818 = vmul.f32 %v600, %v804
  %v819 = vmul.f32 %v605, %v804
  %v820 = vmul.f32 %v610, %v804
  %v821 = vmul.f32 %v615, %v804
  %822 = vmatprep.subr.mxu0 0.0
  %823 = vmatpush1.msra.mxu0 %v39
  %824 = vmatprep.subr.mxu0 0.0
  %825 = vmatpush1.msra.mxu0 %v40
  %826 = vmatprep.subr.mxu0 0.0
  %827 = vmatpush1.msra.mxu0 %v41
  %828 = vmatprep.subr.mxu0 0.0
  %829 = vmatpush1.msra.mxu0 %v42
  %830 = vmatprep.subr.mxu0 0.0
  %831 = vmatpush1.msra.mxu0 %v43
  %832 = vmatprep.subr.mxu0 0.0
  %833 = vmatpush1.msra.mxu0 %v44
  %834 = vmatprep.subr.mxu0 0.0
  %835 = vmatpush1.msra.mxu0 %v45
  %836 = vmatprep.subr.mxu0 0.0
  %837 = vmatpush1.msra.mxu0 %v46
  %838 = vmatprep.subr.mxu0 0.0
  %839 = vmatpush1.msra.mxu0 %v47
  %840 = vmatprep.subr.mxu0 0.0
  %841 = vmatpush1.msra.mxu0 %v48
  %842 = vmatprep.subr.mxu0 0.0
  %843 = vmatpush1.msra.mxu0 %v49
  %844 = vmatprep.subr.mxu0 0.0
  %845 = vmatpush1.msra.mxu0 %v50
  %846 = vmatprep.subr.mxu0 0.0
  %847 = vmatpush1.msra.mxu0 %v51
  %848 = vmatprep.subr.mxu0 0.0
  %849 = vmatpush1.msra.mxu0 %v52
  %850 = vmatprep.subr.mxu0 0.0
  %851 = vmatpush1.msra.mxu0 %v53
  %852 = vmatprep.subr.mxu0 0.0
  %853 = vmatpush1.msra.mxu0 %v54
  %854 = vmatprep.subr.mxu0 0.0
  %855 = vmatpush1.msra.mxu0 0.0
  %856 = vmatprep.subr.mxu0 0.0
  %857 = vmatpush1.msra.mxu0 0.0
  %858 = vmatprep.subr.mxu0 0.0
  %859 = vmatpush1.msra.mxu0 0.0
  %860 = vmatprep.subr.mxu0 0.0
  %861 = vmatpush1.msra.mxu0 0.0
  %862 = vmatprep.subr.mxu0 0.0
  %863 = vmatpush1.msra.mxu0 0.0
  %864 = vmatprep.subr.mxu0 0.0
  %865 = vmatpush1.msra.mxu0 0.0
  %866 = vmatprep.subr.mxu0 0.0
  %867 = vmatpush1.msra.mxu0 0.0
  %868 = vmatprep.subr.mxu0 0.0
  %869 = vmatpush1.msra.mxu0 0.0
  %870 = vmatprep.subr.mxu0 0.0
  %871 = vmatpush1.msra.mxu0 0.0
  %872 = vmatprep.subr.mxu0 0.0
  %873 = vmatpush1.msra.mxu0 0.0
  %874 = vmatprep.subr.mxu0 0.0
  %875 = vmatpush1.msra.mxu0 0.0
  %876 = vmatprep.subr.mxu0 0.0
  %877 = vmatpush1.msra.mxu0 0.0
  %878 = vmatprep.subr.mxu0 0.0
  %879 = vmatpush1.msra.mxu0 0.0
  %880 = vmatprep.subr.mxu0 0.0
  %881 = vmatpush1.msra.mxu0 0.0
  %882 = vmatprep.subr.mxu0 0.0
  %883 = vmatpush1.msra.mxu0 0.0
  %884 = vmatprep.subr.mxu0 0.0
  %885 = vmatpush1.msra.mxu0 0.0
  %886 = vmatprep.mubr.f32.mxu0 0.0
  %887 = vmatmul.mubr.f32.gmra.mrb[0].mxu0 %v55
  %v888 = vpop.f32.mrb[0].mxu0
  %v889 = vadd.f32 0.0, %v888
  %v890 = vpop.f32.mrb[0].mxu0
  %891 = vmatprep.mubr.f32.mxu0 0.0
  %892 = vmatmul.mubr.f32.gmra.mrb[0].mxu0 %v56
  %v893 = vpop.f32.mrb[0].mxu0
  %v894 = vadd.f32 0.0, %v893
  %v895 = vpop.f32.mrb[0].mxu0
  %896 = vmatprep.mubr.f32.mxu0 0.0
  %897 = vmatmul.mubr.f32.gmra.mrb[0].mxu0 %v57
  %v898 = vpop.f32.mrb[0].mxu0
  %v899 = vadd.f32 0.0, %v898
  %v900 = vpop.f32.mrb[0].mxu0
  %901 = vmatprep.mubr.f32.mxu0 0.0
  %902 = vmatmul.mubr.f32.gmra.mrb[0].mxu0 %v58
  %v903 = vpop.f32.mrb[0].mxu0
  %v904 = vadd.f32 0.0, %v903
  %v905 = vpop.f32.mrb[0].mxu0
  %906 = vmatprep.mubr.f32.mxu0 0.0
  %907 = vmatmul.mubr.f32.gmra.mrb[0].mxu0 %v59
  %v908 = vpop.f32.mrb[0].mxu0
  %v909 = vadd.f32 0.0, %v908
  %v910 = vpop.f32.mrb[0].mxu0
  %911 = vmatprep.mubr.f32.mxu0 0.0
  %912 = vmatmul.mubr.f32.gmra.mrb[0].mxu0 %v60
  %v913 = vpop.f32.mrb[0].mxu0
  %v914 = vadd.f32 0.0, %v913
  %v915 = vpop.f32.mrb[0].mxu0
  %916 = vmatprep.mubr.f32.mxu0 0.0
  %917 = vmatmul.mubr.f32.gmra.mrb[0].mxu0 %v61
  %v918 = vpop.f32.mrb[0].mxu0
  %v919 = vadd.f32 0.0, %v918
  %v920 = vpop.f32.mrb[0].mxu0
  %921 = vmatprep.mubr.f32.mxu0 0.0
  %922 = vmatmul.mubr.f32.gmra.mrb[0].mxu0 %v62
  %v923 = vpop.f32.mrb[0].mxu0
  %v924 = vadd.f32 0.0, %v923
  %v925 = vpop.f32.mrb[0].mxu0
  %926 = vmatprep.mubr.f32.mxu0 0.0
  %927 = vmatmul.mubr.f32.gmra.mrb[0].mxu0 %v63
  %v928 = vpop.f32.mrb[0].mxu0
  %v929 = vadd.f32 0.0, %v928
  %v930 = vpop.f32.mrb[0].mxu0
  %931 = vmatprep.mubr.f32.mxu0 0.0
  %932 = vmatmul.mubr.f32.gmra.mrb[0].mxu0 %v64
  %v933 = vpop.f32.mrb[0].mxu0
  %v934 = vadd.f32 0.0, %v933
  %v935 = vpop.f32.mrb[0].mxu0
  %936 = vmatprep.mubr.f32.mxu0 0.0
  %937 = vmatmul.mubr.f32.gmra.mrb[0].mxu0 %v65
  %v938 = vpop.f32.mrb[0].mxu0
  %v939 = vadd.f32 0.0, %v938
  %v940 = vpop.f32.mrb[0].mxu0
  %941 = vmatprep.mubr.f32.mxu0 0.0
  %942 = vmatmul.mubr.f32.gmra.mrb[0].mxu0 %v66
  %v943 = vpop.f32.mrb[0].mxu0
  %v944 = vadd.f32 0.0, %v943
  %v945 = vpop.f32.mrb[0].mxu0
  %946 = vmatprep.mubr.f32.mxu0 0.0
  %947 = vmatmul.mubr.f32.gmra.mrb[0].mxu0 %v67
  %v948 = vpop.f32.mrb[0].mxu0
  %v949 = vadd.f32 0.0, %v948
  %v950 = vpop.f32.mrb[0].mxu0
  %951 = vmatprep.mubr.f32.mxu0 0.0
  %952 = vmatmul.mubr.f32.gmra.mrb[0].mxu0 %v68
  %v953 = vpop.f32.mrb[0].mxu0
  %v954 = vadd.f32 0.0, %v953
  %v955 = vpop.f32.mrb[0].mxu0
  %956 = vmatprep.mubr.f32.mxu0 0.0
  %957 = vmatmul.mubr.f32.gmra.mrb[0].mxu0 %v69
  %v958 = vpop.f32.mrb[0].mxu0
  %v959 = vadd.f32 0.0, %v958
  %v960 = vpop.f32.mrb[0].mxu0
  %961 = vmatprep.mubr.f32.mxu0 0.0
  %962 = vmatmul.mubr.f32.gmra.mrb[0].mxu0 %v70
  %v963 = vpop.f32.mrb[0].mxu0
  %v964 = vadd.f32 0.0, %v963
  %v965 = vpop.f32.mrb[0].mxu0
  %966 = vdwg.mxu0
  %968 = vset.pattern.permute.xlu0 0
  %969 = vperm.xlu0 %968, %v71
  %v970 = vpop.permute.xlu0 %969
  %973 = vset.pattern.permute.xlu0 0
  %974 = vperm.xlu0 %973, %v72
  %v975 = vpop.permute.xlu0 %974
  %978 = vset.pattern.permute.xlu0 0
  %979 = vperm.xlu0 %978, %v73
  %v980 = vpop.permute.xlu0 %979
  %983 = vset.pattern.permute.xlu0 0
  %984 = vperm.xlu0 %983, %v74
  %v985 = vpop.permute.xlu0 %984
  %988 = vset.pattern.permute.xlu0 0
  %989 = vperm.xlu0 %988, %v75
  %v990 = vpop.permute.xlu0 %989
  %993 = vset.pattern.permute.xlu0 0
  %994 = vperm.xlu0 %993, %v76
  %v995 = vpop.permute.xlu0 %994
  %998 = vset.pattern.permute.xlu0 0
  %999 = vperm.xlu0 %998, %v77
  %v1000 = vpop.permute.xlu0 %999
  %1003 = vset.pattern.permute.xlu0 0
  %1004 = vperm.xlu0 %1003, %v78
  %v1005 = vpop.permute.xlu0 %1004
  %1008 = vset.pattern.permute.xlu0 0
  %1009 = vperm.xlu0 %1008, %v79
  %v1010 = vpop.permute.xlu0 %1009
  %1013 = vset.pattern.permute.xlu0 0
  %1014 = vperm.xlu0 %1013, %v80
  %v1015 = vpop.permute.xlu0 %1014
  %1018 = vset.pattern.permute.xlu0 0
  %1019 = vperm.xlu0 %1018, %v81
  %v1020 = vpop.permute.xlu0 %1019
  %1023 = vset.pattern.permute.xlu0 0
  %1024 = vperm.xlu0 %1023, %v82
  %v1025 = vpop.permute.xlu0 %1024
  %1028 = vset.pattern.permute.xlu0 0
  %1029 = vperm.xlu0 %1028, %v83
  %v1030 = vpop.permute.xlu0 %1029
  %1033 = vset.pattern.permute.xlu0 0
  %1034 = vperm.xlu0 %1033, %v84
  %v1035 = vpop.permute.xlu0 %1034
  %1038 = vset.pattern.permute.xlu0 0
  %1039 = vperm.xlu0 %1038, %v85
  %v1040 = vpop.permute.xlu0 %1039
  %1043 = vset.pattern.permute.xlu0 0
  %1044 = vperm.xlu0 %1043, %v86
  %v1045 = vpop.permute.xlu0 %1044
  %v1047 = vmul.f32 %v889, %v970
  %v1048 = vmul.f32 %v894, %v975
  %v1049 = vmul.f32 %v899, %v980
  %v1050 = vmul.f32 %v904, %v985
  %v1051 = vmul.f32 %v909, %v990
  %v1052 = vmul.f32 %v914, %v995
  %v1053 = vmul.f32 %v919, %v1000
  %v1054 = vmul.f32 %v924, %v1005
  %v1055 = vmul.f32 %v929, %v1010
  %v1056 = vmul.f32 %v934, %v1015
  %v1057 = vmul.f32 %v939, %v1020
  %v1058 = vmul.f32 %v944, %v1025
  %v1059 = vmul.f32 %v949, %v1030
  %v1060 = vmul.f32 %v954, %v1035
  %v1061 = vmul.f32 %v959, %v1040
  %v1062 = vmul.f32 %v964, %v1045
  %v1063 = vld [vmem:[%s4] sm:$0xff]
  %v1064 = vld [vmem:[%s4 + $0x8] sm:$0xff]
  %v1065 = vld [vmem:[%s4 + $0x10] sm:$0xff]
  %v1066 = vld [vmem:[%s4 + $0x18] sm:$0xff]
  %v1067 = vld [vmem:[%s4 + $0x20] sm:$0xff]
  %v1068 = vld [vmem:[%s4 + $0x28] sm:$0xff]
  %v1069 = vld [vmem:[%s4 + $0x30] sm:$0xff]
  %v1070 = vld [vmem:[%s4 + $0x38] sm:$0xff]
  %v1071 = vld [vmem:[%s4 + $0x40] sm:$0xff]
  %v1072 = vld [vmem:[%s4 + $0x48] sm:$0xff]
  %v1073 = vld [vmem:[%s4 + $0x50] sm:$0xff]
  %v1074 = vld [vmem:[%s4 + $0x58] sm:$0xff]
  %v1075 = vld [vmem:[%s4 + $0x60] sm:$0xff]
  %v1076 = vld [vmem:[%s4 + $0x68] sm:$0xff]
  %v1077 = vld [vmem:[%s4 + $0x70] sm:$0xff]
  %v1078 = vld [vmem:[%s4 + $0x78] sm:$0xff]
  %v1079 = vld [vmem:[%s5] sm:$0x1]
  %1080 = vmatprep.subr.mxu0 0.0
  %1081 = vmatpush1.msra.mxu0 %v806
  %1082 = vmatprep.subr.mxu0 0.0
  %1083 = vmatpush1.msra.mxu0 %v807
  %1084 = vmatprep.subr.mxu0 0.0
  %1085 = vmatpush1.msra.mxu0 %v808
  %1086 = vmatprep.subr.mxu0 0.0
  %1087 = vmatpush1.msra.mxu0 %v809
  %1088 = vmatprep.subr.mxu0 0.0
  %1089 = vmatpush1.msra.mxu0 %v810
  %1090 = vmatprep.subr.mxu0 0.0
  %1091 = vmatpush1.msra.mxu0 %v811
  %1092 = vmatprep.subr.mxu0 0.0
  %1093 = vmatpush1.msra.mxu0 %v812
  %1094 = vmatprep.subr.mxu0 0.0
  %1095 = vmatpush1.msra.mxu0 %v813
  %1096 = vmatprep.subr.mxu0 0.0
  %1097 = vmatpush1.msra.mxu0 %v814
  %1098 = vmatprep.subr.mxu0 0.0
  %1099 = vmatpush1.msra.mxu0 %v815
  %1100 = vmatprep.subr.mxu0 0.0
  %1101 = vmatpush1.msra.mxu0 %v816
  %1102 = vmatprep.subr.mxu0 0.0
  %1103 = vmatpush1.msra.mxu0 %v817
  %1104 = vmatprep.subr.mxu0 0.0
  %1105 = vmatpush1.msra.mxu0 %v818
  %1106 = vmatprep.subr.mxu0 0.0
  %1107 = vmatpush1.msra.mxu0 %v819
  %1108 = vmatprep.subr.mxu0 0.0
  %1109 = vmatpush1.msra.mxu0 %v820
  %1110 = vmatprep.subr.mxu0 0.0
  %1111 = vmatpush1.msra.mxu0 %v821
  %1112 = vmatprep.subr.mxu0 0.0
  %1113 = vmatpush1.msra.mxu0 0.0
  %1114 = vmatprep.subr.mxu0 0.0
  %1115 = vmatpush1.msra.mxu0 0.0
  %1116 = vmatprep.subr.mxu0 0.0
  %1117 = vmatpush1.msra.mxu0 0.0
  %1118 = vmatprep.subr.mxu0 0.0
  %1119 = vmatpush1.msra.mxu0 0.0
  %1120 = vmatprep.subr.mxu0 0.0
  %1121 = vmatpush1.msra.mxu0 0.0
  %1122 = vmatprep.subr.mxu0 0.0
  %1123 = vmatpush1.msra.mxu0 0.0
  %1124 = vmatprep.subr.mxu0 0.0
  %1125 = vmatpush1.msra.mxu0 0.0
  %1126 = vmatprep.subr.mxu0 0.0
  %1127 = vmatpush1.msra.mxu0 0.0
  %1128 = vmatprep.subr.mxu0 0.0
  %1129 = vmatpush1.msra.mxu0 0.0
  %1130 = vmatprep.subr.mxu0 0.0
  %1131 = vmatpush1.msra.mxu0 0.0
  %1132 = vmatprep.subr.mxu0 0.0
  %1133 = vmatpush1.msra.mxu0 0.0
  %1134 = vmatprep.subr.mxu0 0.0
  %1135 = vmatpush1.msra.mxu0 0.0
  %1136 = vmatprep.subr.mxu0 0.0
  %1137 = vmatpush1.msra.mxu0 0.0
  %1138 = vmatprep.subr.mxu0 0.0
  %1139 = vmatpush1.msra.mxu0 0.0
  %1140 = vmatprep.subr.mxu0 0.0
  %1141 = vmatpush1.msra.mxu0 0.0
  %1142 = vmatprep.subr.mxu0 0.0
  %1143 = vmatpush1.msra.mxu0 0.0
  %1144 = vmatprep.mubr.f32.mxu0 0.0
  %1145 = vmatmul.mubr.f32.gmra.mrb[0].mxu0 %v1047
  %v1146 = vpop.f32.mrb[0].mxu0
  %v1147 = vadd.f32 0.0, %v1146
  %v1148 = vpop.f32.mrb[0].mxu0
  %1149 = vmatprep.mubr.f32.mxu0 0.0
  %1150 = vmatmul.mubr.f32.gmra.mrb[0].mxu0 %v1048
  %v1151 = vpop.f32.mrb[0].mxu0
  %v1152 = vadd.f32 0.0, %v1151
  %v1153 = vpop.f32.mrb[0].mxu0
  %1154 = vmatprep.mubr.f32.mxu0 0.0
  %1155 = vmatmul.mubr.f32.gmra.mrb[0].mxu0 %v1049
  %v1156 = vpop.f32.mrb[0].mxu0
  %v1157 = vadd.f32 0.0, %v1156
  %v1158 = vpop.f32.mrb[0].mxu0
  %1159 = vmatprep.mubr.f32.mxu0 0.0
  %1160 = vmatmul.mubr.f32.gmra.mrb[0].mxu0 %v1050
  %v1161 = vpop.f32.mrb[0].mxu0
  %v1162 = vadd.f32 0.0, %v1161
  %v1163 = vpop.f32.mrb[0].mxu0
  %1164 = vmatprep.mubr.f32.mxu0 0.0
  %1165 = vmatmul.mubr.f32.gmra.mrb[0].mxu0 %v1051
  %v1166 = vpop.f32.mrb[0].mxu0
  %v1167 = vadd.f32 0.0, %v1166
  %v1168 = vpop.f32.mrb[0].mxu0
  %1169 = vmatprep.mubr.f32.mxu0 0.0
  %1170 = vmatmul.mubr.f32.gmra.mrb[0].mxu0 %v1052
  %v1171 = vpop.f32.mrb[0].mxu0
  %v1172 = vadd.f32 0.0, %v1171
  %v1173 = vpop.f32.mrb[0].mxu0
  %1174 = vmatprep.mubr.f32.mxu0 0.0
  %1175 = vmatmul.mubr.f32.gmra.mrb[0].mxu0 %v1053
  %v1176 = vpop.f32.mrb[0].mxu0
  %v1177 = vadd.f32 0.0, %v1176
  %v1178 = vpop.f32.mrb[0].mxu0
  %1179 = vmatprep.mubr.f32.mxu0 0.0
  %1180 = vmatmul.mubr.f32.gmra.mrb[0].mxu0 %v1054
  %v1181 = vpop.f32.mrb[0].mxu0
  %v1182 = vadd.f32 0.0, %v1181
  %v1183 = vpop.f32.mrb[0].mxu0
  %1184 = vmatprep.mubr.f32.mxu0 0.0
  %1185 = vmatmul.mubr.f32.gmra.mrb[0].mxu0 %v1055
  %v1186 = vpop.f32.mrb[0].mxu0
  %v1187 = vadd.f32 0.0, %v1186
  %v1188 = vpop.f32.mrb[0].mxu0
  %1189 = vmatprep.mubr.f32.mxu0 0.0
  %1190 = vmatmul.mubr.f32.gmra.mrb[0].mxu0 %v1056
  %v1191 = vpop.f32.mrb[0].mxu0
  %v1192 = vadd.f32 0.0, %v1191
  %v1193 = vpop.f32.mrb[0].mxu0
  %1194 = vmatprep.mubr.f32.mxu0 0.0
  %1195 = vmatmul.mubr.f32.gmra.mrb[0].mxu0 %v1057
  %v1196 = vpop.f32.mrb[0].mxu0
  %v1197 = vadd.f32 0.0, %v1196
  %v1198 = vpop.f32.mrb[0].mxu0
  %1199 = vmatprep.mubr.f32.mxu0 0.0
  %1200 = vmatmul.mubr.f32.gmra.mrb[0].mxu0 %v1058
  %v1201 = vpop.f32.mrb[0].mxu0
  %v1202 = vadd.f32 0.0, %v1201
  %v1203 = vpop.f32.mrb[0].mxu0
  %1204 = vmatprep.mubr.f32.mxu0 0.0
  %1205 = vmatmul.mubr.f32.gmra.mrb[0].mxu0 %v1059
  %v1206 = vpop.f32.mrb[0].mxu0
  %v1207 = vadd.f32 0.0, %v1206
  %v1208 = vpop.f32.mrb[0].mxu0
  %1209 = vmatprep.mubr.f32.mxu0 0.0
  %1210 = vmatmul.mubr.f32.gmra.mrb[0].mxu0 %v1060
  %v1211 = vpop.f32.mrb[0].mxu0
  %v1212 = vadd.f32 0.0, %v1211
  %v1213 = vpop.f32.mrb[0].mxu0
  %1214 = vmatprep.mubr.f32.mxu0 0.0
  %1215 = vmatmul.mubr.f32.gmra.mrb[0].mxu0 %v1061
  %v1216 = vpop.f32.mrb[0].mxu0
  %v1217 = vadd.f32 0.0, %v1216
  %v1218 = vpop.f32.mrb[0].mxu0
  %1219 = vmatprep.mubr.f32.mxu0 0.0
  %1220 = vmatmul.mubr.f32.gmra.mrb[0].mxu0 %v1062
  %v1221 = vpop.f32.mrb[0].mxu0
  %v1222 = vadd.f32 0.0, %v1221
  %v1223 = vpop.f32.mrb[0].mxu0
  %1224 = vdwg.mxu0
  %v1226 = vlaneseq
  %v1227 = vshrl.u32 %v1226, 7
  %v1228 = vsub.s32 0, %v1227
  %v1229 = vrot.slane %v1079, %v1228
  %1231 = vmatprep.subr.mxu0 0.0
  %1232 = vmatpush1.msra.mxu0 %v1063
  %1233 = vmatprep.subr.mxu0 0.0
  %1234 = vmatpush1.msra.mxu0 %v1064
  %1235 = vmatprep.subr.mxu0 0.0
  %1236 = vmatpush1.msra.mxu0 %v1065
  %1237 = vmatprep.subr.mxu0 0.0
  %1238 = vmatpush1.msra.mxu0 %v1066
  %1239 = vmatprep.subr.mxu0 0.0
  %1240 = vmatpush1.msra.mxu0 %v1067
  %1241 = vmatprep.subr.mxu0 0.0
  %1242 = vmatpush1.msra.mxu0 %v1068
  %1243 = vmatprep.subr.mxu0 0.0
  %1244 = vmatpush1.msra.mxu0 %v1069
  %1245 = vmatprep.subr.mxu0 0.0
  %1246 = vmatpush1.msra.mxu0 %v1070
  %1247 = vmatprep.subr.mxu0 0.0
  %1248 = vmatpush1.msra.mxu0 %v1071
  %1249 = vmatprep.subr.mxu0 0.0
  %1250 = vmatpush1.msra.mxu0 %v1072
  %1251 = vmatprep.subr.mxu0 0.0
  %1252 = vmatpush1.msra.mxu0 %v1073
  %1253 = vmatprep.subr.mxu0 0.0
  %1254 = vmatpush1.msra.mxu0 %v1074
  %1255 = vmatprep.subr.mxu0 0.0
  %1256 = vmatpush1.msra.mxu0 %v1075
  %1257 = vmatprep.subr.mxu0 0.0
  %1258 = vmatpush1.msra.mxu0 %v1076
  %1259 = vmatprep.subr.mxu0 0.0
  %1260 = vmatpush1.msra.mxu0 %v1077
  %1261 = vmatprep.subr.mxu0 0.0
  %1262 = vmatpush1.msra.mxu0 %v1078
  %1263 = vmatprep.subr.mxu0 0.0
  %1264 = vmatpush1.msra.mxu0 0.0
  %1265 = vmatprep.subr.mxu0 0.0
  %1266 = vmatpush1.msra.mxu0 0.0
  %1267 = vmatprep.subr.mxu0 0.0
  %1268 = vmatpush1.msra.mxu0 0.0
  %1269 = vmatprep.subr.mxu0 0.0
  %1270 = vmatpush1.msra.mxu0 0.0
  %1271 = vmatprep.subr.mxu0 0.0
  %1272 = vmatpush1.msra.mxu0 0.0
  %1273 = vmatprep.subr.mxu0 0.0
  %1274 = vmatpush1.msra.mxu0 0.0
  %1275 = vmatprep.subr.mxu0 0.0
  %1276 = vmatpush1.msra.mxu0 0.0
  %1277 = vmatprep.subr.mxu0 0.0
  %1278 = vmatpush1.msra.mxu0 0.0
  %1279 = vmatprep.subr.mxu0 0.0
  %1280 = vmatpush1.msra.mxu0 0.0
  %1281 = vmatprep.subr.mxu0 0.0
  %1282 = vmatpush1.msra.mxu0 0.0
  %1283 = vmatprep.subr.mxu0 0.0
  %1284 = vmatpush1.msra.mxu0 0.0
  %1285 = vmatprep.subr.mxu0 0.0
  %1286 = vmatpush1.msra.mxu0 0.0
  %1287 = vmatprep.subr.mxu0 0.0
  %1288 = vmatpush1.msra.mxu0 0.0
  %1289 = vmatprep.subr.mxu0 0.0
  %1290 = vmatpush1.msra.mxu0 0.0
  %1291 = vmatprep.subr.mxu0 0.0
  %1292 = vmatpush1.msra.mxu0 0.0
  %1293 = vmatprep.subr.mxu0 0.0
  %1294 = vmatpush1.msra.mxu0 0.0
  %1295 = vmatprep.mubr.f32.mxu0 0.0
  %1296 = vmatmul.mubr.f32.gmra.mrb[0].mxu0 %v1147
  %v1297 = vpop.f32.mrb[0].mxu0
  %v1298 = vadd.f32 %v1229, %v1297
  %v1299 = vpop.f32.mrb[0].mxu0
  %1300 = vmatprep.mubr.f32.mxu0 0.0
  %1301 = vmatmul.mubr.f32.gmra.mrb[0].mxu0 %v1152
  %v1302 = vpop.f32.mrb[0].mxu0
  %v1303 = vadd.f32 %v1229, %v1302
  %v1304 = vpop.f32.mrb[0].mxu0
  %1305 = vmatprep.mubr.f32.mxu0 0.0
  %1306 = vmatmul.mubr.f32.gmra.mrb[0].mxu0 %v1157
  %v1307 = vpop.f32.mrb[0].mxu0
  %v1308 = vadd.f32 %v1229, %v1307
  %v1309 = vpop.f32.mrb[0].mxu0
  %1310 = vmatprep.mubr.f32.mxu0 0.0
  %1311 = vmatmul.mubr.f32.gmra.mrb[0].mxu0 %v1162
  %v1312 = vpop.f32.mrb[0].mxu0
  %v1313 = vadd.f32 %v1229, %v1312
  %v1314 = vpop.f32.mrb[0].mxu0
  %1315 = vmatprep.mubr.f32.mxu0 0.0
  %1316 = vmatmul.mubr.f32.gmra.mrb[0].mxu0 %v1167
  %v1317 = vpop.f32.mrb[0].mxu0
  %v1318 = vadd.f32 %v1229, %v1317
  %v1319 = vpop.f32.mrb[0].mxu0
  %1320 = vmatprep.mubr.f32.mxu0 0.0
  %1321 = vmatmul.mubr.f32.gmra.mrb[0].mxu0 %v1172
  %v1322 = vpop.f32.mrb[0].mxu0
  %v1323 = vadd.f32 %v1229, %v1322
  %v1324 = vpop.f32.mrb[0].mxu0
  %1325 = vmatprep.mubr.f32.mxu0 0.0
  %1326 = vmatmul.mubr.f32.gmra.mrb[0].mxu0 %v1177
  %v1327 = vpop.f32.mrb[0].mxu0
  %v1328 = vadd.f32 %v1229, %v1327
  %v1329 = vpop.f32.mrb[0].mxu0
  %1330 = vmatprep.mubr.f32.mxu0 0.0
  %1331 = vmatmul.mubr.f32.gmra.mrb[0].mxu0 %v1182
  %v1332 = vpop.f32.mrb[0].mxu0
  %v1333 = vadd.f32 %v1229, %v1332
  %v1334 = vpop.f32.mrb[0].mxu0
  %1335 = vmatprep.mubr.f32.mxu0 0.0
  %1336 = vmatmul.mubr.f32.gmra.mrb[0].mxu0 %v1187
  %v1337 = vpop.f32.mrb[0].mxu0
  %v1338 = vadd.f32 %v1229, %v1337
  %v1339 = vpop.f32.mrb[0].mxu0
  %1340 = vmatprep.mubr.f32.mxu0 0.0
  %1341 = vmatmul.mubr.f32.gmra.mrb[0].mxu0 %v1192
  %v1342 = vpop.f32.mrb[0].mxu0
  %v1343 = vadd.f32 %v1229, %v1342
  %v1344 = vpop.f32.mrb[0].mxu0
  %1345 = vmatprep.mubr.f32.mxu0 0.0
  %1346 = vmatmul.mubr.f32.gmra.mrb[0].mxu0 %v1197
  %v1347 = vpop.f32.mrb[0].mxu0
  %v1348 = vadd.f32 %v1229, %v1347
  %v1349 = vpop.f32.mrb[0].mxu0
  %1350 = vmatprep.mubr.f32.mxu0 0.0
  %1351 = vmatmul.mubr.f32.gmra.mrb[0].mxu0 %v1202
  %v1352 = vpop.f32.mrb[0].mxu0
  %v1353 = vadd.f32 %v1229, %v1352
  %v1354 = vpop.f32.mrb[0].mxu0
  %1355 = vmatprep.mubr.f32.mxu0 0.0
  %1356 = vmatmul.mubr.f32.gmra.mrb[0].mxu0 %v1207
  %v1357 = vpop.f32.mrb[0].mxu0
  %v1358 = vadd.f32 %v1229, %v1357
  %v1359 = vpop.f32.mrb[0].mxu0
  %1360 = vmatprep.mubr.f32.mxu0 0.0
  %1361 = vmatmul.mubr.f32.gmra.mrb[0].mxu0 %v1212
  %v1362 = vpop.f32.mrb[0].mxu0
  %v1363 = vadd.f32 %v1229, %v1362
  %v1364 = vpop.f32.mrb[0].mxu0
  %1365 = vmatprep.mubr.f32.mxu0 0.0
  %1366 = vmatmul.mubr.f32.gmra.mrb[0].mxu0 %v1217
  %v1367 = vpop.f32.mrb[0].mxu0
  %v1368 = vadd.f32 %v1229, %v1367
  %v1369 = vpop.f32.mrb[0].mxu0
  %1370 = vmatprep.mubr.f32.mxu0 0.0
  %1371 = vmatmul.mubr.f32.gmra.mrb[0].mxu0 %v1222
  %v1372 = vpop.f32.mrb[0].mxu0
  %v1373 = vadd.f32 %v1229, %v1372
  %v1374 = vpop.f32.mrb[0].mxu0
  %1375 = vdwg.mxu0
  %v1376 = vmax.f32 %v1298, 0.0
  %v1377 = vmax.f32 %v1303, 0.0
  %v1378 = vmax.f32 %v1308, 0.0
  %v1379 = vmax.f32 %v1313, 0.0
  %v1380 = vmax.f32 %v1318, 0.0
  %v1381 = vmax.f32 %v1323, 0.0
  %v1382 = vmax.f32 %v1328, 0.0
  %v1383 = vmax.f32 %v1333, 0.0
  %v1384 = vmax.f32 %v1338, 0.0
  %v1385 = vmax.f32 %v1343, 0.0
  %v1386 = vmax.f32 %v1348, 0.0
  %v1387 = vmax.f32 %v1353, 0.0
  %v1388 = vmax.f32 %v1358, 0.0
  %v1389 = vmax.f32 %v1363, 0.0
  %v1390 = vmax.f32 %v1368, 0.0
  %v1391 = vmax.f32 %v1373, 0.0
  %1392 = vst [vmem:[%s6] sm:$0xff] %v1376
  %1393 = vst [vmem:[%s6 + $0x8] sm:$0xff] %v1377
  %1394 = vst [vmem:[%s6 + $0x10] sm:$0xff] %v1378
  %1395 = vst [vmem:[%s6 + $0x18] sm:$0xff] %v1379
  %1396 = vst [vmem:[%s6 + $0x20] sm:$0xff] %v1380
  %1397 = vst [vmem:[%s6 + $0x28] sm:$0xff] %v1381
  %1398 = vst [vmem:[%s6 + $0x30] sm:$0xff] %v1382
  %1399 = vst [vmem:[%s6 + $0x38] sm:$0xff] %v1383
  %1400 = vst [vmem:[%s6 + $0x40] sm:$0xff] %v1384
  %1401 = vst [vmem:[%s6 + $0x48] sm:$0xff] %v1385
  %1402 = vst [vmem:[%s6 + $0x50] sm:$0xff] %v1386
  %1403 = vst [vmem:[%s6 + $0x58] sm:$0xff] %v1387
  %1404 = vst [vmem:[%s6 + $0x60] sm:$0xff] %v1388
  %1405 = vst [vmem:[%s6 + $0x68] sm:$0xff] %v1389
  %1406 = vst [vmem:[%s6 + $0x70] sm:$0xff] %v1390
  %1407 = vst [vmem:[%s6 + $0x78] sm:$0xff] %v1391
  // Predicated region
  $region26: #{graph_unet_forward.7} parent=0 // pred_check
    _
  $region27: #{graph_unet_forward.7} parent=0 // pred_check_branch
    %1409 = sbr.rel (0) target = $region29
  $region28: #{graph_unet_forward.7} parent=0 // pred_region
    _
  $region29: #{graph_unet_forward.7} parent=0 // pred_fallthru
    _
  // Predicated region
  $region30: #{graph_unet_forward.7} parent=0 // pred_check
    _
  $region31: #{graph_unet_forward.7} parent=0 // pred_check_branch
    %1411 = sbr.rel (0) target = $region33
  $region32: #{graph_unet_forward.7} parent=0 // pred_region
    _
  $region33: #{graph_unet_forward.7} parent=0 // pred_fallthru
    _

</llo_original>
